<compile_context>
chip_gen: v7x
topology: tpu7x:2x2x1
jax: 0.10.0
libtpu: 0.0.40
codegen_flags: <defaults>
</compile_context>

<pallas_src>
import jax
import jax.numpy as jnp
from jax import lax
from jax.experimental import pallas as pl
from jax.experimental.pallas import tpu as pltpu


LANE = 128      # lane width; packed-gate width and feature dims pad to this
SUBLANE = 8     # f32 sublane count; batch pads to a multiple of this
NEG_INF = -1e30

_VMEM_SPEC = pl.BlockSpec(memory_space=pltpu.MemorySpace.VMEM)


# ----------------------------------------------------------------------------
# Fused Pallas kernel: multi-layer LSTM + output linear + masked NLL
# ----------------------------------------------------------------------------
def rnn_lm_fused_kernel(emb_ref, w_ih_ref, w_hh_ref, b_ref,
                        w_out_t_ref, b_out_ref, y_ref, valid_ref,
                        nll_ref, act_scr, gx_scr):
  """All shapes are padded & lane/sublane aligned.

  emb_ref:     (L, Np, G)       bf16  time-major embeddings (G == 128)
  w_ih_ref:    (nl, G, G)       bf16  packed input->gate weights (rows >= real
                                      input dim are zero)
  w_hh_ref:    (nl, G, G)       bf16  packed hidden->gate weights (rows >= H
                                      are zero)
  b_ref:       (nl, 1, G)       f32   packed b_ih + b_hh
  w_out_t_ref: (Vp, G)          bf16  output projection, transposed; columns
                                      >= H are zero
  b_out_ref:   (Vp, 1)          f32   output bias (-1e30 in padded vocab rows)
  y_ref:       (1, R)           i32   targets, row order (t, n), R = L*Np
  valid_ref:   (1, R)           f32   1.0 where t < length[n] and n < N
  nll_ref:     (1, R)           f32   per-token nll, 0 at padding positions

  Packed gate layout along lanes: [o | i | f | g], each block Hq = G//4 lanes.
  The sigmoid gates (o,i,f) have 0.5 pre-folded into their weight/bias columns
  so one tanh over the whole slab yields all four nonlinearities.
  """
  L, Np, G = emb_ref.shape
  num_layers = w_ih_ref.shape[0]
  Hq = G // 4
  R = L * Np

  # Hoisted lane mask selecting the cell-candidate (g) block (broadcasts are
  # not CSE'd by JAX, so build it once, outside all loops).
  lane = lax.broadcasted_iota(jnp.int32, (Np, G), 1)
  is_g = lane >= 3 * Hq

  for layer in range(num_layers):
    # ---- Hoisted input projection: one MXU matmul for ALL timesteps, bias
    #      folded in.  Only h @ W_hh + elementwise work stays serial. ----
    src = emb_ref if layer == 0 else act_scr
    x2 = src[...].reshape(R, G)                                        # bf16
    gx = jnp.dot(x2, w_ih_ref[layer], preferred_element_type=jnp.float32)
    gx_scr[...] = (gx + b_ref[layer]).reshape(L, Np, G)

    # h, c carried as loop-carried vreg values — no VMEM round trip.
    h_bf = jnp.zeros((Np, G), jnp.bfloat16)
    c = jnp.zeros((Np, G), jnp.float32)

    # ---- Recurrence: fully unrolled (small static L). ----
    for t in range(L):
      gates = gx_scr[t] + jnp.dot(h_bf, w_hh_ref[layer],
                                  preferred_element_type=jnp.float32)  # (Np,G)
      # Single fused EUP pass: sigmoid(z) == 0.5*tanh(z/2)+0.5 for o,i,f
      # (whose columns were pre-scaled by 0.5); plain tanh for g.
      tg = jnp.tanh(gates)
      act = jnp.where(is_g, tg, 0.5 * tg + 0.5)
      # XLU rolls align f / i / g onto the h,c lanes (block 0).  The half
      # rotation (f) is direction-symmetric and the i/g pair multiplies
      # commutatively, so the result is independent of rotate direction.
      f_al = pltpu.roll(act, 2 * Hq, axis=1)
      ig_a = pltpu.roll(act, Hq, axis=1)
      ig_b = pltpu.roll(act, 3 * Hq, axis=1)
      c = f_al * c + ig_a * ig_b                 # f*c + i*g   in lanes [0, Hq)
      h_f32 = act * jnp.tanh(c)                  # o*tanh(c)   in lanes [0, Hq)
      h_bf = h_f32.astype(jnp.bfloat16)
      # Lanes >= Hq hold bounded junk from the rolls; all downstream weight
      # rows >= H are zero, so it never contaminates real values.
      act_scr[t] = h_bf

  # ---- Fused output projection + masked CE, computed TRANSPOSED so the
  #      per-token nll is produced lane-dense (one dense vst) rather than as
  #      an (R,1) masked column.  Logits never leave VMEM. ----
  h2 = act_scr[...].reshape(R, G)                                      # bf16
  logits_t = lax.dot_general(
      w_out_t_ref[...], h2,
      dimension_numbers=(((1,), (1,)), ((), ())),
      preferred_element_type=jnp.float32)                              # (Vp,R)
  logits_t = logits_t + b_out_ref[...]          # padded vocab rows get -1e30
  m = jnp.max(logits_t, axis=0, keepdims=True)                         # (1, R)
  lse = m + jnp.log(jnp.sum(jnp.exp(logits_t - m), axis=0, keepdims=True))
  row = lax.broadcasted_iota(jnp.int32, logits_t.shape, 0)
  tgt = jnp.sum(jnp.where(row == y_ref[...], logits_t, 0.0),
                axis=0, keepdims=True)                                 # (1, R)
  nll_ref[...] = (lse - tgt) * valid_ref[...]


# ----------------------------------------------------------------------------
# Parameter padding / packing (done once, outside jit)
# ----------------------------------------------------------------------------
def _pad_axis(x, axis, size):
  pad = size - x.shape[axis]
  if pad <= 0:
    return x
  widths = [(0, 0)] * x.ndim
  widths[axis] = (0, pad)
  return jnp.pad(x, widths)


def _pack_gates(w, h, hq):
  """(..., 4h) in PyTorch gate order (i,f,g,o) -> packed [o, i, f, g].

  Each gate is zero-padded to hq lanes; the sigmoid gates (o, i, f) are
  pre-scaled by 0.5 so a single tanh implements all four nonlinearities
  (sigmoid(z) = 0.5 * tanh(z/2) + 0.5).  Scaling by 0.5 is exact in fp.
  """
  i = _pad_axis(w[..., 0 * h:1 * h], -1, hq)
  f = _pad_axis(w[..., 1 * h:2 * h], -1, hq)
  g = _pad_axis(w[..., 2 * h:3 * h], -1, hq)
  o = _pad_axis(w[..., 3 * h:4 * h], -1, hq)
  return jnp.concatenate([0.5 * o, 0.5 * i, 0.5 * f, g], axis=-1)


def prepare_kernel_params(params, hidden_dim, num_layers):
  """Pad/pack to lane-aligned shapes and cast matmul weights to bf16."""
  hq = LANE // 4
  # TODO(synk): fall back to per-gate 128-lane padding when 4*hidden > 128.
  assert hidden_dim <= hq, (hidden_dim, hq)
  assert params["embedding"].shape[1] <= LANE

  kp = {"embedding": _pad_axis(params["embedding"], 1, LANE)}   # (V, 128) f32

  w_ih, w_hh, b = [], [], []
  for layer in range(num_layers):
    wi = _pad_axis(_pack_gates(params["w_ih"][layer], hidden_dim, hq),
                   0, LANE)                                     # (128, 128)
    wh = _pad_axis(_pack_gates(params["w_hh"][layer], hidden_dim, hq),
                   0, LANE)                                     # (128, 128)
    bb = _pack_gates(params["b"][layer][None, :], hidden_dim, hq)  # (1, 128)
    w_ih.append(wi)
    w_hh.append(wh)
    b.append(bb)
  kp["w_ih"] = jnp.stack(w_ih).astype(jnp.bfloat16)
  kp["w_hh"] = jnp.stack(w_hh).astype(jnp.bfloat16)
  kp["b"] = jnp.stack(b).astype(jnp.float32)

  vocab = params["w_out"].shape[1]
  vp = ((vocab + LANE - 1) // LANE) * LANE
  # Output projection stored transposed (Vp, Hp) for the transposed CE stage;
  # columns >= hidden_dim are zero, padded vocab rows are zero.
  w_out_t = jnp.zeros((vp, LANE), jnp.float32)
  w_out_t = w_out_t.at[:vocab, :hidden_dim].set(params["w_out"].T)
  b_out = jnp.full((vp, 1), NEG_INF, jnp.float32)
  b_out = b_out.at[:vocab, 0].set(params["b_out"])
  kp["w_out_t"] = w_out_t.astype(jnp.bfloat16)
  kp["b_out"] = b_out                       # keep f32: -1e30 must not be -inf
  return kp


# ----------------------------------------------------------------------------
# Forward wrapper
# ----------------------------------------------------------------------------
@jax.jit
def rnn_lm_forward(kparams, x, y, lengths):
  N, L = x.shape
  # Batch pad: multiple of 8 sublanes AND L*Np a multiple of 128 so the nll
  # output row is fully lane-dense.
  Np = ((N + SUBLANE - 1) // SUBLANE) * SUBLANE
  while (L * Np) % LANE != 0:
    Np += SUBLANE
  R = L * Np
  G = kparams["w_hh"].shape[2]
  assert kparams["embedding"].shape[1] == G == LANE

  # Embedding gather, one transpose to time-major, batch pad, bf16 cast.
  emb = jnp.take(kparams["embedding"], x, axis=0)            # (N, L, 128) f32
  emb = jnp.transpose(emb, (1, 0, 2))                        # (L, N, 128)
  emb = _pad_axis(emb, 1, Np).astype(jnp.bfloat16)           # (L, Np, 128)

  # Targets / pad mask, flattened lane-dense in (t, n) row order.
  y_tn = _pad_axis(jnp.transpose(y, (1, 0)).astype(jnp.int32), 1, Np)  # (L,Np)
  valid = (jnp.arange(L)[:, None] < lengths[None, :]).astype(jnp.float32)
  valid = _pad_axis(valid, 1, Np)                                      # (L,Np)
  y2 = y_tn.reshape(1, R)
  v2 = valid.reshape(1, R)

  nll = pl.pallas_call(
      rnn_lm_fused_kernel,
      out_shape=jax.ShapeDtypeStruct((1, R), jnp.float32),
      in_specs=[_VMEM_SPEC] * 8,
      out_specs=_VMEM_SPEC,
      scratch_shapes=[
          pltpu.VMEM((L, Np, G), jnp.bfloat16),   # layer activations (bf16)
          pltpu.VMEM((L, Np, G), jnp.float32),    # hoisted input projection
      ],
  )(emb, kparams["w_ih"], kparams["w_hh"], kparams["b"],
    kparams["w_out_t"], kparams["b_out"], y2, v2)

  nll = nll.reshape(L, Np)[:, :N]                            # (L, N)
  return jnp.transpose(nll, (1, 0))                          # (N, L)


# ----------------------------------------------------------------------------
# Pure-JAX reference (unpadded params, same bf16-input / f32-accum matmuls)
# ----------------------------------------------------------------------------
def _lstm_ref(x, w_ih_t, w_hh_t, b):
  N = x.shape[0]
  H = w_hh_t.shape[0]
  wi = w_ih_t.astype(jnp.bfloat16)
  wh = w_hh_t.astype(jnp.bfloat16)

  def step(carry, x_t):
    h, c = carry
    gates = (jnp.dot(x_t.astype(jnp.bfloat16), wi,
                     preferred_element_type=jnp.float32)
             + jnp.dot(h.astype(jnp.bfloat16), wh,
                       preferred_element_type=jnp.float32) + b)
    i_g = jax.nn.sigmoid(gates[:, :H])
    f_g = jax.nn.sigmoid(gates[:, H:2 * H])
    g_g = jnp.tanh(gates[:, 2 * H:3 * H])
    o_g = jax.nn.sigmoid(gates[:, 3 * H:])
    c = f_g * c + i_g * g_g
    h = o_g * jnp.tanh(c)
    return (h, c), h

  init = (jnp.zeros((N, H), jnp.float32), jnp.zeros((N, H), jnp.float32))
  _, hs = lax.scan(step, init, jnp.transpose(x, (1, 0, 2)))
  return jnp.transpose(hs, (1, 0, 2))


def _forward_ref(params, x, y, lengths, num_layers):
  h = jnp.take(params["embedding"], x, axis=0)
  for layer in range(num_layers):
    h = _lstm_ref(h, params["w_ih"][layer], params["w_hh"][layer],
                  params["b"][layer])
  N, L, H = h.shape
  V = params["w_out"].shape[1]
  logits = jnp.dot(h.reshape(-1, H).astype(jnp.bfloat16),
                   params["w_out"].astype(jnp.bfloat16),
                   preferred_element_type=jnp.float32).reshape(N, L, V)
  logits = logits + params["b_out"]
  logp = jax.nn.log_softmax(logits, axis=-1)
  nll = -jnp.take_along_axis(logp, y[..., None], axis=-1)[..., 0]
  valid = jnp.arange(L)[None, :] < lengths[:, None]
  return jnp.where(valid, nll, 0.0)


# ----------------------------------------------------------------------------
# Main
# ----------------------------------------------------------------------------
if __name__ == "__main__":
  vocab_size = 64
  embedding_dim = 32
  hidden_dim = 32
  num_layers = 2
  N, L = 2, 8

  key = jax.random.PRNGKey(0)
  keys = jax.random.split(key, 4 + 4 * num_layers)

  # Deterministic synthetic parameters (PyTorch-equivalent shapes; ih/hh/out
  # weights stored transposed for the kernel, gate order i,f,g,o).
  scale = 1.0 / jnp.sqrt(hidden_dim)
  params = {
      "embedding": jax.random.normal(
          keys[0], (vocab_size, embedding_dim), jnp.float32),
      "w_out": scale * jax.random.normal(
          keys[1], (hidden_dim, vocab_size), jnp.float32),
      "b_out": scale * jax.random.normal(keys[2], (vocab_size,), jnp.float32),
      "w_ih": [],
      "w_hh": [],
      "b": [],
  }
  for layer in range(num_layers):
    din = embedding_dim if layer == 0 else hidden_dim
    k_ih, k_hh, k_bi, k_bh = jax.random.split(keys[4 + layer], 4)
    params["w_ih"].append(
        scale * jax.random.normal(k_ih, (din, 4 * hidden_dim), jnp.float32))
    params["w_hh"].append(
        scale * jax.random.normal(k_hh, (hidden_dim, 4 * hidden_dim),
                                  jnp.float32))
    b_ih = scale * jax.random.normal(k_bi, (4 * hidden_dim,), jnp.float32)
    b_hh = scale * jax.random.normal(k_bh, (4 * hidden_dim,), jnp.float32)
    params["b"].append(b_ih + b_hh)

  # Deterministic inputs: x starts with an SOS-like token, y is shifted x.
  kx, _ = jax.random.split(keys[3], 2)
  x = jax.random.randint(kx, (N, L), 1, vocab_size, dtype=jnp.int32)
  y = jnp.concatenate([x[:, 1:], jnp.zeros((N, 1), dtype=jnp.int32)], axis=1)
  lengths = jnp.array([L, L - 3], dtype=jnp.int32)

  kparams = prepare_kernel_params(params, hidden_dim, num_layers)

  nll = rnn_lm_forward(kparams, x, y, lengths)
  nll = jax.block_until_ready(nll)

  ref = _forward_ref(params, x, y, lengths, num_layers)
  assert nll.shape == (N, L)
  assert jnp.allclose(nll, ref, atol=1e-3, rtol=1e-3), (
      float(jnp.max(jnp.abs(nll - ref))))

  print("KERNEL_OK")
</pallas_src>

<mosaic_0001>
module attributes {stable_mosaic.version = 11 : i64} {
  func.func @rnn_lm_fused_kernel(%arg0: memref<8x16x128xbf16, #tpu.memory_space<vmem>>, %arg1: memref<2x128x128xbf16, #tpu.memory_space<vmem>>, %arg2: memref<2x128x128xbf16, #tpu.memory_space<vmem>>, %arg3: memref<2x1x128xf32, #tpu.memory_space<vmem>>, %arg4: memref<128x128xbf16, #tpu.memory_space<vmem>>, %arg5: memref<128x1xf32, #tpu.memory_space<vmem>>, %arg6: memref<1x128xi32, #tpu.memory_space<vmem>>, %arg7: memref<1x128xf32, #tpu.memory_space<vmem>>, %arg8: memref<1x128xf32, #tpu.memory_space<vmem>>, %arg9: memref<8x16x128xbf16, #tpu.memory_space<vmem>>, %arg10: memref<8x16x128xf32, #tpu.memory_space<vmem>>) attributes {dimension_semantics = [], scalar_prefetch = 0 : i64, scratch_operands = 2 : i64, tpu.core_type = #tpu.core_type<tc>} {
    %0 = tpu.iota {dimensions = array<i32: 1>} : vector<16x128xi32>
    %c96_i32 = arith.constant 96 : i32
    %1 = vector.broadcast %c96_i32 : i32 to vector<16x128xi32>
    %2 = arith.cmpi sge, %0, %1 : vector<16x128xi32>
    %c0 = arith.constant 0 : index
    %c0_0 = arith.constant 0 : index
    %c0_1 = arith.constant 0 : index
    %3 = vector.load %arg0[%c0, %c0_0, %c0_1] : memref<8x16x128xbf16, #tpu.memory_space<vmem>>, vector<8x16x128xbf16>
    %4 = vector.shape_cast %3 : vector<8x16x128xbf16> to vector<128x128xbf16>
    %c0_2 = arith.constant 0 : index
    %c0_3 = arith.constant 0 : index
    %c0_4 = arith.constant 0 : index
    %5 = vector.load %arg1[%c0_2, %c0_3, %c0_4] : memref<2x128x128xbf16, #tpu.memory_space<vmem>>, vector<1x128x128xbf16>
    %6 = vector.shape_cast %5 : vector<1x128x128xbf16> to vector<128x128xbf16>
    %cst = arith.constant dense<0.000000e+00> : vector<128x128xf32>
    %7 = tpu.matmul %4, %6, %cst {dimension_numbers = #tpu.dot_dimension_numbers<[1], [0], [0], [1], [0, 0, 1, 1], [], []>} : vector<128x128xbf16>, vector<128x128xbf16>, vector<128x128xf32> -> vector<128x128xf32>
    %c0_5 = arith.constant 0 : index
    %c0_6 = arith.constant 0 : index
    %c0_7 = arith.constant 0 : index
    %8 = vector.load %arg3[%c0_5, %c0_6, %c0_7] : memref<2x1x128xf32, #tpu.memory_space<vmem>>, vector<1x1x128xf32>
    %9 = vector.shape_cast %8 : vector<1x1x128xf32> to vector<1x128xf32>
    %10 = vector.broadcast %9 : vector<1x128xf32> to vector<128x128xf32>
    %11 = arith.addf %7, %10 : vector<128x128xf32>
    %12 = vector.shape_cast %11 : vector<128x128xf32> to vector<8x16x128xf32>
    %c0_8 = arith.constant 0 : index
    %c0_9 = arith.constant 0 : index
    %c0_10 = arith.constant 0 : index
    %13 = vector.load %arg10[%c0_8, %c0_9, %c0_10] : memref<8x16x128xf32, #tpu.memory_space<vmem>>, vector<8x16x128xf32>
    tpu.vector_store %arg10[%c0_8, %c0_9, %c0_10], %12 {strides = array<i32>} : memref<8x16x128xf32, #tpu.memory_space<vmem>>, vector<8x16x128xf32>,
    %cst_11 = arith.constant 0.000000e+00 : bf16
    %14 = vector.broadcast %cst_11 : bf16 to vector<16x128xbf16>
    %cst_12 = arith.constant 0.000000e+00 : f32
    %15 = vector.broadcast %cst_12 : f32 to vector<16x128xf32>
    %c0_13 = arith.constant 0 : index
    %c0_14 = arith.constant 0 : index
    %c0_15 = arith.constant 0 : index
    %16 = vector.load %arg10[%c0_13, %c0_14, %c0_15] : memref<8x16x128xf32, #tpu.memory_space<vmem>>, vector<1x16x128xf32>
    %17 = vector.shape_cast %16 : vector<1x16x128xf32> to vector<16x128xf32>
    %c0_16 = arith.constant 0 : index
    %c0_17 = arith.constant 0 : index
    %c0_18 = arith.constant 0 : index
    %18 = vector.load %arg2[%c0_16, %c0_17, %c0_18] : memref<2x128x128xbf16, #tpu.memory_space<vmem>>, vector<1x128x128xbf16>
    %19 = vector.shape_cast %18 : vector<1x128x128xbf16> to vector<128x128xbf16>
    %cst_19 = arith.constant dense<0.000000e+00> : vector<16x128xf32>
    %20 = tpu.matmul %14, %19, %cst_19 {dimension_numbers = #tpu.dot_dimension_numbers<[1], [0], [0], [1], [0, 0, 1, 1], [], []>} : vector<16x128xbf16>, vector<128x128xbf16>, vector<16x128xf32> -> vector<16x128xf32>
    %21 = arith.addf %17, %20 : vector<16x128xf32>
    %22 = math.tanh %21 : vector<16x128xf32>
    %cst_20 = arith.constant 5.000000e-01 : f32
    %23 = vector.broadcast %cst_20 : f32 to vector<16x128xf32>
    %24 = arith.mulf %23, %22 : vector<16x128xf32>
    %cst_21 = arith.constant 5.000000e-01 : f32
    %25 = vector.broadcast %cst_21 : f32 to vector<16x128xf32>
    %26 = arith.addf %24, %25 : vector<16x128xf32>
    %27 = arith.select %2, %22, %26 : vector<16x128xi1>, vector<16x128xf32>
    %c64_i32 = arith.constant 64 : i32
    %28 = tpu.dynamic_rotate %27 by %c64_i32 dim 1 : vector<16x128xf32>, i32 -> vector<16x128xf32>
    %c32_i32 = arith.constant 32 : i32
    %29 = tpu.dynamic_rotate %27 by %c32_i32 dim 1 : vector<16x128xf32>, i32 -> vector<16x128xf32>
    %c96_i32_22 = arith.constant 96 : i32
    %30 = tpu.dynamic_rotate %27 by %c96_i32_22 dim 1 : vector<16x128xf32>, i32 -> vector<16x128xf32>
    %31 = arith.mulf %28, %15 : vector<16x128xf32>
    %32 = arith.mulf %29, %30 : vector<16x128xf32>
    %33 = arith.addf %31, %32 : vector<16x128xf32>
    %34 = math.tanh %33 : vector<16x128xf32>
    %35 = arith.mulf %27, %34 : vector<16x128xf32>
    %36 = arith.truncf %35 : vector<16x128xf32> to vector<16x128xbf16>
    %c0_23 = arith.constant 0 : index
    %c0_24 = arith.constant 0 : index
    %c0_25 = arith.constant 0 : index
    %37 = vector.load %arg9[%c0_23, %c0_24, %c0_25] : memref<8x16x128xbf16, #tpu.memory_space<vmem>>, vector<1x16x128xbf16>
    %38 = vector.shape_cast %37 : vector<1x16x128xbf16> to vector<16x128xbf16>
    %39 = vector.shape_cast %36 : vector<16x128xbf16> to vector<1x16x128xbf16>
    tpu.vector_store %arg9[%c0_23, %c0_24, %c0_25], %39 {strides = array<i32>} : memref<8x16x128xbf16, #tpu.memory_space<vmem>>, vector<1x16x128xbf16>,
    %c1 = arith.constant 1 : index
    %c0_26 = arith.constant 0 : index
    %c0_27 = arith.constant 0 : index
    %40 = vector.load %arg10[%c1, %c0_26, %c0_27] : memref<8x16x128xf32, #tpu.memory_space<vmem>>, vector<1x16x128xf32>
    %41 = vector.shape_cast %40 : vector<1x16x128xf32> to vector<16x128xf32>
    %c0_28 = arith.constant 0 : index
    %c0_29 = arith.constant 0 : index
    %c0_30 = arith.constant 0 : index
    %42 = vector.load %arg2[%c0_28, %c0_29, %c0_30] : memref<2x128x128xbf16, #tpu.memory_space<vmem>>, vector<1x128x128xbf16>
    %43 = vector.shape_cast %42 : vector<1x128x128xbf16> to vector<128x128xbf16>
    %cst_31 = arith.constant dense<0.000000e+00> : vector<16x128xf32>
    %44 = tpu.matmul %36, %43, %cst_31 {dimension_numbers = #tpu.dot_dimension_numbers<[1], [0], [0], [1], [0, 0, 1, 1], [], []>} : vector<16x128xbf16>, vector<128x128xbf16>, vector<16x128xf32> -> vector<16x128xf32>
    %45 = arith.addf %41, %44 : vector<16x128xf32>
    %46 = math.tanh %45 : vector<16x128xf32>
    %cst_32 = arith.constant 5.000000e-01 : f32
    %47 = vector.broadcast %cst_32 : f32 to vector<16x128xf32>
    %48 = arith.mulf %47, %46 : vector<16x128xf32>
    %cst_33 = arith.constant 5.000000e-01 : f32
    %49 = vector.broadcast %cst_33 : f32 to vector<16x128xf32>
    %50 = arith.addf %48, %49 : vector<16x128xf32>
    %51 = arith.select %2, %46, %50 : vector<16x128xi1>, vector<16x128xf32>
    %c64_i32_34 = arith.constant 64 : i32
    %52 = tpu.dynamic_rotate %51 by %c64_i32_34 dim 1 : vector<16x128xf32>, i32 -> vector<16x128xf32>
    %c32_i32_35 = arith.constant 32 : i32
    %53 = tpu.dynamic_rotate %51 by %c32_i32_35 dim 1 : vector<16x128xf32>, i32 -> vector<16x128xf32>
    %c96_i32_36 = arith.constant 96 : i32
    %54 = tpu.dynamic_rotate %51 by %c96_i32_36 dim 1 : vector<16x128xf32>, i32 -> vector<16x128xf32>
    %55 = arith.mulf %52, %33 : vector<16x128xf32>
    %56 = arith.mulf %53, %54 : vector<16x128xf32>
    %57 = arith.addf %55, %56 : vector<16x128xf32>
    %58 = math.tanh %57 : vector<16x128xf32>
    %59 = arith.mulf %51, %58 : vector<16x128xf32>
    %60 = arith.truncf %59 : vector<16x128xf32> to vector<16x128xbf16>
    %c1_37 = arith.constant 1 : index
    %c0_38 = arith.constant 0 : index
    %c0_39 = arith.constant 0 : index
    %61 = vector.load %arg9[%c1_37, %c0_38, %c0_39] : memref<8x16x128xbf16, #tpu.memory_space<vmem>>, vector<1x16x128xbf16>
    %62 = vector.shape_cast %61 : vector<1x16x128xbf16> to vector<16x128xbf16>
    %63 = vector.shape_cast %60 : vector<16x128xbf16> to vector<1x16x128xbf16>
    tpu.vector_store %arg9[%c1_37, %c0_38, %c0_39], %63 {strides = array<i32>} : memref<8x16x128xbf16, #tpu.memory_space<vmem>>, vector<1x16x128xbf16>,
    %c2 = arith.constant 2 : index
    %c0_40 = arith.constant 0 : index
    %c0_41 = arith.constant 0 : index
    %64 = vector.load %arg10[%c2, %c0_40, %c0_41] : memref<8x16x128xf32, #tpu.memory_space<vmem>>, vector<1x16x128xf32>
    %65 = vector.shape_cast %64 : vector<1x16x128xf32> to vector<16x128xf32>
    %c0_42 = arith.constant 0 : index
    %c0_43 = arith.constant 0 : index
    %c0_44 = arith.constant 0 : index
    %66 = vector.load %arg2[%c0_42, %c0_43, %c0_44] : memref<2x128x128xbf16, #tpu.memory_space<vmem>>, vector<1x128x128xbf16>
    %67 = vector.shape_cast %66 : vector<1x128x128xbf16> to vector<128x128xbf16>
    %cst_45 = arith.constant dense<0.000000e+00> : vector<16x128xf32>
    %68 = tpu.matmul %60, %67, %cst_45 {dimension_numbers = #tpu.dot_dimension_numbers<[1], [0], [0], [1], [0, 0, 1, 1], [], []>} : vector<16x128xbf16>, vector<128x128xbf16>, vector<16x128xf32> -> vector<16x128xf32>
    %69 = arith.addf %65, %68 : vector<16x128xf32>
    %70 = math.tanh %69 : vector<16x128xf32>
    %cst_46 = arith.constant 5.000000e-01 : f32
    %71 = vector.broadcast %cst_46 : f32 to vector<16x128xf32>
    %72 = arith.mulf %71, %70 : vector<16x128xf32>
    %cst_47 = arith.constant 5.000000e-01 : f32
    %73 = vector.broadcast %cst_47 : f32 to vector<16x128xf32>
    %74 = arith.addf %72, %73 : vector<16x128xf32>
    %75 = arith.select %2, %70, %74 : vector<16x128xi1>, vector<16x128xf32>
    %c64_i32_48 = arith.constant 64 : i32
    %76 = tpu.dynamic_rotate %75 by %c64_i32_48 dim 1 : vector<16x128xf32>, i32 -> vector<16x128xf32>
    %c32_i32_49 = arith.constant 32 : i32
    %77 = tpu.dynamic_rotate %75 by %c32_i32_49 dim 1 : vector<16x128xf32>, i32 -> vector<16x128xf32>
    %c96_i32_50 = arith.constant 96 : i32
    %78 = tpu.dynamic_rotate %75 by %c96_i32_50 dim 1 : vector<16x128xf32>, i32 -> vector<16x128xf32>
    %79 = arith.mulf %76, %57 : vector<16x128xf32>
    %80 = arith.mulf %77, %78 : vector<16x128xf32>
    %81 = arith.addf %79, %80 : vector<16x128xf32>
    %82 = math.tanh %81 : vector<16x128xf32>
    %83 = arith.mulf %75, %82 : vector<16x128xf32>
    %84 = arith.truncf %83 : vector<16x128xf32> to vector<16x128xbf16>
    %c2_51 = arith.constant 2 : index
    %c0_52 = arith.constant 0 : index
    %c0_53 = arith.constant 0 : index
    %85 = vector.load %arg9[%c2_51, %c0_52, %c0_53] : memref<8x16x128xbf16, #tpu.memory_space<vmem>>, vector<1x16x128xbf16>
    %86 = vector.shape_cast %85 : vector<1x16x128xbf16> to vector<16x128xbf16>
    %87 = vector.shape_cast %84 : vector<16x128xbf16> to vector<1x16x128xbf16>
    tpu.vector_store %arg9[%c2_51, %c0_52, %c0_53], %87 {strides = array<i32>} : memref<8x16x128xbf16, #tpu.memory_space<vmem>>, vector<1x16x128xbf16>,
    %c3 = arith.constant 3 : index
    %c0_54 = arith.constant 0 : index
    %c0_55 = arith.constant 0 : index
    %88 = vector.load %arg10[%c3, %c0_54, %c0_55] : memref<8x16x128xf32, #tpu.memory_space<vmem>>, vector<1x16x128xf32>
    %89 = vector.shape_cast %88 : vector<1x16x128xf32> to vector<16x128xf32>
    %c0_56 = arith.constant 0 : index
    %c0_57 = arith.constant 0 : index
    %c0_58 = arith.constant 0 : index
    %90 = vector.load %arg2[%c0_56, %c0_57, %c0_58] : memref<2x128x128xbf16, #tpu.memory_space<vmem>>, vector<1x128x128xbf16>
    %91 = vector.shape_cast %90 : vector<1x128x128xbf16> to vector<128x128xbf16>
    %cst_59 = arith.constant dense<0.000000e+00> : vector<16x128xf32>
    %92 = tpu.matmul %84, %91, %cst_59 {dimension_numbers = #tpu.dot_dimension_numbers<[1], [0], [0], [1], [0, 0, 1, 1], [], []>} : vector<16x128xbf16>, vector<128x128xbf16>, vector<16x128xf32> -> vector<16x128xf32>
    %93 = arith.addf %89, %92 : vector<16x128xf32>
    %94 = math.tanh %93 : vector<16x128xf32>
    %cst_60 = arith.constant 5.000000e-01 : f32
    %95 = vector.broadcast %cst_60 : f32 to vector<16x128xf32>
    %96 = arith.mulf %95, %94 : vector<16x128xf32>
    %cst_61 = arith.constant 5.000000e-01 : f32
    %97 = vector.broadcast %cst_61 : f32 to vector<16x128xf32>
    %98 = arith.addf %96, %97 : vector<16x128xf32>
    %99 = arith.select %2, %94, %98 : vector<16x128xi1>, vector<16x128xf32>
    %c64_i32_62 = arith.constant 64 : i32
    %100 = tpu.dynamic_rotate %99 by %c64_i32_62 dim 1 : vector<16x128xf32>, i32 -> vector<16x128xf32>
    %c32_i32_63 = arith.constant 32 : i32
    %101 = tpu.dynamic_rotate %99 by %c32_i32_63 dim 1 : vector<16x128xf32>, i32 -> vector<16x128xf32>
    %c96_i32_64 = arith.constant 96 : i32
    %102 = tpu.dynamic_rotate %99 by %c96_i32_64 dim 1 : vector<16x128xf32>, i32 -> vector<16x128xf32>
    %103 = arith.mulf %100, %81 : vector<16x128xf32>
    %104 = arith.mulf %101, %102 : vector<16x128xf32>
    %105 = arith.addf %103, %104 : vector<16x128xf32>
    %106 = math.tanh %105 : vector<16x128xf32>
    %107 = arith.mulf %99, %106 : vector<16x128xf32>
    %108 = arith.truncf %107 : vector<16x128xf32> to vector<16x128xbf16>
    %c3_65 = arith.constant 3 : index
    %c0_66 = arith.constant 0 : index
    %c0_67 = arith.constant 0 : index
    %109 = vector.load %arg9[%c3_65, %c0_66, %c0_67] : memref<8x16x128xbf16, #tpu.memory_space<vmem>>, vector<1x16x128xbf16>
    %110 = vector.shape_cast %109 : vector<1x16x128xbf16> to vector<16x128xbf16>
    %111 = vector.shape_cast %108 : vector<16x128xbf16> to vector<1x16x128xbf16>
    tpu.vector_store %arg9[%c3_65, %c0_66, %c0_67], %111 {strides = array<i32>} : memref<8x16x128xbf16, #tpu.memory_space<vmem>>, vector<1x16x128xbf16>,
    %c4 = arith.constant 4 : index
    %c0_68 = arith.constant 0 : index
    %c0_69 = arith.constant 0 : index
    %112 = vector.load %arg10[%c4, %c0_68, %c0_69] : memref<8x16x128xf32, #tpu.memory_space<vmem>>, vector<1x16x128xf32>
    %113 = vector.shape_cast %112 : vector<1x16x128xf32> to vector<16x128xf32>
    %c0_70 = arith.constant 0 : index
    %c0_71 = arith.constant 0 : index
    %c0_72 = arith.constant 0 : index
    %114 = vector.load %arg2[%c0_70, %c0_71, %c0_72] : memref<2x128x128xbf16, #tpu.memory_space<vmem>>, vector<1x128x128xbf16>
    %115 = vector.shape_cast %114 : vector<1x128x128xbf16> to vector<128x128xbf16>
    %cst_73 = arith.constant dense<0.000000e+00> : vector<16x128xf32>
    %116 = tpu.matmul %108, %115, %cst_73 {dimension_numbers = #tpu.dot_dimension_numbers<[1], [0], [0], [1], [0, 0, 1, 1], [], []>} : vector<16x128xbf16>, vector<128x128xbf16>, vector<16x128xf32> -> vector<16x128xf32>
    %117 = arith.addf %113, %116 : vector<16x128xf32>
    %118 = math.tanh %117 : vector<16x128xf32>
    %cst_74 = arith.constant 5.000000e-01 : f32
    %119 = vector.broadcast %cst_74 : f32 to vector<16x128xf32>
    %120 = arith.mulf %119, %118 : vector<16x128xf32>
    %cst_75 = arith.constant 5.000000e-01 : f32
    %121 = vector.broadcast %cst_75 : f32 to vector<16x128xf32>
    %122 = arith.addf %120, %121 : vector<16x128xf32>
    %123 = arith.select %2, %118, %122 : vector<16x128xi1>, vector<16x128xf32>
    %c64_i32_76 = arith.constant 64 : i32
    %124 = tpu.dynamic_rotate %123 by %c64_i32_76 dim 1 : vector<16x128xf32>, i32 -> vector<16x128xf32>
    %c32_i32_77 = arith.constant 32 : i32
    %125 = tpu.dynamic_rotate %123 by %c32_i32_77 dim 1 : vector<16x128xf32>, i32 -> vector<16x128xf32>
    %c96_i32_78 = arith.constant 96 : i32
    %126 = tpu.dynamic_rotate %123 by %c96_i32_78 dim 1 : vector<16x128xf32>, i32 -> vector<16x128xf32>
    %127 = arith.mulf %124, %105 : vector<16x128xf32>
    %128 = arith.mulf %125, %126 : vector<16x128xf32>
    %129 = arith.addf %127, %128 : vector<16x128xf32>
    %130 = math.tanh %129 : vector<16x128xf32>
    %131 = arith.mulf %123, %130 : vector<16x128xf32>
    %132 = arith.truncf %131 : vector<16x128xf32> to vector<16x128xbf16>
    %c4_79 = arith.constant 4 : index
    %c0_80 = arith.constant 0 : index
    %c0_81 = arith.constant 0 : index
    %133 = vector.load %arg9[%c4_79, %c0_80, %c0_81] : memref<8x16x128xbf16, #tpu.memory_space<vmem>>, vector<1x16x128xbf16>
    %134 = vector.shape_cast %133 : vector<1x16x128xbf16> to vector<16x128xbf16>
    %135 = vector.shape_cast %132 : vector<16x128xbf16> to vector<1x16x128xbf16>
    tpu.vector_store %arg9[%c4_79, %c0_80, %c0_81], %135 {strides = array<i32>} : memref<8x16x128xbf16, #tpu.memory_space<vmem>>, vector<1x16x128xbf16>,
    %c5 = arith.constant 5 : index
    %c0_82 = arith.constant 0 : index
    %c0_83 = arith.constant 0 : index
    %136 = vector.load %arg10[%c5, %c0_82, %c0_83] : memref<8x16x128xf32, #tpu.memory_space<vmem>>, vector<1x16x128xf32>
    %137 = vector.shape_cast %136 : vector<1x16x128xf32> to vector<16x128xf32>
    %c0_84 = arith.constant 0 : index
    %c0_85 = arith.constant 0 : index
    %c0_86 = arith.constant 0 : index
    %138 = vector.load %arg2[%c0_84, %c0_85, %c0_86] : memref<2x128x128xbf16, #tpu.memory_space<vmem>>, vector<1x128x128xbf16>
    %139 = vector.shape_cast %138 : vector<1x128x128xbf16> to vector<128x128xbf16>
    %cst_87 = arith.constant dense<0.000000e+00> : vector<16x128xf32>
    %140 = tpu.matmul %132, %139, %cst_87 {dimension_numbers = #tpu.dot_dimension_numbers<[1], [0], [0], [1], [0, 0, 1, 1], [], []>} : vector<16x128xbf16>, vector<128x128xbf16>, vector<16x128xf32> -> vector<16x128xf32>
    %141 = arith.addf %137, %140 : vector<16x128xf32>
    %142 = math.tanh %141 : vector<16x128xf32>
    %cst_88 = arith.constant 5.000000e-01 : f32
    %143 = vector.broadcast %cst_88 : f32 to vector<16x128xf32>
    %144 = arith.mulf %143, %142 : vector<16x128xf32>
    %cst_89 = arith.constant 5.000000e-01 : f32
    %145 = vector.broadcast %cst_89 : f32 to vector<16x128xf32>
    %146 = arith.addf %144, %145 : vector<16x128xf32>
    %147 = arith.select %2, %142, %146 : vector<16x128xi1>, vector<16x128xf32>
    %c64_i32_90 = arith.constant 64 : i32
    %148 = tpu.dynamic_rotate %147 by %c64_i32_90 dim 1 : vector<16x128xf32>, i32 -> vector<16x128xf32>
    %c32_i32_91 = arith.constant 32 : i32
    %149 = tpu.dynamic_rotate %147 by %c32_i32_91 dim 1 : vector<16x128xf32>, i32 -> vector<16x128xf32>
    %c96_i32_92 = arith.constant 96 : i32
    %150 = tpu.dynamic_rotate %147 by %c96_i32_92 dim 1 : vector<16x128xf32>, i32 -> vector<16x128xf32>
    %151 = arith.mulf %148, %129 : vector<16x128xf32>
    %152 = arith.mulf %149, %150 : vector<16x128xf32>
    %153 = arith.addf %151, %152 : vector<16x128xf32>
    %154 = math.tanh %153 : vector<16x128xf32>
    %155 = arith.mulf %147, %154 : vector<16x128xf32>
    %156 = arith.truncf %155 : vector<16x128xf32> to vector<16x128xbf16>
    %c5_93 = arith.constant 5 : index
    %c0_94 = arith.constant 0 : index
    %c0_95 = arith.constant 0 : index
    %157 = vector.load %arg9[%c5_93, %c0_94, %c0_95] : memref<8x16x128xbf16, #tpu.memory_space<vmem>>, vector<1x16x128xbf16>
    %158 = vector.shape_cast %157 : vector<1x16x128xbf16> to vector<16x128xbf16>
    %159 = vector.shape_cast %156 : vector<16x128xbf16> to vector<1x16x128xbf16>
    tpu.vector_store %arg9[%c5_93, %c0_94, %c0_95], %159 {strides = array<i32>} : memref<8x16x128xbf16, #tpu.memory_space<vmem>>, vector<1x16x128xbf16>,
    %c6 = arith.constant 6 : index
    %c0_96 = arith.constant 0 : index
    %c0_97 = arith.constant 0 : index
    %160 = vector.load %arg10[%c6, %c0_96, %c0_97] : memref<8x16x128xf32, #tpu.memory_space<vmem>>, vector<1x16x128xf32>
    %161 = vector.shape_cast %160 : vector<1x16x128xf32> to vector<16x128xf32>
    %c0_98 = arith.constant 0 : index
    %c0_99 = arith.constant 0 : index
    %c0_100 = arith.constant 0 : index
    %162 = vector.load %arg2[%c0_98, %c0_99, %c0_100] : memref<2x128x128xbf16, #tpu.memory_space<vmem>>, vector<1x128x128xbf16>
    %163 = vector.shape_cast %162 : vector<1x128x128xbf16> to vector<128x128xbf16>
    %cst_101 = arith.constant dense<0.000000e+00> : vector<16x128xf32>
    %164 = tpu.matmul %156, %163, %cst_101 {dimension_numbers = #tpu.dot_dimension_numbers<[1], [0], [0], [1], [0, 0, 1, 1], [], []>} : vector<16x128xbf16>, vector<128x128xbf16>, vector<16x128xf32> -> vector<16x128xf32>
    %165 = arith.addf %161, %164 : vector<16x128xf32>
    %166 = math.tanh %165 : vector<16x128xf32>
    %cst_102 = arith.constant 5.000000e-01 : f32
    %167 = vector.broadcast %cst_102 : f32 to vector<16x128xf32>
    %168 = arith.mulf %167, %166 : vector<16x128xf32>
    %cst_103 = arith.constant 5.000000e-01 : f32
    %169 = vector.broadcast %cst_103 : f32 to vector<16x128xf32>
    %170 = arith.addf %168, %169 : vector<16x128xf32>
    %171 = arith.select %2, %166, %170 : vector<16x128xi1>, vector<16x128xf32>
    %c64_i32_104 = arith.constant 64 : i32
    %172 = tpu.dynamic_rotate %171 by %c64_i32_104 dim 1 : vector<16x128xf32>, i32 -> vector<16x128xf32>
    %c32_i32_105 = arith.constant 32 : i32
    %173 = tpu.dynamic_rotate %171 by %c32_i32_105 dim 1 : vector<16x128xf32>, i32 -> vector<16x128xf32>
    %c96_i32_106 = arith.constant 96 : i32
    %174 = tpu.dynamic_rotate %171 by %c96_i32_106 dim 1 : vector<16x128xf32>, i32 -> vector<16x128xf32>
    %175 = arith.mulf %172, %153 : vector<16x128xf32>
    %176 = arith.mulf %173, %174 : vector<16x128xf32>
    %177 = arith.addf %175, %176 : vector<16x128xf32>
    %178 = math.tanh %177 : vector<16x128xf32>
    %179 = arith.mulf %171, %178 : vector<16x128xf32>
    %180 = arith.truncf %179 : vector<16x128xf32> to vector<16x128xbf16>
    %c6_107 = arith.constant 6 : index
    %c0_108 = arith.constant 0 : index
    %c0_109 = arith.constant 0 : index
    %181 = vector.load %arg9[%c6_107, %c0_108, %c0_109] : memref<8x16x128xbf16, #tpu.memory_space<vmem>>, vector<1x16x128xbf16>
    %182 = vector.shape_cast %181 : vector<1x16x128xbf16> to vector<16x128xbf16>
    %183 = vector.shape_cast %180 : vector<16x128xbf16> to vector<1x16x128xbf16>
    tpu.vector_store %arg9[%c6_107, %c0_108, %c0_109], %183 {strides = array<i32>} : memref<8x16x128xbf16, #tpu.memory_space<vmem>>, vector<1x16x128xbf16>,
    %c7 = arith.constant 7 : index
    %c0_110 = arith.constant 0 : index
    %c0_111 = arith.constant 0 : index
    %184 = vector.load %arg10[%c7, %c0_110, %c0_111] : memref<8x16x128xf32, #tpu.memory_space<vmem>>, vector<1x16x128xf32>
    %185 = vector.shape_cast %184 : vector<1x16x128xf32> to vector<16x128xf32>
    %c0_112 = arith.constant 0 : index
    %c0_113 = arith.constant 0 : index
    %c0_114 = arith.constant 0 : index
    %186 = vector.load %arg2[%c0_112, %c0_113, %c0_114] : memref<2x128x128xbf16, #tpu.memory_space<vmem>>, vector<1x128x128xbf16>
    %187 = vector.shape_cast %186 : vector<1x128x128xbf16> to vector<128x128xbf16>
    %cst_115 = arith.constant dense<0.000000e+00> : vector<16x128xf32>
    %188 = tpu.matmul %180, %187, %cst_115 {dimension_numbers = #tpu.dot_dimension_numbers<[1], [0], [0], [1], [0, 0, 1, 1], [], []>} : vector<16x128xbf16>, vector<128x128xbf16>, vector<16x128xf32> -> vector<16x128xf32>
    %189 = arith.addf %185, %188 : vector<16x128xf32>
    %190 = math.tanh %189 : vector<16x128xf32>
    %cst_116 = arith.constant 5.000000e-01 : f32
    %191 = vector.broadcast %cst_116 : f32 to vector<16x128xf32>
    %192 = arith.mulf %191, %190 : vector<16x128xf32>
    %cst_117 = arith.constant 5.000000e-01 : f32
    %193 = vector.broadcast %cst_117 : f32 to vector<16x128xf32>
    %194 = arith.addf %192, %193 : vector<16x128xf32>
    %195 = arith.select %2, %190, %194 : vector<16x128xi1>, vector<16x128xf32>
    %c64_i32_118 = arith.constant 64 : i32
    %196 = tpu.dynamic_rotate %195 by %c64_i32_118 dim 1 : vector<16x128xf32>, i32 -> vector<16x128xf32>
    %c32_i32_119 = arith.constant 32 : i32
    %197 = tpu.dynamic_rotate %195 by %c32_i32_119 dim 1 : vector<16x128xf32>, i32 -> vector<16x128xf32>
    %c96_i32_120 = arith.constant 96 : i32
    %198 = tpu.dynamic_rotate %195 by %c96_i32_120 dim 1 : vector<16x128xf32>, i32 -> vector<16x128xf32>
    %199 = arith.mulf %196, %177 : vector<16x128xf32>
    %200 = arith.mulf %197, %198 : vector<16x128xf32>
    %201 = arith.addf %199, %200 : vector<16x128xf32>
    %202 = math.tanh %201 : vector<16x128xf32>
    %203 = arith.mulf %195, %202 : vector<16x128xf32>
    %204 = arith.truncf %203 : vector<16x128xf32> to vector<16x128xbf16>
    %c7_121 = arith.constant 7 : index
    %c0_122 = arith.constant 0 : index
    %c0_123 = arith.constant 0 : index
    %205 = vector.load %arg9[%c7_121, %c0_122, %c0_123] : memref<8x16x128xbf16, #tpu.memory_space<vmem>>, vector<1x16x128xbf16>
    %206 = vector.shape_cast %205 : vector<1x16x128xbf16> to vector<16x128xbf16>
    %207 = vector.shape_cast %204 : vector<16x128xbf16> to vector<1x16x128xbf16>
    tpu.vector_store %arg9[%c7_121, %c0_122, %c0_123], %207 {strides = array<i32>} : memref<8x16x128xbf16, #tpu.memory_space<vmem>>, vector<1x16x128xbf16>,
    %c0_124 = arith.constant 0 : index
    %c0_125 = arith.constant 0 : index
    %c0_126 = arith.constant 0 : index
    %208 = vector.load %arg9[%c0_124, %c0_125, %c0_126] : memref<8x16x128xbf16, #tpu.memory_space<vmem>>, vector<8x16x128xbf16>
    %209 = vector.shape_cast %208 : vector<8x16x128xbf16> to vector<128x128xbf16>
    %c1_127 = arith.constant 1 : index
    %c0_128 = arith.constant 0 : index
    %c0_129 = arith.constant 0 : index
    %210 = vector.load %arg1[%c1_127, %c0_128, %c0_129] : memref<2x128x128xbf16, #tpu.memory_space<vmem>>, vector<1x128x128xbf16>
    %211 = vector.shape_cast %210 : vector<1x128x128xbf16> to vector<128x128xbf16>
    %cst_130 = arith.constant dense<0.000000e+00> : vector<128x128xf32>
    %212 = tpu.matmul %209, %211, %cst_130 {dimension_numbers = #tpu.dot_dimension_numbers<[1], [0], [0], [1], [0, 0, 1, 1], [], []>} : vector<128x128xbf16>, vector<128x128xbf16>, vector<128x128xf32> -> vector<128x128xf32>
    %c1_131 = arith.constant 1 : index
    %c0_132 = arith.constant 0 : index
    %c0_133 = arith.constant 0 : index
    %213 = vector.load %arg3[%c1_131, %c0_132, %c0_133] : memref<2x1x128xf32, #tpu.memory_space<vmem>>, vector<1x1x128xf32>
    %214 = vector.shape_cast %213 : vector<1x1x128xf32> to vector<1x128xf32>
    %215 = vector.broadcast %214 : vector<1x128xf32> to vector<128x128xf32>
    %216 = arith.addf %212, %215 : vector<128x128xf32>
    %217 = vector.shape_cast %216 : vector<128x128xf32> to vector<8x16x128xf32>
    %c0_134 = arith.constant 0 : index
    %c0_135 = arith.constant 0 : index
    %c0_136 = arith.constant 0 : index
    %218 = vector.load %arg10[%c0_134, %c0_135, %c0_136] : memref<8x16x128xf32, #tpu.memory_space<vmem>>, vector<8x16x128xf32>
    tpu.vector_store %arg10[%c0_134, %c0_135, %c0_136], %217 {strides = array<i32>} : memref<8x16x128xf32, #tpu.memory_space<vmem>>, vector<8x16x128xf32>,
    %cst_137 = arith.constant 0.000000e+00 : bf16
    %219 = vector.broadcast %cst_137 : bf16 to vector<16x128xbf16>
    %cst_138 = arith.constant 0.000000e+00 : f32
    %220 = vector.broadcast %cst_138 : f32 to vector<16x128xf32>
    %c0_139 = arith.constant 0 : index
    %c0_140 = arith.constant 0 : index
    %c0_141 = arith.constant 0 : index
    %221 = vector.load %arg10[%c0_139, %c0_140, %c0_141] : memref<8x16x128xf32, #tpu.memory_space<vmem>>, vector<1x16x128xf32>
    %222 = vector.shape_cast %221 : vector<1x16x128xf32> to vector<16x128xf32>
    %c1_142 = arith.constant 1 : index
    %c0_143 = arith.constant 0 : index
    %c0_144 = arith.constant 0 : index
    %223 = vector.load %arg2[%c1_142, %c0_143, %c0_144] : memref<2x128x128xbf16, #tpu.memory_space<vmem>>, vector<1x128x128xbf16>
    %224 = vector.shape_cast %223 : vector<1x128x128xbf16> to vector<128x128xbf16>
    %cst_145 = arith.constant dense<0.000000e+00> : vector<16x128xf32>
    %225 = tpu.matmul %219, %224, %cst_145 {dimension_numbers = #tpu.dot_dimension_numbers<[1], [0], [0], [1], [0, 0, 1, 1], [], []>} : vector<16x128xbf16>, vector<128x128xbf16>, vector<16x128xf32> -> vector<16x128xf32>
    %226 = arith.addf %222, %225 : vector<16x128xf32>
    %227 = math.tanh %226 : vector<16x128xf32>
    %cst_146 = arith.constant 5.000000e-01 : f32
    %228 = vector.broadcast %cst_146 : f32 to vector<16x128xf32>
    %229 = arith.mulf %228, %227 : vector<16x128xf32>
    %cst_147 = arith.constant 5.000000e-01 : f32
    %230 = vector.broadcast %cst_147 : f32 to vector<16x128xf32>
    %231 = arith.addf %229, %230 : vector<16x128xf32>
    %232 = arith.select %2, %227, %231 : vector<16x128xi1>, vector<16x128xf32>
    %c64_i32_148 = arith.constant 64 : i32
    %233 = tpu.dynamic_rotate %232 by %c64_i32_148 dim 1 : vector<16x128xf32>, i32 -> vector<16x128xf32>
    %c32_i32_149 = arith.constant 32 : i32
    %234 = tpu.dynamic_rotate %232 by %c32_i32_149 dim 1 : vector<16x128xf32>, i32 -> vector<16x128xf32>
    %c96_i32_150 = arith.constant 96 : i32
    %235 = tpu.dynamic_rotate %232 by %c96_i32_150 dim 1 : vector<16x128xf32>, i32 -> vector<16x128xf32>
    %236 = arith.mulf %233, %220 : vector<16x128xf32>
    %237 = arith.mulf %234, %235 : vector<16x128xf32>
    %238 = arith.addf %236, %237 : vector<16x128xf32>
    %239 = math.tanh %238 : vector<16x128xf32>
    %240 = arith.mulf %232, %239 : vector<16x128xf32>
    %241 = arith.truncf %240 : vector<16x128xf32> to vector<16x128xbf16>
    %c0_151 = arith.constant 0 : index
    %c0_152 = arith.constant 0 : index
    %c0_153 = arith.constant 0 : index
    %242 = vector.load %arg9[%c0_151, %c0_152, %c0_153] : memref<8x16x128xbf16, #tpu.memory_space<vmem>>, vector<1x16x128xbf16>
    %243 = vector.shape_cast %242 : vector<1x16x128xbf16> to vector<16x128xbf16>
    %244 = vector.shape_cast %241 : vector<16x128xbf16> to vector<1x16x128xbf16>
    tpu.vector_store %arg9[%c0_151, %c0_152, %c0_153], %244 {strides = array<i32>} : memref<8x16x128xbf16, #tpu.memory_space<vmem>>, vector<1x16x128xbf16>,
    %c1_154 = arith.constant 1 : index
    %c0_155 = arith.constant 0 : index
    %c0_156 = arith.constant 0 : index
    %245 = vector.load %arg10[%c1_154, %c0_155, %c0_156] : memref<8x16x128xf32, #tpu.memory_space<vmem>>, vector<1x16x128xf32>
    %246 = vector.shape_cast %245 : vector<1x16x128xf32> to vector<16x128xf32>
    %c1_157 = arith.constant 1 : index
    %c0_158 = arith.constant 0 : index
    %c0_159 = arith.constant 0 : index
    %247 = vector.load %arg2[%c1_157, %c0_158, %c0_159] : memref<2x128x128xbf16, #tpu.memory_space<vmem>>, vector<1x128x128xbf16>
    %248 = vector.shape_cast %247 : vector<1x128x128xbf16> to vector<128x128xbf16>
    %cst_160 = arith.constant dense<0.000000e+00> : vector<16x128xf32>
    %249 = tpu.matmul %241, %248, %cst_160 {dimension_numbers = #tpu.dot_dimension_numbers<[1], [0], [0], [1], [0, 0, 1, 1], [], []>} : vector<16x128xbf16>, vector<128x128xbf16>, vector<16x128xf32> -> vector<16x128xf32>
    %250 = arith.addf %246, %249 : vector<16x128xf32>
    %251 = math.tanh %250 : vector<16x128xf32>
    %cst_161 = arith.constant 5.000000e-01 : f32
    %252 = vector.broadcast %cst_161 : f32 to vector<16x128xf32>
    %253 = arith.mulf %252, %251 : vector<16x128xf32>
    %cst_162 = arith.constant 5.000000e-01 : f32
    %254 = vector.broadcast %cst_162 : f32 to vector<16x128xf32>
    %255 = arith.addf %253, %254 : vector<16x128xf32>
    %256 = arith.select %2, %251, %255 : vector<16x128xi1>, vector<16x128xf32>
    %c64_i32_163 = arith.constant 64 : i32
    %257 = tpu.dynamic_rotate %256 by %c64_i32_163 dim 1 : vector<16x128xf32>, i32 -> vector<16x128xf32>
    %c32_i32_164 = arith.constant 32 : i32
    %258 = tpu.dynamic_rotate %256 by %c32_i32_164 dim 1 : vector<16x128xf32>, i32 -> vector<16x128xf32>
    %c96_i32_165 = arith.constant 96 : i32
    %259 = tpu.dynamic_rotate %256 by %c96_i32_165 dim 1 : vector<16x128xf32>, i32 -> vector<16x128xf32>
    %260 = arith.mulf %257, %238 : vector<16x128xf32>
    %261 = arith.mulf %258, %259 : vector<16x128xf32>
    %262 = arith.addf %260, %261 : vector<16x128xf32>
    %263 = math.tanh %262 : vector<16x128xf32>
    %264 = arith.mulf %256, %263 : vector<16x128xf32>
    %265 = arith.truncf %264 : vector<16x128xf32> to vector<16x128xbf16>
    %c1_166 = arith.constant 1 : index
    %c0_167 = arith.constant 0 : index
    %c0_168 = arith.constant 0 : index
    %266 = vector.load %arg9[%c1_166, %c0_167, %c0_168] : memref<8x16x128xbf16, #tpu.memory_space<vmem>>, vector<1x16x128xbf16>
    %267 = vector.shape_cast %266 : vector<1x16x128xbf16> to vector<16x128xbf16>
    %268 = vector.shape_cast %265 : vector<16x128xbf16> to vector<1x16x128xbf16>
    tpu.vector_store %arg9[%c1_166, %c0_167, %c0_168], %268 {strides = array<i32>} : memref<8x16x128xbf16, #tpu.memory_space<vmem>>, vector<1x16x128xbf16>,
    %c2_169 = arith.constant 2 : index
    %c0_170 = arith.constant 0 : index
    %c0_171 = arith.constant 0 : index
    %269 = vector.load %arg10[%c2_169, %c0_170, %c0_171] : memref<8x16x128xf32, #tpu.memory_space<vmem>>, vector<1x16x128xf32>
    %270 = vector.shape_cast %269 : vector<1x16x128xf32> to vector<16x128xf32>
    %c1_172 = arith.constant 1 : index
    %c0_173 = arith.constant 0 : index
    %c0_174 = arith.constant 0 : index
    %271 = vector.load %arg2[%c1_172, %c0_173, %c0_174] : memref<2x128x128xbf16, #tpu.memory_space<vmem>>, vector<1x128x128xbf16>
    %272 = vector.shape_cast %271 : vector<1x128x128xbf16> to vector<128x128xbf16>
    %cst_175 = arith.constant dense<0.000000e+00> : vector<16x128xf32>
    %273 = tpu.matmul %265, %272, %cst_175 {dimension_numbers = #tpu.dot_dimension_numbers<[1], [0], [0], [1], [0, 0, 1, 1], [], []>} : vector<16x128xbf16>, vector<128x128xbf16>, vector<16x128xf32> -> vector<16x128xf32>
    %274 = arith.addf %270, %273 : vector<16x128xf32>
    %275 = math.tanh %274 : vector<16x128xf32>
    %cst_176 = arith.constant 5.000000e-01 : f32
    %276 = vector.broadcast %cst_176 : f32 to vector<16x128xf32>
    %277 = arith.mulf %276, %275 : vector<16x128xf32>
    %cst_177 = arith.constant 5.000000e-01 : f32
    %278 = vector.broadcast %cst_177 : f32 to vector<16x128xf32>
    %279 = arith.addf %277, %278 : vector<16x128xf32>
    %280 = arith.select %2, %275, %279 : vector<16x128xi1>, vector<16x128xf32>
    %c64_i32_178 = arith.constant 64 : i32
    %281 = tpu.dynamic_rotate %280 by %c64_i32_178 dim 1 : vector<16x128xf32>, i32 -> vector<16x128xf32>
    %c32_i32_179 = arith.constant 32 : i32
    %282 = tpu.dynamic_rotate %280 by %c32_i32_179 dim 1 : vector<16x128xf32>, i32 -> vector<16x128xf32>
    %c96_i32_180 = arith.constant 96 : i32
    %283 = tpu.dynamic_rotate %280 by %c96_i32_180 dim 1 : vector<16x128xf32>, i32 -> vector<16x128xf32>
    %284 = arith.mulf %281, %262 : vector<16x128xf32>
    %285 = arith.mulf %282, %283 : vector<16x128xf32>
    %286 = arith.addf %284, %285 : vector<16x128xf32>
    %287 = math.tanh %286 : vector<16x128xf32>
    %288 = arith.mulf %280, %287 : vector<16x128xf32>
    %289 = arith.truncf %288 : vector<16x128xf32> to vector<16x128xbf16>
    %c2_181 = arith.constant 2 : index
    %c0_182 = arith.constant 0 : index
    %c0_183 = arith.constant 0 : index
    %290 = vector.load %arg9[%c2_181, %c0_182, %c0_183] : memref<8x16x128xbf16, #tpu.memory_space<vmem>>, vector<1x16x128xbf16>
    %291 = vector.shape_cast %290 : vector<1x16x128xbf16> to vector<16x128xbf16>
    %292 = vector.shape_cast %289 : vector<16x128xbf16> to vector<1x16x128xbf16>
    tpu.vector_store %arg9[%c2_181, %c0_182, %c0_183], %292 {strides = array<i32>} : memref<8x16x128xbf16, #tpu.memory_space<vmem>>, vector<1x16x128xbf16>,
    %c3_184 = arith.constant 3 : index
    %c0_185 = arith.constant 0 : index
    %c0_186 = arith.constant 0 : index
    %293 = vector.load %arg10[%c3_184, %c0_185, %c0_186] : memref<8x16x128xf32, #tpu.memory_space<vmem>>, vector<1x16x128xf32>
    %294 = vector.shape_cast %293 : vector<1x16x128xf32> to vector<16x128xf32>
    %c1_187 = arith.constant 1 : index
    %c0_188 = arith.constant 0 : index
    %c0_189 = arith.constant 0 : index
    %295 = vector.load %arg2[%c1_187, %c0_188, %c0_189] : memref<2x128x128xbf16, #tpu.memory_space<vmem>>, vector<1x128x128xbf16>
    %296 = vector.shape_cast %295 : vector<1x128x128xbf16> to vector<128x128xbf16>
    %cst_190 = arith.constant dense<0.000000e+00> : vector<16x128xf32>
    %297 = tpu.matmul %289, %296, %cst_190 {dimension_numbers = #tpu.dot_dimension_numbers<[1], [0], [0], [1], [0, 0, 1, 1], [], []>} : vector<16x128xbf16>, vector<128x128xbf16>, vector<16x128xf32> -> vector<16x128xf32>
    %298 = arith.addf %294, %297 : vector<16x128xf32>
    %299 = math.tanh %298 : vector<16x128xf32>
    %cst_191 = arith.constant 5.000000e-01 : f32
    %300 = vector.broadcast %cst_191 : f32 to vector<16x128xf32>
    %301 = arith.mulf %300, %299 : vector<16x128xf32>
    %cst_192 = arith.constant 5.000000e-01 : f32
    %302 = vector.broadcast %cst_192 : f32 to vector<16x128xf32>
    %303 = arith.addf %301, %302 : vector<16x128xf32>
    %304 = arith.select %2, %299, %303 : vector<16x128xi1>, vector<16x128xf32>
    %c64_i32_193 = arith.constant 64 : i32
    %305 = tpu.dynamic_rotate %304 by %c64_i32_193 dim 1 : vector<16x128xf32>, i32 -> vector<16x128xf32>
    %c32_i32_194 = arith.constant 32 : i32
    %306 = tpu.dynamic_rotate %304 by %c32_i32_194 dim 1 : vector<16x128xf32>, i32 -> vector<16x128xf32>
    %c96_i32_195 = arith.constant 96 : i32
    %307 = tpu.dynamic_rotate %304 by %c96_i32_195 dim 1 : vector<16x128xf32>, i32 -> vector<16x128xf32>
    %308 = arith.mulf %305, %286 : vector<16x128xf32>
    %309 = arith.mulf %306, %307 : vector<16x128xf32>
    %310 = arith.addf %308, %309 : vector<16x128xf32>
    %311 = math.tanh %310 : vector<16x128xf32>
    %312 = arith.mulf %304, %311 : vector<16x128xf32>
    %313 = arith.truncf %312 : vector<16x128xf32> to vector<16x128xbf16>
    %c3_196 = arith.constant 3 : index
    %c0_197 = arith.constant 0 : index
    %c0_198 = arith.constant 0 : index
    %314 = vector.load %arg9[%c3_196, %c0_197, %c0_198] : memref<8x16x128xbf16, #tpu.memory_space<vmem>>, vector<1x16x128xbf16>
    %315 = vector.shape_cast %314 : vector<1x16x128xbf16> to vector<16x128xbf16>
    %316 = vector.shape_cast %313 : vector<16x128xbf16> to vector<1x16x128xbf16>
    tpu.vector_store %arg9[%c3_196, %c0_197, %c0_198], %316 {strides = array<i32>} : memref<8x16x128xbf16, #tpu.memory_space<vmem>>, vector<1x16x128xbf16>,
    %c4_199 = arith.constant 4 : index
    %c0_200 = arith.constant 0 : index
    %c0_201 = arith.constant 0 : index
    %317 = vector.load %arg10[%c4_199, %c0_200, %c0_201] : memref<8x16x128xf32, #tpu.memory_space<vmem>>, vector<1x16x128xf32>
    %318 = vector.shape_cast %317 : vector<1x16x128xf32> to vector<16x128xf32>
    %c1_202 = arith.constant 1 : index
    %c0_203 = arith.constant 0 : index
    %c0_204 = arith.constant 0 : index
    %319 = vector.load %arg2[%c1_202, %c0_203, %c0_204] : memref<2x128x128xbf16, #tpu.memory_space<vmem>>, vector<1x128x128xbf16>
    %320 = vector.shape_cast %319 : vector<1x128x128xbf16> to vector<128x128xbf16>
    %cst_205 = arith.constant dense<0.000000e+00> : vector<16x128xf32>
    %321 = tpu.matmul %313, %320, %cst_205 {dimension_numbers = #tpu.dot_dimension_numbers<[1], [0], [0], [1], [0, 0, 1, 1], [], []>} : vector<16x128xbf16>, vector<128x128xbf16>, vector<16x128xf32> -> vector<16x128xf32>
    %322 = arith.addf %318, %321 : vector<16x128xf32>
    %323 = math.tanh %322 : vector<16x128xf32>
    %cst_206 = arith.constant 5.000000e-01 : f32
    %324 = vector.broadcast %cst_206 : f32 to vector<16x128xf32>
    %325 = arith.mulf %324, %323 : vector<16x128xf32>
    %cst_207 = arith.constant 5.000000e-01 : f32
    %326 = vector.broadcast %cst_207 : f32 to vector<16x128xf32>
    %327 = arith.addf %325, %326 : vector<16x128xf32>
    %328 = arith.select %2, %323, %327 : vector<16x128xi1>, vector<16x128xf32>
    %c64_i32_208 = arith.constant 64 : i32
    %329 = tpu.dynamic_rotate %328 by %c64_i32_208 dim 1 : vector<16x128xf32>, i32 -> vector<16x128xf32>
    %c32_i32_209 = arith.constant 32 : i32
    %330 = tpu.dynamic_rotate %328 by %c32_i32_209 dim 1 : vector<16x128xf32>, i32 -> vector<16x128xf32>
    %c96_i32_210 = arith.constant 96 : i32
    %331 = tpu.dynamic_rotate %328 by %c96_i32_210 dim 1 : vector<16x128xf32>, i32 -> vector<16x128xf32>
    %332 = arith.mulf %329, %310 : vector<16x128xf32>
    %333 = arith.mulf %330, %331 : vector<16x128xf32>
    %334 = arith.addf %332, %333 : vector<16x128xf32>
    %335 = math.tanh %334 : vector<16x128xf32>
    %336 = arith.mulf %328, %335 : vector<16x128xf32>
    %337 = arith.truncf %336 : vector<16x128xf32> to vector<16x128xbf16>
    %c4_211 = arith.constant 4 : index
    %c0_212 = arith.constant 0 : index
    %c0_213 = arith.constant 0 : index
    %338 = vector.load %arg9[%c4_211, %c0_212, %c0_213] : memref<8x16x128xbf16, #tpu.memory_space<vmem>>, vector<1x16x128xbf16>
    %339 = vector.shape_cast %338 : vector<1x16x128xbf16> to vector<16x128xbf16>
    %340 = vector.shape_cast %337 : vector<16x128xbf16> to vector<1x16x128xbf16>
    tpu.vector_store %arg9[%c4_211, %c0_212, %c0_213], %340 {strides = array<i32>} : memref<8x16x128xbf16, #tpu.memory_space<vmem>>, vector<1x16x128xbf16>,
    %c5_214 = arith.constant 5 : index
    %c0_215 = arith.constant 0 : index
    %c0_216 = arith.constant 0 : index
    %341 = vector.load %arg10[%c5_214, %c0_215, %c0_216] : memref<8x16x128xf32, #tpu.memory_space<vmem>>, vector<1x16x128xf32>
    %342 = vector.shape_cast %341 : vector<1x16x128xf32> to vector<16x128xf32>
    %c1_217 = arith.constant 1 : index
    %c0_218 = arith.constant 0 : index
    %c0_219 = arith.constant 0 : index
    %343 = vector.load %arg2[%c1_217, %c0_218, %c0_219] : memref<2x128x128xbf16, #tpu.memory_space<vmem>>, vector<1x128x128xbf16>
    %344 = vector.shape_cast %343 : vector<1x128x128xbf16> to vector<128x128xbf16>
    %cst_220 = arith.constant dense<0.000000e+00> : vector<16x128xf32>
    %345 = tpu.matmul %337, %344, %cst_220 {dimension_numbers = #tpu.dot_dimension_numbers<[1], [0], [0], [1], [0, 0, 1, 1], [], []>} : vector<16x128xbf16>, vector<128x128xbf16>, vector<16x128xf32> -> vector<16x128xf32>
    %346 = arith.addf %342, %345 : vector<16x128xf32>
    %347 = math.tanh %346 : vector<16x128xf32>
    %cst_221 = arith.constant 5.000000e-01 : f32
    %348 = vector.broadcast %cst_221 : f32 to vector<16x128xf32>
    %349 = arith.mulf %348, %347 : vector<16x128xf32>
    %cst_222 = arith.constant 5.000000e-01 : f32
    %350 = vector.broadcast %cst_222 : f32 to vector<16x128xf32>
    %351 = arith.addf %349, %350 : vector<16x128xf32>
    %352 = arith.select %2, %347, %351 : vector<16x128xi1>, vector<16x128xf32>
    %c64_i32_223 = arith.constant 64 : i32
    %353 = tpu.dynamic_rotate %352 by %c64_i32_223 dim 1 : vector<16x128xf32>, i32 -> vector<16x128xf32>
    %c32_i32_224 = arith.constant 32 : i32
    %354 = tpu.dynamic_rotate %352 by %c32_i32_224 dim 1 : vector<16x128xf32>, i32 -> vector<16x128xf32>
    %c96_i32_225 = arith.constant 96 : i32
    %355 = tpu.dynamic_rotate %352 by %c96_i32_225 dim 1 : vector<16x128xf32>, i32 -> vector<16x128xf32>
    %356 = arith.mulf %353, %334 : vector<16x128xf32>
    %357 = arith.mulf %354, %355 : vector<16x128xf32>
    %358 = arith.addf %356, %357 : vector<16x128xf32>
    %359 = math.tanh %358 : vector<16x128xf32>
    %360 = arith.mulf %352, %359 : vector<16x128xf32>
    %361 = arith.truncf %360 : vector<16x128xf32> to vector<16x128xbf16>
    %c5_226 = arith.constant 5 : index
    %c0_227 = arith.constant 0 : index
    %c0_228 = arith.constant 0 : index
    %362 = vector.load %arg9[%c5_226, %c0_227, %c0_228] : memref<8x16x128xbf16, #tpu.memory_space<vmem>>, vector<1x16x128xbf16>
    %363 = vector.shape_cast %362 : vector<1x16x128xbf16> to vector<16x128xbf16>
    %364 = vector.shape_cast %361 : vector<16x128xbf16> to vector<1x16x128xbf16>
    tpu.vector_store %arg9[%c5_226, %c0_227, %c0_228], %364 {strides = array<i32>} : memref<8x16x128xbf16, #tpu.memory_space<vmem>>, vector<1x16x128xbf16>,
    %c6_229 = arith.constant 6 : index
    %c0_230 = arith.constant 0 : index
    %c0_231 = arith.constant 0 : index
    %365 = vector.load %arg10[%c6_229, %c0_230, %c0_231] : memref<8x16x128xf32, #tpu.memory_space<vmem>>, vector<1x16x128xf32>
    %366 = vector.shape_cast %365 : vector<1x16x128xf32> to vector<16x128xf32>
    %c1_232 = arith.constant 1 : index
    %c0_233 = arith.constant 0 : index
    %c0_234 = arith.constant 0 : index
    %367 = vector.load %arg2[%c1_232, %c0_233, %c0_234] : memref<2x128x128xbf16, #tpu.memory_space<vmem>>, vector<1x128x128xbf16>
    %368 = vector.shape_cast %367 : vector<1x128x128xbf16> to vector<128x128xbf16>
    %cst_235 = arith.constant dense<0.000000e+00> : vector<16x128xf32>
    %369 = tpu.matmul %361, %368, %cst_235 {dimension_numbers = #tpu.dot_dimension_numbers<[1], [0], [0], [1], [0, 0, 1, 1], [], []>} : vector<16x128xbf16>, vector<128x128xbf16>, vector<16x128xf32> -> vector<16x128xf32>
    %370 = arith.addf %366, %369 : vector<16x128xf32>
    %371 = math.tanh %370 : vector<16x128xf32>
    %cst_236 = arith.constant 5.000000e-01 : f32
    %372 = vector.broadcast %cst_236 : f32 to vector<16x128xf32>
    %373 = arith.mulf %372, %371 : vector<16x128xf32>
    %cst_237 = arith.constant 5.000000e-01 : f32
    %374 = vector.broadcast %cst_237 : f32 to vector<16x128xf32>
    %375 = arith.addf %373, %374 : vector<16x128xf32>
    %376 = arith.select %2, %371, %375 : vector<16x128xi1>, vector<16x128xf32>
    %c64_i32_238 = arith.constant 64 : i32
    %377 = tpu.dynamic_rotate %376 by %c64_i32_238 dim 1 : vector<16x128xf32>, i32 -> vector<16x128xf32>
    %c32_i32_239 = arith.constant 32 : i32
    %378 = tpu.dynamic_rotate %376 by %c32_i32_239 dim 1 : vector<16x128xf32>, i32 -> vector<16x128xf32>
    %c96_i32_240 = arith.constant 96 : i32
    %379 = tpu.dynamic_rotate %376 by %c96_i32_240 dim 1 : vector<16x128xf32>, i32 -> vector<16x128xf32>
    %380 = arith.mulf %377, %358 : vector<16x128xf32>
    %381 = arith.mulf %378, %379 : vector<16x128xf32>
    %382 = arith.addf %380, %381 : vector<16x128xf32>
    %383 = math.tanh %382 : vector<16x128xf32>
    %384 = arith.mulf %376, %383 : vector<16x128xf32>
    %385 = arith.truncf %384 : vector<16x128xf32> to vector<16x128xbf16>
    %c6_241 = arith.constant 6 : index
    %c0_242 = arith.constant 0 : index
    %c0_243 = arith.constant 0 : index
    %386 = vector.load %arg9[%c6_241, %c0_242, %c0_243] : memref<8x16x128xbf16, #tpu.memory_space<vmem>>, vector<1x16x128xbf16>
    %387 = vector.shape_cast %386 : vector<1x16x128xbf16> to vector<16x128xbf16>
    %388 = vector.shape_cast %385 : vector<16x128xbf16> to vector<1x16x128xbf16>
    tpu.vector_store %arg9[%c6_241, %c0_242, %c0_243], %388 {strides = array<i32>} : memref<8x16x128xbf16, #tpu.memory_space<vmem>>, vector<1x16x128xbf16>,
    %c7_244 = arith.constant 7 : index
    %c0_245 = arith.constant 0 : index
    %c0_246 = arith.constant 0 : index
    %389 = vector.load %arg10[%c7_244, %c0_245, %c0_246] : memref<8x16x128xf32, #tpu.memory_space<vmem>>, vector<1x16x128xf32>
    %390 = vector.shape_cast %389 : vector<1x16x128xf32> to vector<16x128xf32>
    %c1_247 = arith.constant 1 : index
    %c0_248 = arith.constant 0 : index
    %c0_249 = arith.constant 0 : index
    %391 = vector.load %arg2[%c1_247, %c0_248, %c0_249] : memref<2x128x128xbf16, #tpu.memory_space<vmem>>, vector<1x128x128xbf16>
    %392 = vector.shape_cast %391 : vector<1x128x128xbf16> to vector<128x128xbf16>
    %cst_250 = arith.constant dense<0.000000e+00> : vector<16x128xf32>
    %393 = tpu.matmul %385, %392, %cst_250 {dimension_numbers = #tpu.dot_dimension_numbers<[1], [0], [0], [1], [0, 0, 1, 1], [], []>} : vector<16x128xbf16>, vector<128x128xbf16>, vector<16x128xf32> -> vector<16x128xf32>
    %394 = arith.addf %390, %393 : vector<16x128xf32>
    %395 = math.tanh %394 : vector<16x128xf32>
    %cst_251 = arith.constant 5.000000e-01 : f32
    %396 = vector.broadcast %cst_251 : f32 to vector<16x128xf32>
    %397 = arith.mulf %396, %395 : vector<16x128xf32>
    %cst_252 = arith.constant 5.000000e-01 : f32
    %398 = vector.broadcast %cst_252 : f32 to vector<16x128xf32>
    %399 = arith.addf %397, %398 : vector<16x128xf32>
    %400 = arith.select %2, %395, %399 : vector<16x128xi1>, vector<16x128xf32>
    %c64_i32_253 = arith.constant 64 : i32
    %401 = tpu.dynamic_rotate %400 by %c64_i32_253 dim 1 : vector<16x128xf32>, i32 -> vector<16x128xf32>
    %c32_i32_254 = arith.constant 32 : i32
    %402 = tpu.dynamic_rotate %400 by %c32_i32_254 dim 1 : vector<16x128xf32>, i32 -> vector<16x128xf32>
    %c96_i32_255 = arith.constant 96 : i32
    %403 = tpu.dynamic_rotate %400 by %c96_i32_255 dim 1 : vector<16x128xf32>, i32 -> vector<16x128xf32>
    %404 = arith.mulf %401, %382 : vector<16x128xf32>
    %405 = arith.mulf %402, %403 : vector<16x128xf32>
    %406 = arith.addf %404, %405 : vector<16x128xf32>
    %407 = math.tanh %406 : vector<16x128xf32>
    %408 = arith.mulf %400, %407 : vector<16x128xf32>
    %409 = arith.truncf %408 : vector<16x128xf32> to vector<16x128xbf16>
    %c7_256 = arith.constant 7 : index
    %c0_257 = arith.constant 0 : index
    %c0_258 = arith.constant 0 : index
    %410 = vector.load %arg9[%c7_256, %c0_257, %c0_258] : memref<8x16x128xbf16, #tpu.memory_space<vmem>>, vector<1x16x128xbf16>
    %411 = vector.shape_cast %410 : vector<1x16x128xbf16> to vector<16x128xbf16>
    %412 = vector.shape_cast %409 : vector<16x128xbf16> to vector<1x16x128xbf16>
    tpu.vector_store %arg9[%c7_256, %c0_257, %c0_258], %412 {strides = array<i32>} : memref<8x16x128xbf16, #tpu.memory_space<vmem>>, vector<1x16x128xbf16>,
    %c0_259 = arith.constant 0 : index
    %c0_260 = arith.constant 0 : index
    %c0_261 = arith.constant 0 : index
    %413 = vector.load %arg9[%c0_259, %c0_260, %c0_261] : memref<8x16x128xbf16, #tpu.memory_space<vmem>>, vector<8x16x128xbf16>
    %414 = vector.shape_cast %413 : vector<8x16x128xbf16> to vector<128x128xbf16>
    %c0_262 = arith.constant 0 : index
    %c0_263 = arith.constant 0 : index
    %415 = vector.load %arg4[%c0_262, %c0_263] : memref<128x128xbf16, #tpu.memory_space<vmem>>, vector<128x128xbf16>
    %cst_264 = arith.constant dense<0.000000e+00> : vector<128x128xf32>
    %416 = tpu.matmul %415, %414, %cst_264 {dimension_numbers = #tpu.dot_dimension_numbers<[1], [1], [0], [0], [0, 0, 1, 0], [], []>} : vector<128x128xbf16>, vector<128x128xbf16>, vector<128x128xf32> -> vector<128x128xf32>
    %c0_265 = arith.constant 0 : index
    %c0_266 = arith.constant 0 : index
    %417 = vector.load %arg5[%c0_265, %c0_266] : memref<128x1xf32, #tpu.memory_space<vmem>>, vector<128x1xf32>
    %418 = vector.broadcast %417 : vector<128x1xf32> to vector<128x128xf32>
    %419 = arith.addf %416, %418 : vector<128x128xf32>
    %cst_267 = arith.constant dense<0xFF800000> : vector<128xf32>
    %420 = vector.multi_reduction <maximumf>, %419, %cst_267 [0] : vector<128x128xf32> to vector<128xf32>
    %421 = vector.shape_cast %420 : vector<128xf32> to vector<1x128xf32>
    %422 = vector.broadcast %421 : vector<1x128xf32> to vector<128x128xf32>
    %423 = arith.subf %419, %422 : vector<128x128xf32>
    %424 = math.exp %423 : vector<128x128xf32>
    %cst_268 = arith.constant dense<0.000000e+00> : vector<128xf32>
    %425 = vector.multi_reduction <add>, %424, %cst_268 [0] : vector<128x128xf32> to vector<128xf32>
    %426 = vector.shape_cast %425 : vector<128xf32> to vector<1x128xf32>
    %427 = math.log %426 : vector<1x128xf32>
    %428 = arith.addf %421, %427 : vector<1x128xf32>
    %429 = tpu.iota {dimensions = array<i32: 0>} : vector<128x128xi32>
    %c0_269 = arith.constant 0 : index
    %c0_270 = arith.constant 0 : index
    %430 = vector.load %arg6[%c0_269, %c0_270] : memref<1x128xi32, #tpu.memory_space<vmem>>, vector<1x128xi32>
    %431 = vector.broadcast %430 : vector<1x128xi32> to vector<128x128xi32>
    %432 = arith.cmpi eq, %429, %431 : vector<128x128xi32>
    %cst_271 = arith.constant 0.000000e+00 : f32
    %433 = vector.broadcast %cst_271 : f32 to vector<128x128xf32>
    %434 = arith.select %432, %419, %433 : vector<128x128xi1>, vector<128x128xf32>
    %cst_272 = arith.constant dense<0.000000e+00> : vector<128xf32>
    %435 = vector.multi_reduction <add>, %434, %cst_272 [0] : vector<128x128xf32> to vector<128xf32>
    %436 = vector.shape_cast %435 : vector<128xf32> to vector<1x128xf32>
    %437 = arith.subf %428, %436 : vector<1x128xf32>
    %c0_273 = arith.constant 0 : index
    %c0_274 = arith.constant 0 : index
    %438 = vector.load %arg7[%c0_273, %c0_274] : memref<1x128xf32, #tpu.memory_space<vmem>>, vector<1x128xf32>
    %439 = arith.mulf %437, %438 : vector<1x128xf32>
    %c0_275 = arith.constant 0 : index
    %c0_276 = arith.constant 0 : index
    %440 = vector.load %arg8[%c0_275, %c0_276] : memref<1x128xf32, #tpu.memory_space<vmem>>, vector<1x128xf32>
    tpu.vector_store %arg8[%c0_275, %c0_276], %439 {strides = array<i32>} : memref<1x128xf32, #tpu.memory_space<vmem>>, vector<1x128xf32>,
    return
  }
}

</mosaic_0001>

<llo_original>
// kernel: rnn_lm_forward.1
$region0: #{rnn_lm_forward.1}
  #allocation0 [shape = 'u32[]', space=smem, size = 0x4, offset = 0x4, fixed_abs, tag = 'smem constant byte address 0x4 - core index']
  #allocation1 [shape = 'u32[144,128]{1,0:T(1,128)}', space=vmem, size = 0x12000, scoped, tag = 'internal scratch']
  #allocation2 [shape = 'bf16[8,16,128]{2,1,0:T(16,128)(2,1)}', space=vmem, size = 0x8000, scoped, tag = 'scratch operand']
  #allocation3 [shape = 'f32[8,16,128]{2,1,0:T(8,128)}', space=vmem, size = 0x10000, scoped, tag = 'scratch operand']
  %s0 = inlined_call_operand.vmem [shape: bf16[8,16,128], index: 0, kind: input, shape index: {}]
  %s1 = inlined_call_operand.vmem [shape: bf16[2,128,128], index: 1, kind: input, shape index: {}]
  %s2 = inlined_call_operand.vmem [shape: bf16[2,128,128], index: 2, kind: input, shape index: {}]
  %s3 = inlined_call_operand.vmem [shape: f32[2,1,128], index: 3, kind: input, shape index: {}]
  %s4 = inlined_call_operand.vmem [shape: bf16[128,128], index: 4, kind: input, shape index: {}]
  %s5 = inlined_call_operand.vmem [shape: f32[128,1], index: 5, kind: input, shape index: {}]
  %s6 = inlined_call_operand.vmem [shape: s32[1,128], index: 6, kind: input, shape index: {}]
  %s7 = inlined_call_operand.vmem [shape: f32[1,128], index: 7, kind: input, shape index: {}]
  %s8 = inlined_call_operand.vmem [shape: f32[1,128], index: 8, kind: output, shape index: {}]
  %s9 = sld [smem:[#allocation0]]
  $region42: #{rnn_lm_forward.1} parent=0
    _
  %s11 = ssub.s32 1, %s9
  %s12 = scalar_select 0, %s11, %s9
  // Predicated region
  $region2: #{rnn_lm_forward.1} parent=0 // pred_check
    _
  $region3: #{rnn_lm_forward.1} parent=0 // pred_check_branch
    %14 = sbr.rel (0) target = $region5
  $region4: #{rnn_lm_forward.1} parent=0 // pred_region
    _
  $region5: #{rnn_lm_forward.1} parent=0 // pred_fallthru
    _
  // Predicated region
  $region6: #{rnn_lm_forward.1} parent=0 // pred_check
    _
  $region7: #{rnn_lm_forward.1} parent=0 // pred_check_branch
    %16 = sbr.rel (0) target = $region9
  $region8: #{rnn_lm_forward.1} parent=0 // pred_region
    _
  $region9: #{rnn_lm_forward.1} parent=0 // pred_fallthru
    _
  // Predicated region
  $region10: #{rnn_lm_forward.1} parent=0 // pred_check
    _
  $region11: #{rnn_lm_forward.1} parent=0 // pred_check_branch
    %18 = sbr.rel (0) target = $region13
  $region12: #{rnn_lm_forward.1} parent=0 // pred_region
    _
  $region13: #{rnn_lm_forward.1} parent=0 // pred_fallthru
    _
  // Predicated region
  $region14: #{rnn_lm_forward.1} parent=0 // pred_check
    _
  $region15: #{rnn_lm_forward.1} parent=0 // pred_check_branch
    %20 = sbr.rel (0) target = $region17
  $region16: #{rnn_lm_forward.1} parent=0 // pred_region
    _
  $region17: #{rnn_lm_forward.1} parent=0 // pred_fallthru
    _
  // Predicated region
  $region18: #{rnn_lm_forward.1} parent=0 // pred_check
    _
  $region19: #{rnn_lm_forward.1} parent=0 // pred_check_branch
    %22 = sbr.rel (0) target = $region21
  $region20: #{rnn_lm_forward.1} parent=0 // pred_region
    _
  $region21: #{rnn_lm_forward.1} parent=0 // pred_fallthru
    _
  // Predicated region
  $region22: #{rnn_lm_forward.1} parent=0 // pred_check
    _
  $region23: #{rnn_lm_forward.1} parent=0 // pred_check_branch
    %24 = sbr.rel (0) target = $region25
  $region24: #{rnn_lm_forward.1} parent=0 // pred_region
    _
  $region25: #{rnn_lm_forward.1} parent=0 // pred_fallthru
    _
  // Predicated region
  $region26: #{rnn_lm_forward.1} parent=0 // pred_check
    _
  $region27: #{rnn_lm_forward.1} parent=0 // pred_check_branch
    %26 = sbr.rel (0) target = $region29
  $region28: #{rnn_lm_forward.1} parent=0 // pred_region
    _
  $region29: #{rnn_lm_forward.1} parent=0 // pred_fallthru
    _
  // Predicated region
  $region30: #{rnn_lm_forward.1} parent=0 // pred_check
    _
  $region31: #{rnn_lm_forward.1} parent=0 // pred_check_branch
    %28 = sbr.rel (0) target = $region33
  $region32: #{rnn_lm_forward.1} parent=0 // pred_region
    _
  $region33: #{rnn_lm_forward.1} parent=0 // pred_fallthru
    _
  %v30 = vlaneseq
  %v31 = vand.u32 %v30, 127
  %vm32 = vcmp.ge.s32.totalorder %v31, 96
  %v33 = vld [vmem:[%s0] sm:$0xf]
  %v34 = vld [vmem:[%s0 + $0x4] sm:$0xf]
  %v35 = vld [vmem:[%s0 + $0x8] sm:$0xf]
  %v36 = vld [vmem:[%s0 + $0xc] sm:$0xf]
  %v37 = vld [vmem:[%s0 + $0x10] sm:$0xf]
  %v38 = vld [vmem:[%s0 + $0x14] sm:$0xf]
  %v39 = vld [vmem:[%s0 + $0x18] sm:$0xf]
  %v40 = vld [vmem:[%s0 + $0x1c] sm:$0xf]
  %v41 = vld [vmem:[%s0 + $0x20] sm:$0xf]
  %v42 = vld [vmem:[%s0 + $0x24] sm:$0xf]
  %v43 = vld [vmem:[%s0 + $0x28] sm:$0xf]
  %v44 = vld [vmem:[%s0 + $0x2c] sm:$0xf]
  %v45 = vld [vmem:[%s0 + $0x30] sm:$0xf]
  %v46 = vld [vmem:[%s0 + $0x34] sm:$0xf]
  %v47 = vld [vmem:[%s0 + $0x38] sm:$0xf]
  %v48 = vld [vmem:[%s0 + $0x3c] sm:$0xf]
  %v49 = vld [vmem:[%s1] sm:$0xf]
  %v50 = vld [vmem:[%s1 + $0x4] sm:$0xf]
  %v51 = vld [vmem:[%s1 + $0x8] sm:$0xf]
  %v52 = vld [vmem:[%s1 + $0xc] sm:$0xf]
  %v53 = vld [vmem:[%s1 + $0x10] sm:$0xf]
  %v54 = vld [vmem:[%s1 + $0x14] sm:$0xf]
  %v55 = vld [vmem:[%s1 + $0x18] sm:$0xf]
  %v56 = vld [vmem:[%s1 + $0x1c] sm:$0xf]
  %v57 = vld [vmem:[%s1 + $0x20] sm:$0xf]
  %v58 = vld [vmem:[%s1 + $0x24] sm:$0xf]
  %v59 = vld [vmem:[%s1 + $0x28] sm:$0xf]
  %v60 = vld [vmem:[%s1 + $0x2c] sm:$0xf]
  %v61 = vld [vmem:[%s1 + $0x30] sm:$0xf]
  %v62 = vld [vmem:[%s1 + $0x34] sm:$0xf]
  %v63 = vld [vmem:[%s1 + $0x38] sm:$0xf]
  %v64 = vld [vmem:[%s1 + $0x3c] sm:$0xf]
  %v65 = vld [vmem:[%s3] sm:$0x1]
  %v67 = vlaneseq
  %v68 = vshrl.u32 %v67, 7
  %v69 = vsub.s32 0, %v68
  %v70 = vrot.slane %v65, %v69
  %v88 = vunpack.c.l.b16 %v33
  %v89 = vunpack.c.l.b16 %v34
  %v90 = vunpack.c.l.b16 %v35
  %v91 = vunpack.c.l.b16 %v36
  %v92 = vunpack.c.l.b16 %v37
  %v93 = vunpack.c.l.b16 %v38
  %v94 = vunpack.c.l.b16 %v39
  %v95 = vunpack.c.l.b16 %v40
  %v96 = vunpack.c.l.b16 %v41
  %v97 = vunpack.c.l.b16 %v42
  %v98 = vunpack.c.l.b16 %v43
  %v99 = vunpack.c.l.b16 %v44
  %v100 = vunpack.c.l.b16 %v45
  %v101 = vunpack.c.l.b16 %v46
  %v102 = vunpack.c.l.b16 %v47
  %v103 = vunpack.c.l.b16 %v48
  %v104 = vpack.c.b16 %v89, %v88
  %v105 = vpack.c.b16 %v91, %v90
  %v106 = vpack.c.b16 %v93, %v92
  %v107 = vpack.c.b16 %v95, %v94
  %v108 = vpack.c.b16 %v97, %v96
  %v109 = vpack.c.b16 %v99, %v98
  %v110 = vpack.c.b16 %v101, %v100
  %v111 = vpack.c.b16 %v103, %v102
  %v136 = vunpack.c.l.b16 %v49
  %v137 = vunpack.c.l.b16 %v50
  %v138 = vunpack.c.l.b16 %v51
  %v139 = vunpack.c.l.b16 %v52
  %v140 = vunpack.c.l.b16 %v53
  %v141 = vunpack.c.l.b16 %v54
  %v142 = vunpack.c.l.b16 %v55
  %v143 = vunpack.c.l.b16 %v56
  %v144 = vunpack.c.l.b16 %v57
  %v145 = vunpack.c.l.b16 %v58
  %v146 = vunpack.c.l.b16 %v59
  %v147 = vunpack.c.l.b16 %v60
  %v148 = vunpack.c.l.b16 %v61
  %v149 = vunpack.c.l.b16 %v62
  %v150 = vunpack.c.l.b16 %v63
  %v151 = vunpack.c.l.b16 %v64
  %v152 = vpack.c.b16 %v137, %v136
  %v153 = vpack.c.b16 %v139, %v138
  %v154 = vpack.c.b16 %v141, %v140
  %v155 = vpack.c.b16 %v143, %v142
  %v156 = vpack.c.b16 %v145, %v144
  %v157 = vpack.c.b16 %v147, %v146
  %v158 = vpack.c.b16 %v149, %v148
  %v159 = vpack.c.b16 %v151, %v150
  %168 = vmatprep.subr.bf16.mxu0 0
  %169 = vmatpush1.bf16.msra.mxu0 %v152
  %170 = vmatprep.subr.bf16.mxu0 0
  %171 = vmatpush1.bf16.msra.mxu0 %v153
  %172 = vmatprep.subr.bf16.mxu0 0
  %173 = vmatpush1.bf16.msra.mxu0 %v154
  %174 = vmatprep.subr.bf16.mxu0 0
  %175 = vmatpush1.bf16.msra.mxu0 %v155
  %176 = vmatprep.subr.bf16.mxu0 0
  %177 = vmatpush1.bf16.msra.mxu0 %v156
  %178 = vmatprep.subr.bf16.mxu0 0
  %179 = vmatpush1.bf16.msra.mxu0 %v157
  %180 = vmatprep.subr.bf16.mxu0 0
  %181 = vmatpush1.bf16.msra.mxu0 %v158
  %182 = vmatprep.subr.bf16.mxu0 0
  %183 = vmatpush1.bf16.msra.mxu0 %v159
  %184 = vmatprep.subr.bf16.mxu0 0
  %185 = vmatpush1.bf16.msra.mxu0 0
  %186 = vmatprep.subr.bf16.mxu0 0
  %187 = vmatpush1.bf16.msra.mxu0 0
  %188 = vmatprep.subr.bf16.mxu0 0
  %189 = vmatpush1.bf16.msra.mxu0 0
  %190 = vmatprep.subr.bf16.mxu0 0
  %191 = vmatpush1.bf16.msra.mxu0 0
  %192 = vmatprep.subr.bf16.mxu0 0
  %193 = vmatpush1.bf16.msra.mxu0 0
  %194 = vmatprep.subr.bf16.mxu0 0
  %195 = vmatpush1.bf16.msra.mxu0 0
  %196 = vmatprep.subr.bf16.mxu0 0
  %197 = vmatpush1.bf16.msra.mxu0 0
  %198 = vmatprep.subr.bf16.mxu0 0
  %199 = vmatpush1.bf16.msra.mxu0 0
  %200 = vmatprep.mubr.bf16.mxu0 0
  %201 = vmatmul.mubr.bf16.gmra.mrb[0].mxu0 %v104
  %v202 = vpop.f32.mrb[0].mxu0
  %v203 = vadd.f32 %v70, %v202
  %v204 = vpop.f32.mrb[0].mxu0
  %v205 = vpop.f32.mrb[0].mxu0
  %v206 = vadd.f32 %v70, %v205
  %v207 = vpop.f32.mrb[0].mxu0
  %208 = vmatprep.mubr.bf16.mxu0 0
  %209 = vmatmul.mubr.bf16.gmra.mrb[0].mxu0 %v105
  %v210 = vpop.f32.mrb[0].mxu0
  %v211 = vadd.f32 %v70, %v210
  %v212 = vpop.f32.mrb[0].mxu0
  %v213 = vpop.f32.mrb[0].mxu0
  %v214 = vadd.f32 %v70, %v213
  %v215 = vpop.f32.mrb[0].mxu0
  %216 = vmatprep.mubr.bf16.mxu0 0
  %217 = vmatmul.mubr.bf16.gmra.mrb[0].mxu0 %v106
  %v218 = vpop.f32.mrb[0].mxu0
  %v219 = vadd.f32 %v70, %v218
  %v220 = vpop.f32.mrb[0].mxu0
  %v221 = vpop.f32.mrb[0].mxu0
  %v222 = vadd.f32 %v70, %v221
  %v223 = vpop.f32.mrb[0].mxu0
  %224 = vmatprep.mubr.bf16.mxu0 0
  %225 = vmatmul.mubr.bf16.gmra.mrb[0].mxu0 %v107
  %v226 = vpop.f32.mrb[0].mxu0
  %v227 = vadd.f32 %v70, %v226
  %v228 = vpop.f32.mrb[0].mxu0
  %v229 = vpop.f32.mrb[0].mxu0
  %v230 = vadd.f32 %v70, %v229
  %v231 = vpop.f32.mrb[0].mxu0
  %232 = vmatprep.mubr.bf16.mxu0 0
  %233 = vmatmul.mubr.bf16.gmra.mrb[0].mxu0 %v108
  %v234 = vpop.f32.mrb[0].mxu0
  %v235 = vadd.f32 %v70, %v234
  %v236 = vpop.f32.mrb[0].mxu0
  %v237 = vpop.f32.mrb[0].mxu0
  %v238 = vadd.f32 %v70, %v237
  %v239 = vpop.f32.mrb[0].mxu0
  %240 = vmatprep.mubr.bf16.mxu0 0
  %241 = vmatmul.mubr.bf16.gmra.mrb[0].mxu0 %v109
  %v242 = vpop.f32.mrb[0].mxu0
  %v243 = vadd.f32 %v70, %v242
  %v244 = vpop.f32.mrb[0].mxu0
  %v245 = vpop.f32.mrb[0].mxu0
  %v246 = vadd.f32 %v70, %v245
  %v247 = vpop.f32.mrb[0].mxu0
  %248 = vmatprep.mubr.bf16.mxu0 0
  %249 = vmatmul.mubr.bf16.gmra.mrb[0].mxu0 %v110
  %v250 = vpop.f32.mrb[0].mxu0
  %v251 = vadd.f32 %v70, %v250
  %v252 = vpop.f32.mrb[0].mxu0
  %v253 = vpop.f32.mrb[0].mxu0
  %v254 = vadd.f32 %v70, %v253
  %v255 = vpop.f32.mrb[0].mxu0
  %256 = vmatprep.mubr.bf16.mxu0 0
  %257 = vmatmul.mubr.bf16.gmra.mrb[0].mxu0 %v111
  %v258 = vpop.f32.mrb[0].mxu0
  %v259 = vadd.f32 %v70, %v258
  %v260 = vpop.f32.mrb[0].mxu0
  %v261 = vpop.f32.mrb[0].mxu0
  %v262 = vadd.f32 %v70, %v261
  %v263 = vpop.f32.mrb[0].mxu0
  %264 = vdwg.mxu0
  %265 = vst [vmem:[#allocation3] sm:$0xff] %v203
  %266 = vst [vmem:[#allocation3 + $0x8] sm:$0xff] %v206
  %267 = vst [vmem:[#allocation3 + $0x10] sm:$0xff] %v211
  %268 = vst [vmem:[#allocation3 + $0x18] sm:$0xff] %v214
  %269 = vst [vmem:[#allocation3 + $0x20] sm:$0xff] %v219
  %270 = vst [vmem:[#allocation3 + $0x28] sm:$0xff] %v222
  %271 = vst [vmem:[#allocation3 + $0x30] sm:$0xff] %v227
  %272 = vst [vmem:[#allocation3 + $0x38] sm:$0xff] %v230
  %273 = vst [vmem:[#allocation3 + $0x40] sm:$0xff] %v235
  %274 = vst [vmem:[#allocation3 + $0x48] sm:$0xff] %v238
  %275 = vst [vmem:[#allocation3 + $0x50] sm:$0xff] %v243
  %276 = vst [vmem:[#allocation3 + $0x58] sm:$0xff] %v246
  %277 = vst [vmem:[#allocation3 + $0x60] sm:$0xff] %v251
  %278 = vst [vmem:[#allocation3 + $0x68] sm:$0xff] %v254
  %279 = vst [vmem:[#allocation3 + $0x70] sm:$0xff] %v259
  %280 = vst [vmem:[#allocation3 + $0x78] sm:$0xff] %v262
  %v281 = vld [vmem:[#allocation3] sm:$0xff]
  %v282 = vld [vmem:[#allocation3 + $0x8] sm:$0xff]
  %v283 = vld [vmem:[%s2] sm:$0xf]
  %v284 = vld [vmem:[%s2 + $0x4] sm:$0xf]
  %v285 = vld [vmem:[%s2 + $0x8] sm:$0xf]
  %v286 = vld [vmem:[%s2 + $0xc] sm:$0xf]
  %v287 = vld [vmem:[%s2 + $0x10] sm:$0xf]
  %v288 = vld [vmem:[%s2 + $0x14] sm:$0xf]
  %v289 = vld [vmem:[%s2 + $0x18] sm:$0xf]
  %v290 = vld [vmem:[%s2 + $0x1c] sm:$0xf]
  %v291 = vld [vmem:[%s2 + $0x20] sm:$0xf]
  %v292 = vld [vmem:[%s2 + $0x24] sm:$0xf]
  %v293 = vld [vmem:[%s2 + $0x28] sm:$0xf]
  %v294 = vld [vmem:[%s2 + $0x2c] sm:$0xf]
  %v295 = vld [vmem:[%s2 + $0x30] sm:$0xf]
  %v296 = vld [vmem:[%s2 + $0x34] sm:$0xf]
  %v297 = vld [vmem:[%s2 + $0x38] sm:$0xf]
  %v298 = vld [vmem:[%s2 + $0x3c] sm:$0xf]
  %v315 = vunpack.c.l.b16 %v283
  %v316 = vunpack.c.l.b16 %v284
  %v317 = vunpack.c.l.b16 %v285
  %v318 = vunpack.c.l.b16 %v286
  %v319 = vunpack.c.l.b16 %v287
  %v320 = vunpack.c.l.b16 %v288
  %v321 = vunpack.c.l.b16 %v289
  %v322 = vunpack.c.l.b16 %v290
  %v323 = vunpack.c.l.b16 %v291
  %v324 = vunpack.c.l.b16 %v292
  %v325 = vunpack.c.l.b16 %v293
  %v326 = vunpack.c.l.b16 %v294
  %v327 = vunpack.c.l.b16 %v295
  %v328 = vunpack.c.l.b16 %v296
  %v329 = vunpack.c.l.b16 %v297
  %v330 = vunpack.c.l.b16 %v298
  %v331 = vpack.c.b16 %v316, %v315
  %v332 = vpack.c.b16 %v318, %v317
  %v333 = vpack.c.b16 %v320, %v319
  %v334 = vpack.c.b16 %v322, %v321
  %v335 = vpack.c.b16 %v324, %v323
  %v336 = vpack.c.b16 %v326, %v325
  %v337 = vpack.c.b16 %v328, %v327
  %v338 = vpack.c.b16 %v330, %v329
  %347 = vmatprep.subr.bf16.mxu0 0
  %348 = vmatpush1.bf16.msra.mxu0 %v331
  %349 = vmatprep.subr.bf16.mxu0 0
  %350 = vmatpush1.bf16.msra.mxu0 %v332
  %351 = vmatprep.subr.bf16.mxu0 0
  %352 = vmatpush1.bf16.msra.mxu0 %v333
  %353 = vmatprep.subr.bf16.mxu0 0
  %354 = vmatpush1.bf16.msra.mxu0 %v334
  %355 = vmatprep.subr.bf16.mxu0 0
  %356 = vmatpush1.bf16.msra.mxu0 %v335
  %357 = vmatprep.subr.bf16.mxu0 0
  %358 = vmatpush1.bf16.msra.mxu0 %v336
  %359 = vmatprep.subr.bf16.mxu0 0
  %360 = vmatpush1.bf16.msra.mxu0 %v337
  %361 = vmatprep.subr.bf16.mxu0 0
  %362 = vmatpush1.bf16.msra.mxu0 %v338
  %363 = vmatprep.subr.bf16.mxu0 0
  %364 = vmatpush1.bf16.msra.mxu0 0
  %365 = vmatprep.subr.bf16.mxu0 0
  %366 = vmatpush1.bf16.msra.mxu0 0
  %367 = vmatprep.subr.bf16.mxu0 0
  %368 = vmatpush1.bf16.msra.mxu0 0
  %369 = vmatprep.subr.bf16.mxu0 0
  %370 = vmatpush1.bf16.msra.mxu0 0
  %371 = vmatprep.subr.bf16.mxu0 0
  %372 = vmatpush1.bf16.msra.mxu0 0
  %373 = vmatprep.subr.bf16.mxu0 0
  %374 = vmatpush1.bf16.msra.mxu0 0
  %375 = vmatprep.subr.bf16.mxu0 0
  %376 = vmatpush1.bf16.msra.mxu0 0
  %377 = vmatprep.subr.bf16.mxu0 0
  %378 = vmatpush1.bf16.msra.mxu0 0
  %379 = vmatprep.mubr.bf16.mxu0 0
  %380 = vmatmul.mubr.bf16.gmra.mrb[0].mxu0 0
  %v381 = vpop.f32.mrb[0].mxu0
  %v382 = vadd.f32 0.0, %v381
  %v383 = vpop.f32.mrb[0].mxu0
  %v384 = vpop.f32.mrb[0].mxu0
  %v385 = vadd.f32 0.0, %v384
  %v386 = vpop.f32.mrb[0].mxu0
  %387 = vdwg.mxu0
  %v388 = vadd.f32 %v281, %v382
  %v389 = vadd.f32 %v282, %v385
  %v390 = vtanh.pop %v388
  %v391 = vtanh.pop %v389
  %v392 = vmul.f32 %v390, 0.5
  %v393 = vmul.f32 %v391, 0.5
  %v394 = vadd.f32 %v392, 0.5
  %v395 = vadd.f32 %v393, 0.5
  %v396 = vsel %vm32, %v390, %v394
  %v397 = vsel %vm32, %v391, %v395
  %398 = vrot.lane.b32.xlu0 %v396, 64
  %v399 = vpop.permute.xlu0 %398
  %400 = vrot.lane.b32.xlu0 %v397, 64
  %v401 = vpop.permute.xlu0 %400
  %402 = vrot.lane.b32.xlu0 %v396, 32
  %v403 = vpop.permute.xlu0 %402
  %404 = vrot.lane.b32.xlu0 %v397, 32
  %v405 = vpop.permute.xlu0 %404
  %406 = vrot.lane.b32.xlu0 %v396, 96
  %v407 = vpop.permute.xlu0 %406
  %408 = vrot.lane.b32.xlu0 %v397, 96
  %v409 = vpop.permute.xlu0 %408
  %v410 = vmul.f32 %v399, 0.0
  %v411 = vmul.f32 %v401, 0.0
  %v412 = vmul.f32 %v403, %v407
  %v413 = vmul.f32 %v405, %v409
  %v414 = vadd.f32 %v410, %v412
  %v415 = vadd.f32 %v411, %v413
  %v416 = vtanh.pop %v414
  %v417 = vtanh.pop %v415
  %v418 = vmul.f32 %v396, %v416
  %v419 = vmul.f32 %v397, %v417
  %v420 = vpack.c.bf16 %v419, %v418
  %421 = vst [vmem:[#allocation2] sm:$0xff] %v420
  %s422 = scalar_lea.vmem [#allocation3], 16
  %v423 = vld [vmem:[%s422] sm:$0xff]
  %v424 = vld [vmem:[%s422 + $0x8] sm:$0xff]
  %v425 = vld [vmem:[%s2] sm:$0xf]
  %v426 = vld [vmem:[%s2 + $0x4] sm:$0xf]
  %v427 = vld [vmem:[%s2 + $0x8] sm:$0xf]
  %v428 = vld [vmem:[%s2 + $0xc] sm:$0xf]
  %v429 = vld [vmem:[%s2 + $0x10] sm:$0xf]
  %v430 = vld [vmem:[%s2 + $0x14] sm:$0xf]
  %v431 = vld [vmem:[%s2 + $0x18] sm:$0xf]
  %v432 = vld [vmem:[%s2 + $0x1c] sm:$0xf]
  %v433 = vld [vmem:[%s2 + $0x20] sm:$0xf]
  %v434 = vld [vmem:[%s2 + $0x24] sm:$0xf]
  %v435 = vld [vmem:[%s2 + $0x28] sm:$0xf]
  %v436 = vld [vmem:[%s2 + $0x2c] sm:$0xf]
  %v437 = vld [vmem:[%s2 + $0x30] sm:$0xf]
  %v438 = vld [vmem:[%s2 + $0x34] sm:$0xf]
  %v439 = vld [vmem:[%s2 + $0x38] sm:$0xf]
  %v440 = vld [vmem:[%s2 + $0x3c] sm:$0xf]
  %v457 = vunpack.c.l.b16 %v425
  %v458 = vunpack.c.l.b16 %v426
  %v459 = vunpack.c.l.b16 %v427
  %v460 = vunpack.c.l.b16 %v428
  %v461 = vunpack.c.l.b16 %v429
  %v462 = vunpack.c.l.b16 %v430
  %v463 = vunpack.c.l.b16 %v431
  %v464 = vunpack.c.l.b16 %v432
  %v465 = vunpack.c.l.b16 %v433
  %v466 = vunpack.c.l.b16 %v434
  %v467 = vunpack.c.l.b16 %v435
  %v468 = vunpack.c.l.b16 %v436
  %v469 = vunpack.c.l.b16 %v437
  %v470 = vunpack.c.l.b16 %v438
  %v471 = vunpack.c.l.b16 %v439
  %v472 = vunpack.c.l.b16 %v440
  %v473 = vpack.c.b16 %v458, %v457
  %v474 = vpack.c.b16 %v460, %v459
  %v475 = vpack.c.b16 %v462, %v461
  %v476 = vpack.c.b16 %v464, %v463
  %v477 = vpack.c.b16 %v466, %v465
  %v478 = vpack.c.b16 %v468, %v467
  %v479 = vpack.c.b16 %v470, %v469
  %v480 = vpack.c.b16 %v472, %v471
  %489 = vmatprep.subr.bf16.mxu0 0
  %490 = vmatpush1.bf16.msra.mxu0 %v473
  %491 = vmatprep.subr.bf16.mxu0 0
  %492 = vmatpush1.bf16.msra.mxu0 %v474
  %493 = vmatprep.subr.bf16.mxu0 0
  %494 = vmatpush1.bf16.msra.mxu0 %v475
  %495 = vmatprep.subr.bf16.mxu0 0
  %496 = vmatpush1.bf16.msra.mxu0 %v476
  %497 = vmatprep.subr.bf16.mxu0 0
  %498 = vmatpush1.bf16.msra.mxu0 %v477
  %499 = vmatprep.subr.bf16.mxu0 0
  %500 = vmatpush1.bf16.msra.mxu0 %v478
  %501 = vmatprep.subr.bf16.mxu0 0
  %502 = vmatpush1.bf16.msra.mxu0 %v479
  %503 = vmatprep.subr.bf16.mxu0 0
  %504 = vmatpush1.bf16.msra.mxu0 %v480
  %505 = vmatprep.subr.bf16.mxu0 0
  %506 = vmatpush1.bf16.msra.mxu0 0
  %507 = vmatprep.subr.bf16.mxu0 0
  %508 = vmatpush1.bf16.msra.mxu0 0
  %509 = vmatprep.subr.bf16.mxu0 0
  %510 = vmatpush1.bf16.msra.mxu0 0
  %511 = vmatprep.subr.bf16.mxu0 0
  %512 = vmatpush1.bf16.msra.mxu0 0
  %513 = vmatprep.subr.bf16.mxu0 0
  %514 = vmatpush1.bf16.msra.mxu0 0
  %515 = vmatprep.subr.bf16.mxu0 0
  %516 = vmatpush1.bf16.msra.mxu0 0
  %517 = vmatprep.subr.bf16.mxu0 0
  %518 = vmatpush1.bf16.msra.mxu0 0
  %519 = vmatprep.subr.bf16.mxu0 0
  %520 = vmatpush1.bf16.msra.mxu0 0
  %521 = vmatprep.mubr.bf16.mxu0 0
  %522 = vmatmul.mubr.bf16.gmra.mrb[0].mxu0 %v420
  %v523 = vpop.f32.mrb[0].mxu0
  %v524 = vadd.f32 0.0, %v523
  %v525 = vpop.f32.mrb[0].mxu0
  %v526 = vpop.f32.mrb[0].mxu0
  %v527 = vadd.f32 0.0, %v526
  %v528 = vpop.f32.mrb[0].mxu0
  %529 = vdwg.mxu0
  %v530 = vadd.f32 %v423, %v524
  %v531 = vadd.f32 %v424, %v527
  %v532 = vtanh.pop %v530
  %v533 = vtanh.pop %v531
  %v534 = vmul.f32 %v532, 0.5
  %v535 = vmul.f32 %v533, 0.5
  %v536 = vadd.f32 %v534, 0.5
  %v537 = vadd.f32 %v535, 0.5
  %v538 = vsel %vm32, %v532, %v536
  %v539 = vsel %vm32, %v533, %v537
  %540 = vrot.lane.b32.xlu0 %v538, 64
  %v541 = vpop.permute.xlu0 %540
  %542 = vrot.lane.b32.xlu0 %v539, 64
  %v543 = vpop.permute.xlu0 %542
  %544 = vrot.lane.b32.xlu0 %v538, 32
  %v545 = vpop.permute.xlu0 %544
  %546 = vrot.lane.b32.xlu0 %v539, 32
  %v547 = vpop.permute.xlu0 %546
  %548 = vrot.lane.b32.xlu0 %v538, 96
  %v549 = vpop.permute.xlu0 %548
  %550 = vrot.lane.b32.xlu0 %v539, 96
  %v551 = vpop.permute.xlu0 %550
  %v552 = vmul.f32 %v541, %v414
  %v553 = vmul.f32 %v543, %v415
  %v554 = vmul.f32 %v545, %v549
  %v555 = vmul.f32 %v547, %v551
  %v556 = vadd.f32 %v552, %v554
  %v557 = vadd.f32 %v553, %v555
  %v558 = vtanh.pop %v556
  %v559 = vtanh.pop %v557
  %v560 = vmul.f32 %v538, %v558
  %v561 = vmul.f32 %v539, %v559
  %v562 = vpack.c.bf16 %v561, %v560
  %s563 = scalar_lea.vmem [#allocation2], 8
  %564 = vst [vmem:[%s563] sm:$0xff] %v562
  %s565 = scalar_lea.vmem [#allocation3], 32
  %v566 = vld [vmem:[%s565] sm:$0xff]
  %v567 = vld [vmem:[%s565 + $0x8] sm:$0xff]
  %v568 = vld [vmem:[%s2] sm:$0xf]
  %v569 = vld [vmem:[%s2 + $0x4] sm:$0xf]
  %v570 = vld [vmem:[%s2 + $0x8] sm:$0xf]
  %v571 = vld [vmem:[%s2 + $0xc] sm:$0xf]
  %v572 = vld [vmem:[%s2 + $0x10] sm:$0xf]
  %v573 = vld [vmem:[%s2 + $0x14] sm:$0xf]
  %v574 = vld [vmem:[%s2 + $0x18] sm:$0xf]
  %v575 = vld [vmem:[%s2 + $0x1c] sm:$0xf]
  %v576 = vld [vmem:[%s2 + $0x20] sm:$0xf]
  %v577 = vld [vmem:[%s2 + $0x24] sm:$0xf]
  %v578 = vld [vmem:[%s2 + $0x28] sm:$0xf]
  %v579 = vld [vmem:[%s2 + $0x2c] sm:$0xf]
  %v580 = vld [vmem:[%s2 + $0x30] sm:$0xf]
  %v581 = vld [vmem:[%s2 + $0x34] sm:$0xf]
  %v582 = vld [vmem:[%s2 + $0x38] sm:$0xf]
  %v583 = vld [vmem:[%s2 + $0x3c] sm:$0xf]
  %v600 = vunpack.c.l.b16 %v568
  %v601 = vunpack.c.l.b16 %v569
  %v602 = vunpack.c.l.b16 %v570
  %v603 = vunpack.c.l.b16 %v571
  %v604 = vunpack.c.l.b16 %v572
  %v605 = vunpack.c.l.b16 %v573
  %v606 = vunpack.c.l.b16 %v574
  %v607 = vunpack.c.l.b16 %v575
  %v608 = vunpack.c.l.b16 %v576
  %v609 = vunpack.c.l.b16 %v577
  %v610 = vunpack.c.l.b16 %v578
  %v611 = vunpack.c.l.b16 %v579
  %v612 = vunpack.c.l.b16 %v580
  %v613 = vunpack.c.l.b16 %v581
  %v614 = vunpack.c.l.b16 %v582
  %v615 = vunpack.c.l.b16 %v583
  %v616 = vpack.c.b16 %v601, %v600
  %v617 = vpack.c.b16 %v603, %v602
  %v618 = vpack.c.b16 %v605, %v604
  %v619 = vpack.c.b16 %v607, %v606
  %v620 = vpack.c.b16 %v609, %v608
  %v621 = vpack.c.b16 %v611, %v610
  %v622 = vpack.c.b16 %v613, %v612
  %v623 = vpack.c.b16 %v615, %v614
  %632 = vmatprep.subr.bf16.mxu0 0
  %633 = vmatpush1.bf16.msra.mxu0 %v616
  %634 = vmatprep.subr.bf16.mxu0 0
  %635 = vmatpush1.bf16.msra.mxu0 %v617
  %636 = vmatprep.subr.bf16.mxu0 0
  %637 = vmatpush1.bf16.msra.mxu0 %v618
  %638 = vmatprep.subr.bf16.mxu0 0
  %639 = vmatpush1.bf16.msra.mxu0 %v619
  %640 = vmatprep.subr.bf16.mxu0 0
  %641 = vmatpush1.bf16.msra.mxu0 %v620
  %642 = vmatprep.subr.bf16.mxu0 0
  %643 = vmatpush1.bf16.msra.mxu0 %v621
  %644 = vmatprep.subr.bf16.mxu0 0
  %645 = vmatpush1.bf16.msra.mxu0 %v622
  %646 = vmatprep.subr.bf16.mxu0 0
  %647 = vmatpush1.bf16.msra.mxu0 %v623
  %648 = vmatprep.subr.bf16.mxu0 0
  %649 = vmatpush1.bf16.msra.mxu0 0
  %650 = vmatprep.subr.bf16.mxu0 0
  %651 = vmatpush1.bf16.msra.mxu0 0
  %652 = vmatprep.subr.bf16.mxu0 0
  %653 = vmatpush1.bf16.msra.mxu0 0
  %654 = vmatprep.subr.bf16.mxu0 0
  %655 = vmatpush1.bf16.msra.mxu0 0
  %656 = vmatprep.subr.bf16.mxu0 0
  %657 = vmatpush1.bf16.msra.mxu0 0
  %658 = vmatprep.subr.bf16.mxu0 0
  %659 = vmatpush1.bf16.msra.mxu0 0
  %660 = vmatprep.subr.bf16.mxu0 0
  %661 = vmatpush1.bf16.msra.mxu0 0
  %662 = vmatprep.subr.bf16.mxu0 0
  %663 = vmatpush1.bf16.msra.mxu0 0
  %664 = vmatprep.mubr.bf16.mxu0 0
  %665 = vmatmul.mubr.bf16.gmra.mrb[0].mxu0 %v562
  %v666 = vpop.f32.mrb[0].mxu0
  %v667 = vadd.f32 0.0, %v666
  %v668 = vpop.f32.mrb[0].mxu0
  %v669 = vpop.f32.mrb[0].mxu0
  %v670 = vadd.f32 0.0, %v669
  %v671 = vpop.f32.mrb[0].mxu0
  %672 = vdwg.mxu0
  %v673 = vadd.f32 %v566, %v667
  %v674 = vadd.f32 %v567, %v670
  %v675 = vtanh.pop %v673
  %v676 = vtanh.pop %v674
  %v677 = vmul.f32 %v675, 0.5
  %v678 = vmul.f32 %v676, 0.5
  %v679 = vadd.f32 %v677, 0.5
  %v680 = vadd.f32 %v678, 0.5
  %v681 = vsel %vm32, %v675, %v679
  %v682 = vsel %vm32, %v676, %v680
  %683 = vrot.lane.b32.xlu0 %v681, 64
  %v684 = vpop.permute.xlu0 %683
  %685 = vrot.lane.b32.xlu0 %v682, 64
  %v686 = vpop.permute.xlu0 %685
  %687 = vrot.lane.b32.xlu0 %v681, 32
  %v688 = vpop.permute.xlu0 %687
  %689 = vrot.lane.b32.xlu0 %v682, 32
  %v690 = vpop.permute.xlu0 %689
  %691 = vrot.lane.b32.xlu0 %v681, 96
  %v692 = vpop.permute.xlu0 %691
  %693 = vrot.lane.b32.xlu0 %v682, 96
  %v694 = vpop.permute.xlu0 %693
  %v695 = vmul.f32 %v684, %v556
  %v696 = vmul.f32 %v686, %v557
  %v697 = vmul.f32 %v688, %v692
  %v698 = vmul.f32 %v690, %v694
  %v699 = vadd.f32 %v695, %v697
  %v700 = vadd.f32 %v696, %v698
  %v701 = vtanh.pop %v699
  %v702 = vtanh.pop %v700
  %v703 = vmul.f32 %v681, %v701
  %v704 = vmul.f32 %v682, %v702
  %v705 = vpack.c.bf16 %v704, %v703
  %s706 = scalar_lea.vmem [#allocation2], 16
  %707 = vst [vmem:[%s706] sm:$0xff] %v705
  %s708 = scalar_lea.vmem [#allocation3], 48
  %v709 = vld [vmem:[%s708] sm:$0xff]
  %v710 = vld [vmem:[%s708 + $0x8] sm:$0xff]
  %v711 = vld [vmem:[%s2] sm:$0xf]
  %v712 = vld [vmem:[%s2 + $0x4] sm:$0xf]
  %v713 = vld [vmem:[%s2 + $0x8] sm:$0xf]
  %v714 = vld [vmem:[%s2 + $0xc] sm:$0xf]
  %v715 = vld [vmem:[%s2 + $0x10] sm:$0xf]
  %v716 = vld [vmem:[%s2 + $0x14] sm:$0xf]
  %v717 = vld [vmem:[%s2 + $0x18] sm:$0xf]
  %v718 = vld [vmem:[%s2 + $0x1c] sm:$0xf]
  %v719 = vld [vmem:[%s2 + $0x20] sm:$0xf]
  %v720 = vld [vmem:[%s2 + $0x24] sm:$0xf]
  %v721 = vld [vmem:[%s2 + $0x28] sm:$0xf]
  %v722 = vld [vmem:[%s2 + $0x2c] sm:$0xf]
  %v723 = vld [vmem:[%s2 + $0x30] sm:$0xf]
  %v724 = vld [vmem:[%s2 + $0x34] sm:$0xf]
  %v725 = vld [vmem:[%s2 + $0x38] sm:$0xf]
  %v726 = vld [vmem:[%s2 + $0x3c] sm:$0xf]
  %v743 = vunpack.c.l.b16 %v711
  %v744 = vunpack.c.l.b16 %v712
  %v745 = vunpack.c.l.b16 %v713
  %v746 = vunpack.c.l.b16 %v714
  %v747 = vunpack.c.l.b16 %v715
  %v748 = vunpack.c.l.b16 %v716
  %v749 = vunpack.c.l.b16 %v717
  %v750 = vunpack.c.l.b16 %v718
  %v751 = vunpack.c.l.b16 %v719
  %v752 = vunpack.c.l.b16 %v720
  %v753 = vunpack.c.l.b16 %v721
  %v754 = vunpack.c.l.b16 %v722
  %v755 = vunpack.c.l.b16 %v723
  %v756 = vunpack.c.l.b16 %v724
  %v757 = vunpack.c.l.b16 %v725
  %v758 = vunpack.c.l.b16 %v726
  %v759 = vpack.c.b16 %v744, %v743
  %v760 = vpack.c.b16 %v746, %v745
  %v761 = vpack.c.b16 %v748, %v747
  %v762 = vpack.c.b16 %v750, %v749
  %v763 = vpack.c.b16 %v752, %v751
  %v764 = vpack.c.b16 %v754, %v753
  %v765 = vpack.c.b16 %v756, %v755
  %v766 = vpack.c.b16 %v758, %v757
  %775 = vmatprep.subr.bf16.mxu0 0
  %776 = vmatpush1.bf16.msra.mxu0 %v759
  %777 = vmatprep.subr.bf16.mxu0 0
  %778 = vmatpush1.bf16.msra.mxu0 %v760
  %779 = vmatprep.subr.bf16.mxu0 0
  %780 = vmatpush1.bf16.msra.mxu0 %v761
  %781 = vmatprep.subr.bf16.mxu0 0
  %782 = vmatpush1.bf16.msra.mxu0 %v762
  %783 = vmatprep.subr.bf16.mxu0 0
  %784 = vmatpush1.bf16.msra.mxu0 %v763
  %785 = vmatprep.subr.bf16.mxu0 0
  %786 = vmatpush1.bf16.msra.mxu0 %v764
  %787 = vmatprep.subr.bf16.mxu0 0
  %788 = vmatpush1.bf16.msra.mxu0 %v765
  %789 = vmatprep.subr.bf16.mxu0 0
  %790 = vmatpush1.bf16.msra.mxu0 %v766
  %791 = vmatprep.subr.bf16.mxu0 0
  %792 = vmatpush1.bf16.msra.mxu0 0
  %793 = vmatprep.subr.bf16.mxu0 0
  %794 = vmatpush1.bf16.msra.mxu0 0
  %795 = vmatprep.subr.bf16.mxu0 0
  %796 = vmatpush1.bf16.msra.mxu0 0
  %797 = vmatprep.subr.bf16.mxu0 0
  %798 = vmatpush1.bf16.msra.mxu0 0
  %799 = vmatprep.subr.bf16.mxu0 0
  %800 = vmatpush1.bf16.msra.mxu0 0
  %801 = vmatprep.subr.bf16.mxu0 0
  %802 = vmatpush1.bf16.msra.mxu0 0
  %803 = vmatprep.subr.bf16.mxu0 0
  %804 = vmatpush1.bf16.msra.mxu0 0
  %805 = vmatprep.subr.bf16.mxu0 0
  %806 = vmatpush1.bf16.msra.mxu0 0
  %807 = vmatprep.mubr.bf16.mxu0 0
  %808 = vmatmul.mubr.bf16.gmra.mrb[0].mxu0 %v705
  %v809 = vpop.f32.mrb[0].mxu0
  %v810 = vadd.f32 0.0, %v809
  %v811 = vpop.f32.mrb[0].mxu0
  %v812 = vpop.f32.mrb[0].mxu0
  %v813 = vadd.f32 0.0, %v812
  %v814 = vpop.f32.mrb[0].mxu0
  %815 = vdwg.mxu0
  %v816 = vadd.f32 %v709, %v810
  %v817 = vadd.f32 %v710, %v813
  %v818 = vtanh.pop %v816
  %v819 = vtanh.pop %v817
  %v820 = vmul.f32 %v818, 0.5
  %v821 = vmul.f32 %v819, 0.5
  %v822 = vadd.f32 %v820, 0.5
  %v823 = vadd.f32 %v821, 0.5
  %v824 = vsel %vm32, %v818, %v822
  %v825 = vsel %vm32, %v819, %v823
  %826 = vrot.lane.b32.xlu0 %v824, 64
  %v827 = vpop.permute.xlu0 %826
  %828 = vrot.lane.b32.xlu0 %v825, 64
  %v829 = vpop.permute.xlu0 %828
  %830 = vrot.lane.b32.xlu0 %v824, 32
  %v831 = vpop.permute.xlu0 %830
  %832 = vrot.lane.b32.xlu0 %v825, 32
  %v833 = vpop.permute.xlu0 %832
  %834 = vrot.lane.b32.xlu0 %v824, 96
  %v835 = vpop.permute.xlu0 %834
  %836 = vrot.lane.b32.xlu0 %v825, 96
  %v837 = vpop.permute.xlu0 %836
  %v838 = vmul.f32 %v827, %v699
  %v839 = vmul.f32 %v829, %v700
  %v840 = vmul.f32 %v831, %v835
  %v841 = vmul.f32 %v833, %v837
  %v842 = vadd.f32 %v838, %v840
  %v843 = vadd.f32 %v839, %v841
  %v844 = vtanh.pop %v842
  %v845 = vtanh.pop %v843
  %v846 = vmul.f32 %v824, %v844
  %v847 = vmul.f32 %v825, %v845
  %v848 = vpack.c.bf16 %v847, %v846
  %s849 = scalar_lea.vmem [#allocation2], 24
  %850 = vst [vmem:[%s849] sm:$0xff] %v848
  %s851 = scalar_lea.vmem [#allocation3], 64
  %v852 = vld [vmem:[%s851] sm:$0xff]
  %v853 = vld [vmem:[%s851 + $0x8] sm:$0xff]
  %v854 = vld [vmem:[%s2] sm:$0xf]
  %v855 = vld [vmem:[%s2 + $0x4] sm:$0xf]
  %v856 = vld [vmem:[%s2 + $0x8] sm:$0xf]
  %v857 = vld [vmem:[%s2 + $0xc] sm:$0xf]
  %v858 = vld [vmem:[%s2 + $0x10] sm:$0xf]
  %v859 = vld [vmem:[%s2 + $0x14] sm:$0xf]
  %v860 = vld [vmem:[%s2 + $0x18] sm:$0xf]
  %v861 = vld [vmem:[%s2 + $0x1c] sm:$0xf]
  %v862 = vld [vmem:[%s2 + $0x20] sm:$0xf]
  %v863 = vld [vmem:[%s2 + $0x24] sm:$0xf]
  %v864 = vld [vmem:[%s2 + $0x28] sm:$0xf]
  %v865 = vld [vmem:[%s2 + $0x2c] sm:$0xf]
  %v866 = vld [vmem:[%s2 + $0x30] sm:$0xf]
  %v867 = vld [vmem:[%s2 + $0x34] sm:$0xf]
  %v868 = vld [vmem:[%s2 + $0x38] sm:$0xf]
  %v869 = vld [vmem:[%s2 + $0x3c] sm:$0xf]
  %v886 = vunpack.c.l.b16 %v854
  %v887 = vunpack.c.l.b16 %v855
  %v888 = vunpack.c.l.b16 %v856
  %v889 = vunpack.c.l.b16 %v857
  %v890 = vunpack.c.l.b16 %v858
  %v891 = vunpack.c.l.b16 %v859
  %v892 = vunpack.c.l.b16 %v860
  %v893 = vunpack.c.l.b16 %v861
  %v894 = vunpack.c.l.b16 %v862
  %v895 = vunpack.c.l.b16 %v863
  %v896 = vunpack.c.l.b16 %v864
  %v897 = vunpack.c.l.b16 %v865
  %v898 = vunpack.c.l.b16 %v866
  %v899 = vunpack.c.l.b16 %v867
  %v900 = vunpack.c.l.b16 %v868
  %v901 = vunpack.c.l.b16 %v869
  %v902 = vpack.c.b16 %v887, %v886
  %v903 = vpack.c.b16 %v889, %v888
  %v904 = vpack.c.b16 %v891, %v890
  %v905 = vpack.c.b16 %v893, %v892
  %v906 = vpack.c.b16 %v895, %v894
  %v907 = vpack.c.b16 %v897, %v896
  %v908 = vpack.c.b16 %v899, %v898
  %v909 = vpack.c.b16 %v901, %v900
  %918 = vmatprep.subr.bf16.mxu0 0
  %919 = vmatpush1.bf16.msra.mxu0 %v902
  %920 = vmatprep.subr.bf16.mxu0 0
  %921 = vmatpush1.bf16.msra.mxu0 %v903
  %922 = vmatprep.subr.bf16.mxu0 0
  %923 = vmatpush1.bf16.msra.mxu0 %v904
  %924 = vmatprep.subr.bf16.mxu0 0
  %925 = vmatpush1.bf16.msra.mxu0 %v905
  %926 = vmatprep.subr.bf16.mxu0 0
  %927 = vmatpush1.bf16.msra.mxu0 %v906
  %928 = vmatprep.subr.bf16.mxu0 0
  %929 = vmatpush1.bf16.msra.mxu0 %v907
  %930 = vmatprep.subr.bf16.mxu0 0
  %931 = vmatpush1.bf16.msra.mxu0 %v908
  %932 = vmatprep.subr.bf16.mxu0 0
  %933 = vmatpush1.bf16.msra.mxu0 %v909
  %934 = vmatprep.subr.bf16.mxu0 0
  %935 = vmatpush1.bf16.msra.mxu0 0
  %936 = vmatprep.subr.bf16.mxu0 0
  %937 = vmatpush1.bf16.msra.mxu0 0
  %938 = vmatprep.subr.bf16.mxu0 0
  %939 = vmatpush1.bf16.msra.mxu0 0
  %940 = vmatprep.subr.bf16.mxu0 0
  %941 = vmatpush1.bf16.msra.mxu0 0
  %942 = vmatprep.subr.bf16.mxu0 0
  %943 = vmatpush1.bf16.msra.mxu0 0
  %944 = vmatprep.subr.bf16.mxu0 0
  %945 = vmatpush1.bf16.msra.mxu0 0
  %946 = vmatprep.subr.bf16.mxu0 0
  %947 = vmatpush1.bf16.msra.mxu0 0
  %948 = vmatprep.subr.bf16.mxu0 0
  %949 = vmatpush1.bf16.msra.mxu0 0
  %950 = vmatprep.mubr.bf16.mxu0 0
  %951 = vmatmul.mubr.bf16.gmra.mrb[0].mxu0 %v848
  %v952 = vpop.f32.mrb[0].mxu0
  %v953 = vadd.f32 0.0, %v952
  %v954 = vpop.f32.mrb[0].mxu0
  %v955 = vpop.f32.mrb[0].mxu0
  %v956 = vadd.f32 0.0, %v955
  %v957 = vpop.f32.mrb[0].mxu0
  %958 = vdwg.mxu0
  %v959 = vadd.f32 %v852, %v953
  %v960 = vadd.f32 %v853, %v956
  %v961 = vtanh.pop %v959
  %v962 = vtanh.pop %v960
  %v963 = vmul.f32 %v961, 0.5
  %v964 = vmul.f32 %v962, 0.5
  %v965 = vadd.f32 %v963, 0.5
  %v966 = vadd.f32 %v964, 0.5
  %v967 = vsel %vm32, %v961, %v965
  %v968 = vsel %vm32, %v962, %v966
  %969 = vrot.lane.b32.xlu0 %v967, 64
  %v970 = vpop.permute.xlu0 %969
  %971 = vrot.lane.b32.xlu0 %v968, 64
  %v972 = vpop.permute.xlu0 %971
  %973 = vrot.lane.b32.xlu0 %v967, 32
  %v974 = vpop.permute.xlu0 %973
  %975 = vrot.lane.b32.xlu0 %v968, 32
  %v976 = vpop.permute.xlu0 %975
  %977 = vrot.lane.b32.xlu0 %v967, 96
  %v978 = vpop.permute.xlu0 %977
  %979 = vrot.lane.b32.xlu0 %v968, 96
  %v980 = vpop.permute.xlu0 %979
  %v981 = vmul.f32 %v970, %v842
  %v982 = vmul.f32 %v972, %v843
  %v983 = vmul.f32 %v974, %v978
  %v984 = vmul.f32 %v976, %v980
  %v985 = vadd.f32 %v981, %v983
  %v986 = vadd.f32 %v982, %v984
  %v987 = vtanh.pop %v985
  %v988 = vtanh.pop %v986
  %v989 = vmul.f32 %v967, %v987
  %v990 = vmul.f32 %v968, %v988
  %v991 = vpack.c.bf16 %v990, %v989
  %s992 = scalar_lea.vmem [#allocation2], 32
  %993 = vst [vmem:[%s992] sm:$0xff] %v991
  %s994 = scalar_lea.vmem [#allocation3], 80
  %v995 = vld [vmem:[%s994] sm:$0xff]
  %v996 = vld [vmem:[%s994 + $0x8] sm:$0xff]
  %v997 = vld [vmem:[%s2] sm:$0xf]
  %v998 = vld [vmem:[%s2 + $0x4] sm:$0xf]
  %v999 = vld [vmem:[%s2 + $0x8] sm:$0xf]
  %v1000 = vld [vmem:[%s2 + $0xc] sm:$0xf]
  %v1001 = vld [vmem:[%s2 + $0x10] sm:$0xf]
  %v1002 = vld [vmem:[%s2 + $0x14] sm:$0xf]
  %v1003 = vld [vmem:[%s2 + $0x18] sm:$0xf]
  %v1004 = vld [vmem:[%s2 + $0x1c] sm:$0xf]
  %v1005 = vld [vmem:[%s2 + $0x20] sm:$0xf]
  %v1006 = vld [vmem:[%s2 + $0x24] sm:$0xf]
  %v1007 = vld [vmem:[%s2 + $0x28] sm:$0xf]
  %v1008 = vld [vmem:[%s2 + $0x2c] sm:$0xf]
  %v1009 = vld [vmem:[%s2 + $0x30] sm:$0xf]
  %v1010 = vld [vmem:[%s2 + $0x34] sm:$0xf]
  %v1011 = vld [vmem:[%s2 + $0x38] sm:$0xf]
  %v1012 = vld [vmem:[%s2 + $0x3c] sm:$0xf]
  %v1029 = vunpack.c.l.b16 %v997
  %v1030 = vunpack.c.l.b16 %v998
  %v1031 = vunpack.c.l.b16 %v999
  %v1032 = vunpack.c.l.b16 %v1000
  %v1033 = vunpack.c.l.b16 %v1001
  %v1034 = vunpack.c.l.b16 %v1002
  %v1035 = vunpack.c.l.b16 %v1003
  %v1036 = vunpack.c.l.b16 %v1004
  %v1037 = vunpack.c.l.b16 %v1005
  %v1038 = vunpack.c.l.b16 %v1006
  %v1039 = vunpack.c.l.b16 %v1007
  %v1040 = vunpack.c.l.b16 %v1008
  %v1041 = vunpack.c.l.b16 %v1009
  %v1042 = vunpack.c.l.b16 %v1010
  %v1043 = vunpack.c.l.b16 %v1011
  %v1044 = vunpack.c.l.b16 %v1012
  %v1045 = vpack.c.b16 %v1030, %v1029
  %v1046 = vpack.c.b16 %v1032, %v1031
  %v1047 = vpack.c.b16 %v1034, %v1033
  %v1048 = vpack.c.b16 %v1036, %v1035
  %v1049 = vpack.c.b16 %v1038, %v1037
  %v1050 = vpack.c.b16 %v1040, %v1039
  %v1051 = vpack.c.b16 %v1042, %v1041
  %v1052 = vpack.c.b16 %v1044, %v1043
  %1061 = vmatprep.subr.bf16.mxu0 0
  %1062 = vmatpush1.bf16.msra.mxu0 %v1045
  %1063 = vmatprep.subr.bf16.mxu0 0
  %1064 = vmatpush1.bf16.msra.mxu0 %v1046
  %1065 = vmatprep.subr.bf16.mxu0 0
  %1066 = vmatpush1.bf16.msra.mxu0 %v1047
  %1067 = vmatprep.subr.bf16.mxu0 0
  %1068 = vmatpush1.bf16.msra.mxu0 %v1048
  %1069 = vmatprep.subr.bf16.mxu0 0
  %1070 = vmatpush1.bf16.msra.mxu0 %v1049
  %1071 = vmatprep.subr.bf16.mxu0 0
  %1072 = vmatpush1.bf16.msra.mxu0 %v1050
  %1073 = vmatprep.subr.bf16.mxu0 0
  %1074 = vmatpush1.bf16.msra.mxu0 %v1051
  %1075 = vmatprep.subr.bf16.mxu0 0
  %1076 = vmatpush1.bf16.msra.mxu0 %v1052
  %1077 = vmatprep.subr.bf16.mxu0 0
  %1078 = vmatpush1.bf16.msra.mxu0 0
  %1079 = vmatprep.subr.bf16.mxu0 0
  %1080 = vmatpush1.bf16.msra.mxu0 0
  %1081 = vmatprep.subr.bf16.mxu0 0
  %1082 = vmatpush1.bf16.msra.mxu0 0
  %1083 = vmatprep.subr.bf16.mxu0 0
  %1084 = vmatpush1.bf16.msra.mxu0 0
  %1085 = vmatprep.subr.bf16.mxu0 0
  %1086 = vmatpush1.bf16.msra.mxu0 0
  %1087 = vmatprep.subr.bf16.mxu0 0
  %1088 = vmatpush1.bf16.msra.mxu0 0
  %1089 = vmatprep.subr.bf16.mxu0 0
  %1090 = vmatpush1.bf16.msra.mxu0 0
  %1091 = vmatprep.subr.bf16.mxu0 0
  %1092 = vmatpush1.bf16.msra.mxu0 0
  %1093 = vmatprep.mubr.bf16.mxu0 0
  %1094 = vmatmul.mubr.bf16.gmra.mrb[0].mxu0 %v991
  %v1095 = vpop.f32.mrb[0].mxu0
  %v1096 = vadd.f32 0.0, %v1095
  %v1097 = vpop.f32.mrb[0].mxu0
  %v1098 = vpop.f32.mrb[0].mxu0
  %v1099 = vadd.f32 0.0, %v1098
  %v1100 = vpop.f32.mrb[0].mxu0
  %1101 = vdwg.mxu0
  %v1102 = vadd.f32 %v995, %v1096
  %v1103 = vadd.f32 %v996, %v1099
  %v1104 = vtanh.pop %v1102
  %v1105 = vtanh.pop %v1103
  %v1106 = vmul.f32 %v1104, 0.5
  %v1107 = vmul.f32 %v1105, 0.5
  %v1108 = vadd.f32 %v1106, 0.5
  %v1109 = vadd.f32 %v1107, 0.5
  %v1110 = vsel %vm32, %v1104, %v1108
  %v1111 = vsel %vm32, %v1105, %v1109
  %1112 = vrot.lane.b32.xlu0 %v1110, 64
  %v1113 = vpop.permute.xlu0 %1112
  %1114 = vrot.lane.b32.xlu0 %v1111, 64
  %v1115 = vpop.permute.xlu0 %1114
  %1116 = vrot.lane.b32.xlu0 %v1110, 32
  %v1117 = vpop.permute.xlu0 %1116
  %1118 = vrot.lane.b32.xlu0 %v1111, 32
  %v1119 = vpop.permute.xlu0 %1118
  %1120 = vrot.lane.b32.xlu0 %v1110, 96
  %v1121 = vpop.permute.xlu0 %1120
  %1122 = vrot.lane.b32.xlu0 %v1111, 96
  %v1123 = vpop.permute.xlu0 %1122
  %v1124 = vmul.f32 %v1113, %v985
  %v1125 = vmul.f32 %v1115, %v986
  %v1126 = vmul.f32 %v1117, %v1121
  %v1127 = vmul.f32 %v1119, %v1123
  %v1128 = vadd.f32 %v1124, %v1126
  %v1129 = vadd.f32 %v1125, %v1127
  %v1130 = vtanh.pop %v1128
  %v1131 = vtanh.pop %v1129
  %v1132 = vmul.f32 %v1110, %v1130
  %v1133 = vmul.f32 %v1111, %v1131
  %v1134 = vpack.c.bf16 %v1133, %v1132
  %s1135 = scalar_lea.vmem [#allocation2], 40
  %1136 = vst [vmem:[%s1135] sm:$0xff] %v1134
  %s1137 = scalar_lea.vmem [#allocation3], 96
  %v1138 = vld [vmem:[%s1137] sm:$0xff]
  %v1139 = vld [vmem:[%s1137 + $0x8] sm:$0xff]
  %v1140 = vld [vmem:[%s2] sm:$0xf]
  %v1141 = vld [vmem:[%s2 + $0x4] sm:$0xf]
  %v1142 = vld [vmem:[%s2 + $0x8] sm:$0xf]
  %v1143 = vld [vmem:[%s2 + $0xc] sm:$0xf]
  %v1144 = vld [vmem:[%s2 + $0x10] sm:$0xf]
  %v1145 = vld [vmem:[%s2 + $0x14] sm:$0xf]
  %v1146 = vld [vmem:[%s2 + $0x18] sm:$0xf]
  %v1147 = vld [vmem:[%s2 + $0x1c] sm:$0xf]
  %v1148 = vld [vmem:[%s2 + $0x20] sm:$0xf]
  %v1149 = vld [vmem:[%s2 + $0x24] sm:$0xf]
  %v1150 = vld [vmem:[%s2 + $0x28] sm:$0xf]
  %v1151 = vld [vmem:[%s2 + $0x2c] sm:$0xf]
  %v1152 = vld [vmem:[%s2 + $0x30] sm:$0xf]
  %v1153 = vld [vmem:[%s2 + $0x34] sm:$0xf]
  %v1154 = vld [vmem:[%s2 + $0x38] sm:$0xf]
  %v1155 = vld [vmem:[%s2 + $0x3c] sm:$0xf]
  %v1172 = vunpack.c.l.b16 %v1140
  %v1173 = vunpack.c.l.b16 %v1141
  %v1174 = vunpack.c.l.b16 %v1142
  %v1175 = vunpack.c.l.b16 %v1143
  %v1176 = vunpack.c.l.b16 %v1144
  %v1177 = vunpack.c.l.b16 %v1145
  %v1178 = vunpack.c.l.b16 %v1146
  %v1179 = vunpack.c.l.b16 %v1147
  %v1180 = vunpack.c.l.b16 %v1148
  %v1181 = vunpack.c.l.b16 %v1149
  %v1182 = vunpack.c.l.b16 %v1150
  %v1183 = vunpack.c.l.b16 %v1151
  %v1184 = vunpack.c.l.b16 %v1152
  %v1185 = vunpack.c.l.b16 %v1153
  %v1186 = vunpack.c.l.b16 %v1154
  %v1187 = vunpack.c.l.b16 %v1155
  %v1188 = vpack.c.b16 %v1173, %v1172
  %v1189 = vpack.c.b16 %v1175, %v1174
  %v1190 = vpack.c.b16 %v1177, %v1176
  %v1191 = vpack.c.b16 %v1179, %v1178
  %v1192 = vpack.c.b16 %v1181, %v1180
  %v1193 = vpack.c.b16 %v1183, %v1182
  %v1194 = vpack.c.b16 %v1185, %v1184
  %v1195 = vpack.c.b16 %v1187, %v1186
  %1204 = vmatprep.subr.bf16.mxu0 0
  %1205 = vmatpush1.bf16.msra.mxu0 %v1188
  %1206 = vmatprep.subr.bf16.mxu0 0
  %1207 = vmatpush1.bf16.msra.mxu0 %v1189
  %1208 = vmatprep.subr.bf16.mxu0 0
  %1209 = vmatpush1.bf16.msra.mxu0 %v1190
  %1210 = vmatprep.subr.bf16.mxu0 0
  %1211 = vmatpush1.bf16.msra.mxu0 %v1191
  %1212 = vmatprep.subr.bf16.mxu0 0
  %1213 = vmatpush1.bf16.msra.mxu0 %v1192
  %1214 = vmatprep.subr.bf16.mxu0 0
  %1215 = vmatpush1.bf16.msra.mxu0 %v1193
  %1216 = vmatprep.subr.bf16.mxu0 0
  %1217 = vmatpush1.bf16.msra.mxu0 %v1194
  %1218 = vmatprep.subr.bf16.mxu0 0
  %1219 = vmatpush1.bf16.msra.mxu0 %v1195
  %1220 = vmatprep.subr.bf16.mxu0 0
  %1221 = vmatpush1.bf16.msra.mxu0 0
  %1222 = vmatprep.subr.bf16.mxu0 0
  %1223 = vmatpush1.bf16.msra.mxu0 0
  %1224 = vmatprep.subr.bf16.mxu0 0
  %1225 = vmatpush1.bf16.msra.mxu0 0
  %1226 = vmatprep.subr.bf16.mxu0 0
  %1227 = vmatpush1.bf16.msra.mxu0 0
  %1228 = vmatprep.subr.bf16.mxu0 0
  %1229 = vmatpush1.bf16.msra.mxu0 0
  %1230 = vmatprep.subr.bf16.mxu0 0
  %1231 = vmatpush1.bf16.msra.mxu0 0
  %1232 = vmatprep.subr.bf16.mxu0 0
  %1233 = vmatpush1.bf16.msra.mxu0 0
  %1234 = vmatprep.subr.bf16.mxu0 0
  %1235 = vmatpush1.bf16.msra.mxu0 0
  %1236 = vmatprep.mubr.bf16.mxu0 0
  %1237 = vmatmul.mubr.bf16.gmra.mrb[0].mxu0 %v1134
  %v1238 = vpop.f32.mrb[0].mxu0
  %v1239 = vadd.f32 0.0, %v1238
  %v1240 = vpop.f32.mrb[0].mxu0
  %v1241 = vpop.f32.mrb[0].mxu0
  %v1242 = vadd.f32 0.0, %v1241
  %v1243 = vpop.f32.mrb[0].mxu0
  %1244 = vdwg.mxu0
  %v1245 = vadd.f32 %v1138, %v1239
  %v1246 = vadd.f32 %v1139, %v1242
  %v1247 = vtanh.pop %v1245
  %v1248 = vtanh.pop %v1246
  %v1249 = vmul.f32 %v1247, 0.5
  %v1250 = vmul.f32 %v1248, 0.5
  %v1251 = vadd.f32 %v1249, 0.5
  %v1252 = vadd.f32 %v1250, 0.5
  %v1253 = vsel %vm32, %v1247, %v1251
  %v1254 = vsel %vm32, %v1248, %v1252
  %1255 = vrot.lane.b32.xlu0 %v1253, 64
  %v1256 = vpop.permute.xlu0 %1255
  %1257 = vrot.lane.b32.xlu0 %v1254, 64
  %v1258 = vpop.permute.xlu0 %1257
  %1259 = vrot.lane.b32.xlu0 %v1253, 32
  %v1260 = vpop.permute.xlu0 %1259
  %1261 = vrot.lane.b32.xlu0 %v1254, 32
  %v1262 = vpop.permute.xlu0 %1261
  %1263 = vrot.lane.b32.xlu0 %v1253, 96
  %v1264 = vpop.permute.xlu0 %1263
  %1265 = vrot.lane.b32.xlu0 %v1254, 96
  %v1266 = vpop.permute.xlu0 %1265
  %v1267 = vmul.f32 %v1256, %v1128
  %v1268 = vmul.f32 %v1258, %v1129
  %v1269 = vmul.f32 %v1260, %v1264
  %v1270 = vmul.f32 %v1262, %v1266
  %v1271 = vadd.f32 %v1267, %v1269
  %v1272 = vadd.f32 %v1268, %v1270
  %v1273 = vtanh.pop %v1271
  %v1274 = vtanh.pop %v1272
  %v1275 = vmul.f32 %v1253, %v1273
  %v1276 = vmul.f32 %v1254, %v1274
  %v1277 = vpack.c.bf16 %v1276, %v1275
  %s1278 = scalar_lea.vmem [#allocation2], 48
  %1279 = vst [vmem:[%s1278] sm:$0xff] %v1277
  %s1280 = scalar_lea.vmem [#allocation3], 112
  %v1281 = vld [vmem:[%s1280] sm:$0xff]
  %v1282 = vld [vmem:[%s1280 + $0x8] sm:$0xff]
  %v1283 = vld [vmem:[%s2] sm:$0xf]
  %v1284 = vld [vmem:[%s2 + $0x4] sm:$0xf]
  %v1285 = vld [vmem:[%s2 + $0x8] sm:$0xf]
  %v1286 = vld [vmem:[%s2 + $0xc] sm:$0xf]
  %v1287 = vld [vmem:[%s2 + $0x10] sm:$0xf]
  %v1288 = vld [vmem:[%s2 + $0x14] sm:$0xf]
  %v1289 = vld [vmem:[%s2 + $0x18] sm:$0xf]
  %v1290 = vld [vmem:[%s2 + $0x1c] sm:$0xf]
  %v1291 = vld [vmem:[%s2 + $0x20] sm:$0xf]
  %v1292 = vld [vmem:[%s2 + $0x24] sm:$0xf]
  %v1293 = vld [vmem:[%s2 + $0x28] sm:$0xf]
  %v1294 = vld [vmem:[%s2 + $0x2c] sm:$0xf]
  %v1295 = vld [vmem:[%s2 + $0x30] sm:$0xf]
  %v1296 = vld [vmem:[%s2 + $0x34] sm:$0xf]
  %v1297 = vld [vmem:[%s2 + $0x38] sm:$0xf]
  %v1298 = vld [vmem:[%s2 + $0x3c] sm:$0xf]
  %v1315 = vunpack.c.l.b16 %v1283
  %v1316 = vunpack.c.l.b16 %v1284
  %v1317 = vunpack.c.l.b16 %v1285
  %v1318 = vunpack.c.l.b16 %v1286
  %v1319 = vunpack.c.l.b16 %v1287
  %v1320 = vunpack.c.l.b16 %v1288
  %v1321 = vunpack.c.l.b16 %v1289
  %v1322 = vunpack.c.l.b16 %v1290
  %v1323 = vunpack.c.l.b16 %v1291
  %v1324 = vunpack.c.l.b16 %v1292
  %v1325 = vunpack.c.l.b16 %v1293
  %v1326 = vunpack.c.l.b16 %v1294
  %v1327 = vunpack.c.l.b16 %v1295
  %v1328 = vunpack.c.l.b16 %v1296
  %v1329 = vunpack.c.l.b16 %v1297
  %v1330 = vunpack.c.l.b16 %v1298
  %v1331 = vpack.c.b16 %v1316, %v1315
  %v1332 = vpack.c.b16 %v1318, %v1317
  %v1333 = vpack.c.b16 %v1320, %v1319
  %v1334 = vpack.c.b16 %v1322, %v1321
  %v1335 = vpack.c.b16 %v1324, %v1323
  %v1336 = vpack.c.b16 %v1326, %v1325
  %v1337 = vpack.c.b16 %v1328, %v1327
  %v1338 = vpack.c.b16 %v1330, %v1329
  %1347 = vmatprep.subr.bf16.mxu0 0
  %1348 = vmatpush1.bf16.msra.mxu0 %v1331
  %1349 = vmatprep.subr.bf16.mxu0 0
  %1350 = vmatpush1.bf16.msra.mxu0 %v1332
  %1351 = vmatprep.subr.bf16.mxu0 0
  %1352 = vmatpush1.bf16.msra.mxu0 %v1333
  %1353 = vmatprep.subr.bf16.mxu0 0
  %1354 = vmatpush1.bf16.msra.mxu0 %v1334
  %1355 = vmatprep.subr.bf16.mxu0 0
  %1356 = vmatpush1.bf16.msra.mxu0 %v1335
  %1357 = vmatprep.subr.bf16.mxu0 0
  %1358 = vmatpush1.bf16.msra.mxu0 %v1336
  %1359 = vmatprep.subr.bf16.mxu0 0
  %1360 = vmatpush1.bf16.msra.mxu0 %v1337
  %1361 = vmatprep.subr.bf16.mxu0 0
  %1362 = vmatpush1.bf16.msra.mxu0 %v1338
  %1363 = vmatprep.subr.bf16.mxu0 0
  %1364 = vmatpush1.bf16.msra.mxu0 0
  %1365 = vmatprep.subr.bf16.mxu0 0
  %1366 = vmatpush1.bf16.msra.mxu0 0
  %1367 = vmatprep.subr.bf16.mxu0 0
  %1368 = vmatpush1.bf16.msra.mxu0 0
  %1369 = vmatprep.subr.bf16.mxu0 0
  %1370 = vmatpush1.bf16.msra.mxu0 0
  %1371 = vmatprep.subr.bf16.mxu0 0
  %1372 = vmatpush1.bf16.msra.mxu0 0
  %1373 = vmatprep.subr.bf16.mxu0 0
  %1374 = vmatpush1.bf16.msra.mxu0 0
  %1375 = vmatprep.subr.bf16.mxu0 0
  %1376 = vmatpush1.bf16.msra.mxu0 0
  %1377 = vmatprep.subr.bf16.mxu0 0
  %1378 = vmatpush1.bf16.msra.mxu0 0
  %1379 = vmatprep.mubr.bf16.mxu0 0
  %1380 = vmatmul.mubr.bf16.gmra.mrb[0].mxu0 %v1277
  %v1381 = vpop.f32.mrb[0].mxu0
  %v1382 = vadd.f32 0.0, %v1381
  %v1383 = vpop.f32.mrb[0].mxu0
  %v1384 = vpop.f32.mrb[0].mxu0
  %v1385 = vadd.f32 0.0, %v1384
  %v1386 = vpop.f32.mrb[0].mxu0
  %1387 = vdwg.mxu0
  %v1388 = vadd.f32 %v1281, %v1382
  %v1389 = vadd.f32 %v1282, %v1385
  %v1390 = vtanh.pop %v1388
  %v1391 = vtanh.pop %v1389
  %v1392 = vmul.f32 %v1390, 0.5
  %v1393 = vmul.f32 %v1391, 0.5
  %v1394 = vadd.f32 %v1392, 0.5
  %v1395 = vadd.f32 %v1393, 0.5
  %v1396 = vsel %vm32, %v1390, %v1394
  %v1397 = vsel %vm32, %v1391, %v1395
  %1398 = vrot.lane.b32.xlu0 %v1396, 64
  %v1399 = vpop.permute.xlu0 %1398
  %1400 = vrot.lane.b32.xlu0 %v1397, 64
  %v1401 = vpop.permute.xlu0 %1400
  %1402 = vrot.lane.b32.xlu0 %v1396, 32
  %v1403 = vpop.permute.xlu0 %1402
  %1404 = vrot.lane.b32.xlu0 %v1397, 32
  %v1405 = vpop.permute.xlu0 %1404
  %1406 = vrot.lane.b32.xlu0 %v1396, 96
  %v1407 = vpop.permute.xlu0 %1406
  %1408 = vrot.lane.b32.xlu0 %v1397, 96
  %v1409 = vpop.permute.xlu0 %1408
  %v1410 = vmul.f32 %v1399, %v1271
  %v1411 = vmul.f32 %v1401, %v1272
  %v1412 = vmul.f32 %v1403, %v1407
  %v1413 = vmul.f32 %v1405, %v1409
  %v1414 = vadd.f32 %v1410, %v1412
  %v1415 = vadd.f32 %v1411, %v1413
  %v1416 = vtanh.pop %v1414
  %v1417 = vtanh.pop %v1415
  %v1418 = vmul.f32 %v1396, %v1416
  %v1419 = vmul.f32 %v1397, %v1417
  %v1420 = vpack.c.bf16 %v1419, %v1418
  %s1421 = scalar_lea.vmem [#allocation2], 56
  %1422 = vst [vmem:[%s1421] sm:$0xff] %v1420
  %v1423 = vld [vmem:[#allocation2] sm:$0xff]
  %v1424 = vld [vmem:[#allocation2 + $0x8] sm:$0xff]
  %v1425 = vld [vmem:[#allocation2 + $0x10] sm:$0xff]
  %v1426 = vld [vmem:[#allocation2 + $0x18] sm:$0xff]
  %v1427 = vld [vmem:[#allocation2 + $0x20] sm:$0xff]
  %v1428 = vld [vmem:[#allocation2 + $0x28] sm:$0xff]
  %v1429 = vld [vmem:[#allocation2 + $0x30] sm:$0xff]
  %v1430 = vld [vmem:[#allocation2 + $0x38] sm:$0xff]
  %s1431 = scalar_lea.vmem %s1, 64
  %v1432 = vld [vmem:[%s1431] sm:$0xf]
  %v1433 = vld [vmem:[%s1431 + $0x4] sm:$0xf]
  %v1434 = vld [vmem:[%s1431 + $0x8] sm:$0xf]
  %v1435 = vld [vmem:[%s1431 + $0xc] sm:$0xf]
  %v1436 = vld [vmem:[%s1431 + $0x10] sm:$0xf]
  %v1437 = vld [vmem:[%s1431 + $0x14] sm:$0xf]
  %v1438 = vld [vmem:[%s1431 + $0x18] sm:$0xf]
  %v1439 = vld [vmem:[%s1431 + $0x1c] sm:$0xf]
  %v1440 = vld [vmem:[%s1431 + $0x20] sm:$0xf]
  %v1441 = vld [vmem:[%s1431 + $0x24] sm:$0xf]
  %v1442 = vld [vmem:[%s1431 + $0x28] sm:$0xf]
  %v1443 = vld [vmem:[%s1431 + $0x2c] sm:$0xf]
  %v1444 = vld [vmem:[%s1431 + $0x30] sm:$0xf]
  %v1445 = vld [vmem:[%s1431 + $0x34] sm:$0xf]
  %v1446 = vld [vmem:[%s1431 + $0x38] sm:$0xf]
  %v1447 = vld [vmem:[%s1431 + $0x3c] sm:$0xf]
  %s1448 = scalar_lea.vmem %s3, 1
  %v1449 = vld [vmem:[%s1448] sm:$0x1]
  %v1451 = vlaneseq
  %v1452 = vshrl.u32 %v1451, 7
  %v1453 = vsub.s32 0, %v1452
  %v1454 = vrot.slane %v1449, %v1453
  %v1472 = vunpack.c.l.b16 %v1432
  %v1473 = vunpack.c.l.b16 %v1433
  %v1474 = vunpack.c.l.b16 %v1434
  %v1475 = vunpack.c.l.b16 %v1435
  %v1476 = vunpack.c.l.b16 %v1436
  %v1477 = vunpack.c.l.b16 %v1437
  %v1478 = vunpack.c.l.b16 %v1438
  %v1479 = vunpack.c.l.b16 %v1439
  %v1480 = vunpack.c.l.b16 %v1440
  %v1481 = vunpack.c.l.b16 %v1441
  %v1482 = vunpack.c.l.b16 %v1442
  %v1483 = vunpack.c.l.b16 %v1443
  %v1484 = vunpack.c.l.b16 %v1444
  %v1485 = vunpack.c.l.b16 %v1445
  %v1486 = vunpack.c.l.b16 %v1446
  %v1487 = vunpack.c.l.b16 %v1447
  %v1488 = vpack.c.b16 %v1473, %v1472
  %v1489 = vpack.c.b16 %v1475, %v1474
  %v1490 = vpack.c.b16 %v1477, %v1476
  %v1491 = vpack.c.b16 %v1479, %v1478
  %v1492 = vpack.c.b16 %v1481, %v1480
  %v1493 = vpack.c.b16 %v1483, %v1482
  %v1494 = vpack.c.b16 %v1485, %v1484
  %v1495 = vpack.c.b16 %v1487, %v1486
  %1504 = vmatprep.subr.bf16.mxu0 0
  %1505 = vmatpush1.bf16.msra.mxu0 %v1488
  %1506 = vmatprep.subr.bf16.mxu0 0
  %1507 = vmatpush1.bf16.msra.mxu0 %v1489
  %1508 = vmatprep.subr.bf16.mxu0 0
  %1509 = vmatpush1.bf16.msra.mxu0 %v1490
  %1510 = vmatprep.subr.bf16.mxu0 0
  %1511 = vmatpush1.bf16.msra.mxu0 %v1491
  %1512 = vmatprep.subr.bf16.mxu0 0
  %1513 = vmatpush1.bf16.msra.mxu0 %v1492
  %1514 = vmatprep.subr.bf16.mxu0 0
  %1515 = vmatpush1.bf16.msra.mxu0 %v1493
  %1516 = vmatprep.subr.bf16.mxu0 0
  %1517 = vmatpush1.bf16.msra.mxu0 %v1494
  %1518 = vmatprep.subr.bf16.mxu0 0
  %1519 = vmatpush1.bf16.msra.mxu0 %v1495
  %1520 = vmatprep.subr.bf16.mxu0 0
  %1521 = vmatpush1.bf16.msra.mxu0 0
  %1522 = vmatprep.subr.bf16.mxu0 0
  %1523 = vmatpush1.bf16.msra.mxu0 0
  %1524 = vmatprep.subr.bf16.mxu0 0
  %1525 = vmatpush1.bf16.msra.mxu0 0
  %1526 = vmatprep.subr.bf16.mxu0 0
  %1527 = vmatpush1.bf16.msra.mxu0 0
  %1528 = vmatprep.subr.bf16.mxu0 0
  %1529 = vmatpush1.bf16.msra.mxu0 0
  %1530 = vmatprep.subr.bf16.mxu0 0
  %1531 = vmatpush1.bf16.msra.mxu0 0
  %1532 = vmatprep.subr.bf16.mxu0 0
  %1533 = vmatpush1.bf16.msra.mxu0 0
  %1534 = vmatprep.subr.bf16.mxu0 0
  %1535 = vmatpush1.bf16.msra.mxu0 0
  %1536 = vmatprep.mubr.bf16.mxu0 0
  %1537 = vmatmul.mubr.bf16.gmra.mrb[0].mxu0 %v1423
  %v1538 = vpop.f32.mrb[0].mxu0
  %v1539 = vadd.f32 %v1454, %v1538
  %v1540 = vpop.f32.mrb[0].mxu0
  %v1541 = vpop.f32.mrb[0].mxu0
  %v1542 = vadd.f32 %v1454, %v1541
  %v1543 = vpop.f32.mrb[0].mxu0
  %1544 = vmatprep.mubr.bf16.mxu0 0
  %1545 = vmatmul.mubr.bf16.gmra.mrb[0].mxu0 %v1424
  %v1546 = vpop.f32.mrb[0].mxu0
  %v1547 = vadd.f32 %v1454, %v1546
  %v1548 = vpop.f32.mrb[0].mxu0
  %v1549 = vpop.f32.mrb[0].mxu0
  %v1550 = vadd.f32 %v1454, %v1549
  %v1551 = vpop.f32.mrb[0].mxu0
  %1552 = vmatprep.mubr.bf16.mxu0 0
  %1553 = vmatmul.mubr.bf16.gmra.mrb[0].mxu0 %v1425
  %v1554 = vpop.f32.mrb[0].mxu0
  %v1555 = vadd.f32 %v1454, %v1554
  %v1556 = vpop.f32.mrb[0].mxu0
  %v1557 = vpop.f32.mrb[0].mxu0
  %v1558 = vadd.f32 %v1454, %v1557
  %v1559 = vpop.f32.mrb[0].mxu0
  %1560 = vmatprep.mubr.bf16.mxu0 0
  %1561 = vmatmul.mubr.bf16.gmra.mrb[0].mxu0 %v1426
  %v1562 = vpop.f32.mrb[0].mxu0
  %v1563 = vadd.f32 %v1454, %v1562
  %v1564 = vpop.f32.mrb[0].mxu0
  %v1565 = vpop.f32.mrb[0].mxu0
  %v1566 = vadd.f32 %v1454, %v1565
  %v1567 = vpop.f32.mrb[0].mxu0
  %1568 = vmatprep.mubr.bf16.mxu0 0
  %1569 = vmatmul.mubr.bf16.gmra.mrb[0].mxu0 %v1427
  %v1570 = vpop.f32.mrb[0].mxu0
  %v1571 = vadd.f32 %v1454, %v1570
  %v1572 = vpop.f32.mrb[0].mxu0
  %v1573 = vpop.f32.mrb[0].mxu0
  %v1574 = vadd.f32 %v1454, %v1573
  %v1575 = vpop.f32.mrb[0].mxu0
  %1576 = vmatprep.mubr.bf16.mxu0 0
  %1577 = vmatmul.mubr.bf16.gmra.mrb[0].mxu0 %v1428
  %v1578 = vpop.f32.mrb[0].mxu0
  %v1579 = vadd.f32 %v1454, %v1578
  %v1580 = vpop.f32.mrb[0].mxu0
  %v1581 = vpop.f32.mrb[0].mxu0
  %v1582 = vadd.f32 %v1454, %v1581
  %v1583 = vpop.f32.mrb[0].mxu0
  %1584 = vmatprep.mubr.bf16.mxu0 0
  %1585 = vmatmul.mubr.bf16.gmra.mrb[0].mxu0 %v1429
  %v1586 = vpop.f32.mrb[0].mxu0
  %v1587 = vadd.f32 %v1454, %v1586
  %v1588 = vpop.f32.mrb[0].mxu0
  %v1589 = vpop.f32.mrb[0].mxu0
  %v1590 = vadd.f32 %v1454, %v1589
  %v1591 = vpop.f32.mrb[0].mxu0
  %1592 = vmatprep.mubr.bf16.mxu0 0
  %1593 = vmatmul.mubr.bf16.gmra.mrb[0].mxu0 %v1430
  %v1594 = vpop.f32.mrb[0].mxu0
  %v1595 = vadd.f32 %v1454, %v1594
  %v1596 = vpop.f32.mrb[0].mxu0
  %v1597 = vpop.f32.mrb[0].mxu0
  %v1598 = vadd.f32 %v1454, %v1597
  %v1599 = vpop.f32.mrb[0].mxu0
  %1600 = vdwg.mxu0
  %1601 = vst [vmem:[#allocation3] sm:$0xff] %v1539
  %1602 = vst [vmem:[#allocation3 + $0x8] sm:$0xff] %v1542
  %1603 = vst [vmem:[#allocation3 + $0x10] sm:$0xff] %v1547
  %1604 = vst [vmem:[#allocation3 + $0x18] sm:$0xff] %v1550
  %1605 = vst [vmem:[#allocation3 + $0x20] sm:$0xff] %v1555
  %1606 = vst [vmem:[#allocation3 + $0x28] sm:$0xff] %v1558
  %1607 = vst [vmem:[#allocation3 + $0x30] sm:$0xff] %v1563
  %1608 = vst [vmem:[#allocation3 + $0x38] sm:$0xff] %v1566
  %1609 = vst [vmem:[#allocation3 + $0x40] sm:$0xff] %v1571
  %1610 = vst [vmem:[#allocation3 + $0x48] sm:$0xff] %v1574
  %1611 = vst [vmem:[#allocation3 + $0x50] sm:$0xff] %v1579
  %1612 = vst [vmem:[#allocation3 + $0x58] sm:$0xff] %v1582
  %1613 = vst [vmem:[#allocation3 + $0x60] sm:$0xff] %v1587
  %1614 = vst [vmem:[#allocation3 + $0x68] sm:$0xff] %v1590
  %1615 = vst [vmem:[#allocation3 + $0x70] sm:$0xff] %v1595
  %1616 = vst [vmem:[#allocation3 + $0x78] sm:$0xff] %v1598
  %v1617 = vld [vmem:[#allocation3] sm:$0xff]
  %v1618 = vld [vmem:[#allocation3 + $0x8] sm:$0xff]
  %s1619 = scalar_lea.vmem %s2, 64
  %v1620 = vld [vmem:[%s1619] sm:$0xf]
  %v1621 = vld [vmem:[%s1619 + $0x4] sm:$0xf]
  %v1622 = vld [vmem:[%s1619 + $0x8] sm:$0xf]
  %v1623 = vld [vmem:[%s1619 + $0xc] sm:$0xf]
  %v1624 = vld [vmem:[%s1619 + $0x10] sm:$0xf]
  %v1625 = vld [vmem:[%s1619 + $0x14] sm:$0xf]
  %v1626 = vld [vmem:[%s1619 + $0x18] sm:$0xf]
  %v1627 = vld [vmem:[%s1619 + $0x1c] sm:$0xf]
  %v1628 = vld [vmem:[%s1619 + $0x20] sm:$0xf]
  %v1629 = vld [vmem:[%s1619 + $0x24] sm:$0xf]
  %v1630 = vld [vmem:[%s1619 + $0x28] sm:$0xf]
  %v1631 = vld [vmem:[%s1619 + $0x2c] sm:$0xf]
  %v1632 = vld [vmem:[%s1619 + $0x30] sm:$0xf]
  %v1633 = vld [vmem:[%s1619 + $0x34] sm:$0xf]
  %v1634 = vld [vmem:[%s1619 + $0x38] sm:$0xf]
  %v1635 = vld [vmem:[%s1619 + $0x3c] sm:$0xf]
  %v1652 = vunpack.c.l.b16 %v1620
  %v1653 = vunpack.c.l.b16 %v1621
  %v1654 = vunpack.c.l.b16 %v1622
  %v1655 = vunpack.c.l.b16 %v1623
  %v1656 = vunpack.c.l.b16 %v1624
  %v1657 = vunpack.c.l.b16 %v1625
  %v1658 = vunpack.c.l.b16 %v1626
  %v1659 = vunpack.c.l.b16 %v1627
  %v1660 = vunpack.c.l.b16 %v1628
  %v1661 = vunpack.c.l.b16 %v1629
  %v1662 = vunpack.c.l.b16 %v1630
  %v1663 = vunpack.c.l.b16 %v1631
  %v1664 = vunpack.c.l.b16 %v1632
  %v1665 = vunpack.c.l.b16 %v1633
  %v1666 = vunpack.c.l.b16 %v1634
  %v1667 = vunpack.c.l.b16 %v1635
  %v1668 = vpack.c.b16 %v1653, %v1652
  %v1669 = vpack.c.b16 %v1655, %v1654
  %v1670 = vpack.c.b16 %v1657, %v1656
  %v1671 = vpack.c.b16 %v1659, %v1658
  %v1672 = vpack.c.b16 %v1661, %v1660
  %v1673 = vpack.c.b16 %v1663, %v1662
  %v1674 = vpack.c.b16 %v1665, %v1664
  %v1675 = vpack.c.b16 %v1667, %v1666
  %1684 = vmatprep.subr.bf16.mxu0 0
  %1685 = vmatpush1.bf16.msra.mxu0 %v1668
  %1686 = vmatprep.subr.bf16.mxu0 0
  %1687 = vmatpush1.bf16.msra.mxu0 %v1669
  %1688 = vmatprep.subr.bf16.mxu0 0
  %1689 = vmatpush1.bf16.msra.mxu0 %v1670
  %1690 = vmatprep.subr.bf16.mxu0 0
  %1691 = vmatpush1.bf16.msra.mxu0 %v1671
  %1692 = vmatprep.subr.bf16.mxu0 0
  %1693 = vmatpush1.bf16.msra.mxu0 %v1672
  %1694 = vmatprep.subr.bf16.mxu0 0
  %1695 = vmatpush1.bf16.msra.mxu0 %v1673
  %1696 = vmatprep.subr.bf16.mxu0 0
  %1697 = vmatpush1.bf16.msra.mxu0 %v1674
  %1698 = vmatprep.subr.bf16.mxu0 0
  %1699 = vmatpush1.bf16.msra.mxu0 %v1675
  %1700 = vmatprep.subr.bf16.mxu0 0
  %1701 = vmatpush1.bf16.msra.mxu0 0
  %1702 = vmatprep.subr.bf16.mxu0 0
  %1703 = vmatpush1.bf16.msra.mxu0 0
  %1704 = vmatprep.subr.bf16.mxu0 0
  %1705 = vmatpush1.bf16.msra.mxu0 0
  %1706 = vmatprep.subr.bf16.mxu0 0
  %1707 = vmatpush1.bf16.msra.mxu0 0
  %1708 = vmatprep.subr.bf16.mxu0 0
  %1709 = vmatpush1.bf16.msra.mxu0 0
  %1710 = vmatprep.subr.bf16.mxu0 0
  %1711 = vmatpush1.bf16.msra.mxu0 0
  %1712 = vmatprep.subr.bf16.mxu0 0
  %1713 = vmatpush1.bf16.msra.mxu0 0
  %1714 = vmatprep.subr.bf16.mxu0 0
  %1715 = vmatpush1.bf16.msra.mxu0 0
  %1716 = vmatprep.mubr.bf16.mxu0 0
  %1717 = vmatmul.mubr.bf16.gmra.mrb[0].mxu0 0
  %v1718 = vpop.f32.mrb[0].mxu0
  %v1719 = vadd.f32 0.0, %v1718
  %v1720 = vpop.f32.mrb[0].mxu0
  %v1721 = vpop.f32.mrb[0].mxu0
  %v1722 = vadd.f32 0.0, %v1721
  %v1723 = vpop.f32.mrb[0].mxu0
  %1724 = vdwg.mxu0
  %v1725 = vadd.f32 %v1617, %v1719
  %v1726 = vadd.f32 %v1618, %v1722
  %v1727 = vtanh.pop %v1725
  %v1728 = vtanh.pop %v1726
  %v1729 = vmul.f32 %v1727, 0.5
  %v1730 = vmul.f32 %v1728, 0.5
  %v1731 = vadd.f32 %v1729, 0.5
  %v1732 = vadd.f32 %v1730, 0.5
  %v1733 = vsel %vm32, %v1727, %v1731
  %v1734 = vsel %vm32, %v1728, %v1732
  %1735 = vrot.lane.b32.xlu0 %v1733, 64
  %v1736 = vpop.permute.xlu0 %1735
  %1737 = vrot.lane.b32.xlu0 %v1734, 64
  %v1738 = vpop.permute.xlu0 %1737
  %1739 = vrot.lane.b32.xlu0 %v1733, 32
  %v1740 = vpop.permute.xlu0 %1739
  %1741 = vrot.lane.b32.xlu0 %v1734, 32
  %v1742 = vpop.permute.xlu0 %1741
  %1743 = vrot.lane.b32.xlu0 %v1733, 96
  %v1744 = vpop.permute.xlu0 %1743
  %1745 = vrot.lane.b32.xlu0 %v1734, 96
  %v1746 = vpop.permute.xlu0 %1745
  %v1747 = vmul.f32 %v1736, 0.0
  %v1748 = vmul.f32 %v1738, 0.0
  %v1749 = vmul.f32 %v1740, %v1744
  %v1750 = vmul.f32 %v1742, %v1746
  %v1751 = vadd.f32 %v1747, %v1749
  %v1752 = vadd.f32 %v1748, %v1750
  %v1753 = vtanh.pop %v1751
  %v1754 = vtanh.pop %v1752
  %v1755 = vmul.f32 %v1733, %v1753
  %v1756 = vmul.f32 %v1734, %v1754
  %v1757 = vpack.c.bf16 %v1756, %v1755
  %1758 = vst [vmem:[#allocation2] sm:$0xff] %v1757
  %v1759 = vld [vmem:[%s422] sm:$0xff]
  %v1760 = vld [vmem:[%s422 + $0x8] sm:$0xff]
  %v1761 = vld [vmem:[%s1619] sm:$0xf]
  %v1762 = vld [vmem:[%s1619 + $0x4] sm:$0xf]
  %v1763 = vld [vmem:[%s1619 + $0x8] sm:$0xf]
  %v1764 = vld [vmem:[%s1619 + $0xc] sm:$0xf]
  %v1765 = vld [vmem:[%s1619 + $0x10] sm:$0xf]
  %v1766 = vld [vmem:[%s1619 + $0x14] sm:$0xf]
  %v1767 = vld [vmem:[%s1619 + $0x18] sm:$0xf]
  %v1768 = vld [vmem:[%s1619 + $0x1c] sm:$0xf]
  %v1769 = vld [vmem:[%s1619 + $0x20] sm:$0xf]
  %v1770 = vld [vmem:[%s1619 + $0x24] sm:$0xf]
  %v1771 = vld [vmem:[%s1619 + $0x28] sm:$0xf]
  %v1772 = vld [vmem:[%s1619 + $0x2c] sm:$0xf]
  %v1773 = vld [vmem:[%s1619 + $0x30] sm:$0xf]
  %v1774 = vld [vmem:[%s1619 + $0x34] sm:$0xf]
  %v1775 = vld [vmem:[%s1619 + $0x38] sm:$0xf]
  %v1776 = vld [vmem:[%s1619 + $0x3c] sm:$0xf]
  %v1793 = vunpack.c.l.b16 %v1761
  %v1794 = vunpack.c.l.b16 %v1762
  %v1795 = vunpack.c.l.b16 %v1763
  %v1796 = vunpack.c.l.b16 %v1764
  %v1797 = vunpack.c.l.b16 %v1765
  %v1798 = vunpack.c.l.b16 %v1766
  %v1799 = vunpack.c.l.b16 %v1767
  %v1800 = vunpack.c.l.b16 %v1768
  %v1801 = vunpack.c.l.b16 %v1769
  %v1802 = vunpack.c.l.b16 %v1770
  %v1803 = vunpack.c.l.b16 %v1771
  %v1804 = vunpack.c.l.b16 %v1772
  %v1805 = vunpack.c.l.b16 %v1773
  %v1806 = vunpack.c.l.b16 %v1774
  %v1807 = vunpack.c.l.b16 %v1775
  %v1808 = vunpack.c.l.b16 %v1776
  %v1809 = vpack.c.b16 %v1794, %v1793
  %v1810 = vpack.c.b16 %v1796, %v1795
  %v1811 = vpack.c.b16 %v1798, %v1797
  %v1812 = vpack.c.b16 %v1800, %v1799
  %v1813 = vpack.c.b16 %v1802, %v1801
  %v1814 = vpack.c.b16 %v1804, %v1803
  %v1815 = vpack.c.b16 %v1806, %v1805
  %v1816 = vpack.c.b16 %v1808, %v1807
  %1825 = vmatprep.subr.bf16.mxu0 0
  %1826 = vmatpush1.bf16.msra.mxu0 %v1809
  %1827 = vmatprep.subr.bf16.mxu0 0
  %1828 = vmatpush1.bf16.msra.mxu0 %v1810
  %1829 = vmatprep.subr.bf16.mxu0 0
  %1830 = vmatpush1.bf16.msra.mxu0 %v1811
  %1831 = vmatprep.subr.bf16.mxu0 0
  %1832 = vmatpush1.bf16.msra.mxu0 %v1812
  %1833 = vmatprep.subr.bf16.mxu0 0
  %1834 = vmatpush1.bf16.msra.mxu0 %v1813
  %1835 = vmatprep.subr.bf16.mxu0 0
  %1836 = vmatpush1.bf16.msra.mxu0 %v1814
  %1837 = vmatprep.subr.bf16.mxu0 0
  %1838 = vmatpush1.bf16.msra.mxu0 %v1815
  %1839 = vmatprep.subr.bf16.mxu0 0
  %1840 = vmatpush1.bf16.msra.mxu0 %v1816
  %1841 = vmatprep.subr.bf16.mxu0 0
  %1842 = vmatpush1.bf16.msra.mxu0 0
  %1843 = vmatprep.subr.bf16.mxu0 0
  %1844 = vmatpush1.bf16.msra.mxu0 0
  %1845 = vmatprep.subr.bf16.mxu0 0
  %1846 = vmatpush1.bf16.msra.mxu0 0
  %1847 = vmatprep.subr.bf16.mxu0 0
  %1848 = vmatpush1.bf16.msra.mxu0 0
  %1849 = vmatprep.subr.bf16.mxu0 0
  %1850 = vmatpush1.bf16.msra.mxu0 0
  %1851 = vmatprep.subr.bf16.mxu0 0
  %1852 = vmatpush1.bf16.msra.mxu0 0
  %1853 = vmatprep.subr.bf16.mxu0 0
  %1854 = vmatpush1.bf16.msra.mxu0 0
  %1855 = vmatprep.subr.bf16.mxu0 0
  %1856 = vmatpush1.bf16.msra.mxu0 0
  %1857 = vmatprep.mubr.bf16.mxu0 0
  %1858 = vmatmul.mubr.bf16.gmra.mrb[0].mxu0 %v1757
  %v1859 = vpop.f32.mrb[0].mxu0
  %v1860 = vadd.f32 0.0, %v1859
  %v1861 = vpop.f32.mrb[0].mxu0
  %v1862 = vpop.f32.mrb[0].mxu0
  %v1863 = vadd.f32 0.0, %v1862
  %v1864 = vpop.f32.mrb[0].mxu0
  %1865 = vdwg.mxu0
  %v1866 = vadd.f32 %v1759, %v1860
  %v1867 = vadd.f32 %v1760, %v1863
  %v1868 = vtanh.pop %v1866
  %v1869 = vtanh.pop %v1867
  %v1870 = vmul.f32 %v1868, 0.5
  %v1871 = vmul.f32 %v1869, 0.5
  %v1872 = vadd.f32 %v1870, 0.5
  %v1873 = vadd.f32 %v1871, 0.5
  %v1874 = vsel %vm32, %v1868, %v1872
  %v1875 = vsel %vm32, %v1869, %v1873
  %1876 = vrot.lane.b32.xlu0 %v1874, 64
  %v1877 = vpop.permute.xlu0 %1876
  %1878 = vrot.lane.b32.xlu0 %v1875, 64
  %v1879 = vpop.permute.xlu0 %1878
  %1880 = vrot.lane.b32.xlu0 %v1874, 32
  %v1881 = vpop.permute.xlu0 %1880
  %1882 = vrot.lane.b32.xlu0 %v1875, 32
  %v1883 = vpop.permute.xlu0 %1882
  %1884 = vrot.lane.b32.xlu0 %v1874, 96
  %v1885 = vpop.permute.xlu0 %1884
  %1886 = vrot.lane.b32.xlu0 %v1875, 96
  %v1887 = vpop.permute.xlu0 %1886
  %v1888 = vmul.f32 %v1877, %v1751
  %v1889 = vmul.f32 %v1879, %v1752
  %v1890 = vmul.f32 %v1881, %v1885
  %v1891 = vmul.f32 %v1883, %v1887
  %v1892 = vadd.f32 %v1888, %v1890
  %v1893 = vadd.f32 %v1889, %v1891
  %v1894 = vtanh.pop %v1892
  %v1895 = vtanh.pop %v1893
  %v1896 = vmul.f32 %v1874, %v1894
  %v1897 = vmul.f32 %v1875, %v1895
  %v1898 = vpack.c.bf16 %v1897, %v1896
  %1899 = vst [vmem:[%s563] sm:$0xff] %v1898
  %v1900 = vld [vmem:[%s565] sm:$0xff]
  %v1901 = vld [vmem:[%s565 + $0x8] sm:$0xff]
  %v1902 = vld [vmem:[%s1619] sm:$0xf]
  %v1903 = vld [vmem:[%s1619 + $0x4] sm:$0xf]
  %v1904 = vld [vmem:[%s1619 + $0x8] sm:$0xf]
  %v1905 = vld [vmem:[%s1619 + $0xc] sm:$0xf]
  %v1906 = vld [vmem:[%s1619 + $0x10] sm:$0xf]
  %v1907 = vld [vmem:[%s1619 + $0x14] sm:$0xf]
  %v1908 = vld [vmem:[%s1619 + $0x18] sm:$0xf]
  %v1909 = vld [vmem:[%s1619 + $0x1c] sm:$0xf]
  %v1910 = vld [vmem:[%s1619 + $0x20] sm:$0xf]
  %v1911 = vld [vmem:[%s1619 + $0x24] sm:$0xf]
  %v1912 = vld [vmem:[%s1619 + $0x28] sm:$0xf]
  %v1913 = vld [vmem:[%s1619 + $0x2c] sm:$0xf]
  %v1914 = vld [vmem:[%s1619 + $0x30] sm:$0xf]
  %v1915 = vld [vmem:[%s1619 + $0x34] sm:$0xf]
  %v1916 = vld [vmem:[%s1619 + $0x38] sm:$0xf]
  %v1917 = vld [vmem:[%s1619 + $0x3c] sm:$0xf]
  %v1934 = vunpack.c.l.b16 %v1902
  %v1935 = vunpack.c.l.b16 %v1903
  %v1936 = vunpack.c.l.b16 %v1904
  %v1937 = vunpack.c.l.b16 %v1905
  %v1938 = vunpack.c.l.b16 %v1906
  %v1939 = vunpack.c.l.b16 %v1907
  %v1940 = vunpack.c.l.b16 %v1908
  %v1941 = vunpack.c.l.b16 %v1909
  %v1942 = vunpack.c.l.b16 %v1910
  %v1943 = vunpack.c.l.b16 %v1911
  %v1944 = vunpack.c.l.b16 %v1912
  %v1945 = vunpack.c.l.b16 %v1913
  %v1946 = vunpack.c.l.b16 %v1914
  %v1947 = vunpack.c.l.b16 %v1915
  %v1948 = vunpack.c.l.b16 %v1916
  %v1949 = vunpack.c.l.b16 %v1917
  %v1950 = vpack.c.b16 %v1935, %v1934
  %v1951 = vpack.c.b16 %v1937, %v1936
  %v1952 = vpack.c.b16 %v1939, %v1938
  %v1953 = vpack.c.b16 %v1941, %v1940
  %v1954 = vpack.c.b16 %v1943, %v1942
  %v1955 = vpack.c.b16 %v1945, %v1944
  %v1956 = vpack.c.b16 %v1947, %v1946
  %v1957 = vpack.c.b16 %v1949, %v1948
  %1966 = vmatprep.subr.bf16.mxu0 0
  %1967 = vmatpush1.bf16.msra.mxu0 %v1950
  %1968 = vmatprep.subr.bf16.mxu0 0
  %1969 = vmatpush1.bf16.msra.mxu0 %v1951
  %1970 = vmatprep.subr.bf16.mxu0 0
  %1971 = vmatpush1.bf16.msra.mxu0 %v1952
  %1972 = vmatprep.subr.bf16.mxu0 0
  %1973 = vmatpush1.bf16.msra.mxu0 %v1953
  %1974 = vmatprep.subr.bf16.mxu0 0
  %1975 = vmatpush1.bf16.msra.mxu0 %v1954
  %1976 = vmatprep.subr.bf16.mxu0 0
  %1977 = vmatpush1.bf16.msra.mxu0 %v1955
  %1978 = vmatprep.subr.bf16.mxu0 0
  %1979 = vmatpush1.bf16.msra.mxu0 %v1956
  %1980 = vmatprep.subr.bf16.mxu0 0
  %1981 = vmatpush1.bf16.msra.mxu0 %v1957
  %1982 = vmatprep.subr.bf16.mxu0 0
  %1983 = vmatpush1.bf16.msra.mxu0 0
  %1984 = vmatprep.subr.bf16.mxu0 0
  %1985 = vmatpush1.bf16.msra.mxu0 0
  %1986 = vmatprep.subr.bf16.mxu0 0
  %1987 = vmatpush1.bf16.msra.mxu0 0
  %1988 = vmatprep.subr.bf16.mxu0 0
  %1989 = vmatpush1.bf16.msra.mxu0 0
  %1990 = vmatprep.subr.bf16.mxu0 0
  %1991 = vmatpush1.bf16.msra.mxu0 0
  %1992 = vmatprep.subr.bf16.mxu0 0
  %1993 = vmatpush1.bf16.msra.mxu0 0
  %1994 = vmatprep.subr.bf16.mxu0 0
  %1995 = vmatpush1.bf16.msra.mxu0 0
  %1996 = vmatprep.subr.bf16.mxu0 0
  %1997 = vmatpush1.bf16.msra.mxu0 0
  %1998 = vmatprep.mubr.bf16.mxu0 0
  %1999 = vmatmul.mubr.bf16.gmra.mrb[0].mxu0 %v1898
  %v2000 = vpop.f32.mrb[0].mxu0
  %v2001 = vadd.f32 0.0, %v2000
  %v2002 = vpop.f32.mrb[0].mxu0
  %v2003 = vpop.f32.mrb[0].mxu0
  %v2004 = vadd.f32 0.0, %v2003
  %v2005 = vpop.f32.mrb[0].mxu0
  %2006 = vdwg.mxu0
  %v2007 = vadd.f32 %v1900, %v2001
  %v2008 = vadd.f32 %v1901, %v2004
  %v2009 = vtanh.pop %v2007
  %v2010 = vtanh.pop %v2008
  %v2011 = vmul.f32 %v2009, 0.5
  %v2012 = vmul.f32 %v2010, 0.5
  %v2013 = vadd.f32 %v2011, 0.5
  %v2014 = vadd.f32 %v2012, 0.5
  %v2015 = vsel %vm32, %v2009, %v2013
  %v2016 = vsel %vm32, %v2010, %v2014
  %2017 = vrot.lane.b32.xlu0 %v2015, 64
  %v2018 = vpop.permute.xlu0 %2017
  %2019 = vrot.lane.b32.xlu0 %v2016, 64
  %v2020 = vpop.permute.xlu0 %2019
  %2021 = vrot.lane.b32.xlu0 %v2015, 32
  %v2022 = vpop.permute.xlu0 %2021
  %2023 = vrot.lane.b32.xlu0 %v2016, 32
  %v2024 = vpop.permute.xlu0 %2023
  %2025 = vrot.lane.b32.xlu0 %v2015, 96
  %v2026 = vpop.permute.xlu0 %2025
  %2027 = vrot.lane.b32.xlu0 %v2016, 96
  %v2028 = vpop.permute.xlu0 %2027
  %v2029 = vmul.f32 %v2018, %v1892
  %v2030 = vmul.f32 %v2020, %v1893
  %v2031 = vmul.f32 %v2022, %v2026
  %v2032 = vmul.f32 %v2024, %v2028
  %v2033 = vadd.f32 %v2029, %v2031
  %v2034 = vadd.f32 %v2030, %v2032
  %v2035 = vtanh.pop %v2033
  %v2036 = vtanh.pop %v2034
  %v2037 = vmul.f32 %v2015, %v2035
  %v2038 = vmul.f32 %v2016, %v2036
  %v2039 = vpack.c.bf16 %v2038, %v2037
  %2040 = vst [vmem:[%s706] sm:$0xff] %v2039
  %v2041 = vld [vmem:[%s708] sm:$0xff]
  %v2042 = vld [vmem:[%s708 + $0x8] sm:$0xff]
  %v2043 = vld [vmem:[%s1619] sm:$0xf]
  %v2044 = vld [vmem:[%s1619 + $0x4] sm:$0xf]
  %v2045 = vld [vmem:[%s1619 + $0x8] sm:$0xf]
  %v2046 = vld [vmem:[%s1619 + $0xc] sm:$0xf]
  %v2047 = vld [vmem:[%s1619 + $0x10] sm:$0xf]
  %v2048 = vld [vmem:[%s1619 + $0x14] sm:$0xf]
  %v2049 = vld [vmem:[%s1619 + $0x18] sm:$0xf]
  %v2050 = vld [vmem:[%s1619 + $0x1c] sm:$0xf]
  %v2051 = vld [vmem:[%s1619 + $0x20] sm:$0xf]
  %v2052 = vld [vmem:[%s1619 + $0x24] sm:$0xf]
  %v2053 = vld [vmem:[%s1619 + $0x28] sm:$0xf]
  %v2054 = vld [vmem:[%s1619 + $0x2c] sm:$0xf]
  %v2055 = vld [vmem:[%s1619 + $0x30] sm:$0xf]
  %v2056 = vld [vmem:[%s1619 + $0x34] sm:$0xf]
  %v2057 = vld [vmem:[%s1619 + $0x38] sm:$0xf]
  %v2058 = vld [vmem:[%s1619 + $0x3c] sm:$0xf]
  %v2075 = vunpack.c.l.b16 %v2043
  %v2076 = vunpack.c.l.b16 %v2044
  %v2077 = vunpack.c.l.b16 %v2045
  %v2078 = vunpack.c.l.b16 %v2046
  %v2079 = vunpack.c.l.b16 %v2047
  %v2080 = vunpack.c.l.b16 %v2048
  %v2081 = vunpack.c.l.b16 %v2049
  %v2082 = vunpack.c.l.b16 %v2050
  %v2083 = vunpack.c.l.b16 %v2051
  %v2084 = vunpack.c.l.b16 %v2052
  %v2085 = vunpack.c.l.b16 %v2053
  %v2086 = vunpack.c.l.b16 %v2054
  %v2087 = vunpack.c.l.b16 %v2055
  %v2088 = vunpack.c.l.b16 %v2056
  %v2089 = vunpack.c.l.b16 %v2057
  %v2090 = vunpack.c.l.b16 %v2058
  %v2091 = vpack.c.b16 %v2076, %v2075
  %v2092 = vpack.c.b16 %v2078, %v2077
  %v2093 = vpack.c.b16 %v2080, %v2079
  %v2094 = vpack.c.b16 %v2082, %v2081
  %v2095 = vpack.c.b16 %v2084, %v2083
  %v2096 = vpack.c.b16 %v2086, %v2085
  %v2097 = vpack.c.b16 %v2088, %v2087
  %v2098 = vpack.c.b16 %v2090, %v2089
  %2107 = vmatprep.subr.bf16.mxu0 0
  %2108 = vmatpush1.bf16.msra.mxu0 %v2091
  %2109 = vmatprep.subr.bf16.mxu0 0
  %2110 = vmatpush1.bf16.msra.mxu0 %v2092
  %2111 = vmatprep.subr.bf16.mxu0 0
  %2112 = vmatpush1.bf16.msra.mxu0 %v2093
  %2113 = vmatprep.subr.bf16.mxu0 0
  %2114 = vmatpush1.bf16.msra.mxu0 %v2094
  %2115 = vmatprep.subr.bf16.mxu0 0
  %2116 = vmatpush1.bf16.msra.mxu0 %v2095
  %2117 = vmatprep.subr.bf16.mxu0 0
  %2118 = vmatpush1.bf16.msra.mxu0 %v2096
  %2119 = vmatprep.subr.bf16.mxu0 0
  %2120 = vmatpush1.bf16.msra.mxu0 %v2097
  %2121 = vmatprep.subr.bf16.mxu0 0
  %2122 = vmatpush1.bf16.msra.mxu0 %v2098
  %2123 = vmatprep.subr.bf16.mxu0 0
  %2124 = vmatpush1.bf16.msra.mxu0 0
  %2125 = vmatprep.subr.bf16.mxu0 0
  %2126 = vmatpush1.bf16.msra.mxu0 0
  %2127 = vmatprep.subr.bf16.mxu0 0
  %2128 = vmatpush1.bf16.msra.mxu0 0
  %2129 = vmatprep.subr.bf16.mxu0 0
  %2130 = vmatpush1.bf16.msra.mxu0 0
  %2131 = vmatprep.subr.bf16.mxu0 0
  %2132 = vmatpush1.bf16.msra.mxu0 0
  %2133 = vmatprep.subr.bf16.mxu0 0
  %2134 = vmatpush1.bf16.msra.mxu0 0
  %2135 = vmatprep.subr.bf16.mxu0 0
  %2136 = vmatpush1.bf16.msra.mxu0 0
  %2137 = vmatprep.subr.bf16.mxu0 0
  %2138 = vmatpush1.bf16.msra.mxu0 0
  %2139 = vmatprep.mubr.bf16.mxu0 0
  %2140 = vmatmul.mubr.bf16.gmra.mrb[0].mxu0 %v2039
  %v2141 = vpop.f32.mrb[0].mxu0
  %v2142 = vadd.f32 0.0, %v2141
  %v2143 = vpop.f32.mrb[0].mxu0
  %v2144 = vpop.f32.mrb[0].mxu0
  %v2145 = vadd.f32 0.0, %v2144
  %v2146 = vpop.f32.mrb[0].mxu0
  %2147 = vdwg.mxu0
  %v2148 = vadd.f32 %v2041, %v2142
  %v2149 = vadd.f32 %v2042, %v2145
  %v2150 = vtanh.pop %v2148
  %v2151 = vtanh.pop %v2149
  %v2152 = vmul.f32 %v2150, 0.5
  %v2153 = vmul.f32 %v2151, 0.5
  %v2154 = vadd.f32 %v2152, 0.5
  %v2155 = vadd.f32 %v2153, 0.5
  %v2156 = vsel %vm32, %v2150, %v2154
  %v2157 = vsel %vm32, %v2151, %v2155
  %2158 = vrot.lane.b32.xlu0 %v2156, 64
  %v2159 = vpop.permute.xlu0 %2158
  %2160 = vrot.lane.b32.xlu0 %v2157, 64
  %v2161 = vpop.permute.xlu0 %2160
  %2162 = vrot.lane.b32.xlu0 %v2156, 32
  %v2163 = vpop.permute.xlu0 %2162
  %2164 = vrot.lane.b32.xlu0 %v2157, 32
  %v2165 = vpop.permute.xlu0 %2164
  %2166 = vrot.lane.b32.xlu0 %v2156, 96
  %v2167 = vpop.permute.xlu0 %2166
  %2168 = vrot.lane.b32.xlu0 %v2157, 96
  %v2169 = vpop.permute.xlu0 %2168
  %v2170 = vmul.f32 %v2159, %v2033
  %v2171 = vmul.f32 %v2161, %v2034
  %v2172 = vmul.f32 %v2163, %v2167
  %v2173 = vmul.f32 %v2165, %v2169
  %v2174 = vadd.f32 %v2170, %v2172
  %v2175 = vadd.f32 %v2171, %v2173
  %v2176 = vtanh.pop %v2174
  %v2177 = vtanh.pop %v2175
  %v2178 = vmul.f32 %v2156, %v2176
  %v2179 = vmul.f32 %v2157, %v2177
  %v2180 = vpack.c.bf16 %v2179, %v2178
  %2181 = vst [vmem:[%s849] sm:$0xff] %v2180
  %v2182 = vld [vmem:[%s851] sm:$0xff]
  %v2183 = vld [vmem:[%s851 + $0x8] sm:$0xff]
  %v2184 = vld [vmem:[%s1619] sm:$0xf]
  %v2185 = vld [vmem:[%s1619 + $0x4] sm:$0xf]
  %v2186 = vld [vmem:[%s1619 + $0x8] sm:$0xf]
  %v2187 = vld [vmem:[%s1619 + $0xc] sm:$0xf]
  %v2188 = vld [vmem:[%s1619 + $0x10] sm:$0xf]
  %v2189 = vld [vmem:[%s1619 + $0x14] sm:$0xf]
  %v2190 = vld [vmem:[%s1619 + $0x18] sm:$0xf]
  %v2191 = vld [vmem:[%s1619 + $0x1c] sm:$0xf]
  %v2192 = vld [vmem:[%s1619 + $0x20] sm:$0xf]
  %v2193 = vld [vmem:[%s1619 + $0x24] sm:$0xf]
  %v2194 = vld [vmem:[%s1619 + $0x28] sm:$0xf]
  %v2195 = vld [vmem:[%s1619 + $0x2c] sm:$0xf]
  %v2196 = vld [vmem:[%s1619 + $0x30] sm:$0xf]
  %v2197 = vld [vmem:[%s1619 + $0x34] sm:$0xf]
  %v2198 = vld [vmem:[%s1619 + $0x38] sm:$0xf]
  %v2199 = vld [vmem:[%s1619 + $0x3c] sm:$0xf]
  %v2216 = vunpack.c.l.b16 %v2184
  %v2217 = vunpack.c.l.b16 %v2185
  %v2218 = vunpack.c.l.b16 %v2186
  %v2219 = vunpack.c.l.b16 %v2187
  %v2220 = vunpack.c.l.b16 %v2188
  %v2221 = vunpack.c.l.b16 %v2189
  %v2222 = vunpack.c.l.b16 %v2190
  %v2223 = vunpack.c.l.b16 %v2191
  %v2224 = vunpack.c.l.b16 %v2192
  %v2225 = vunpack.c.l.b16 %v2193
  %v2226 = vunpack.c.l.b16 %v2194
  %v2227 = vunpack.c.l.b16 %v2195
  %v2228 = vunpack.c.l.b16 %v2196
  %v2229 = vunpack.c.l.b16 %v2197
  %v2230 = vunpack.c.l.b16 %v2198
  %v2231 = vunpack.c.l.b16 %v2199
  %v2232 = vpack.c.b16 %v2217, %v2216
  %v2233 = vpack.c.b16 %v2219, %v2218
  %v2234 = vpack.c.b16 %v2221, %v2220
  %v2235 = vpack.c.b16 %v2223, %v2222
  %v2236 = vpack.c.b16 %v2225, %v2224
  %v2237 = vpack.c.b16 %v2227, %v2226
  %v2238 = vpack.c.b16 %v2229, %v2228
  %v2239 = vpack.c.b16 %v2231, %v2230
  %2248 = vmatprep.subr.bf16.mxu0 0
  %2249 = vmatpush1.bf16.msra.mxu0 %v2232
  %2250 = vmatprep.subr.bf16.mxu0 0
  %2251 = vmatpush1.bf16.msra.mxu0 %v2233
  %2252 = vmatprep.subr.bf16.mxu0 0
  %2253 = vmatpush1.bf16.msra.mxu0 %v2234
  %2254 = vmatprep.subr.bf16.mxu0 0
  %2255 = vmatpush1.bf16.msra.mxu0 %v2235
  %2256 = vmatprep.subr.bf16.mxu0 0
  %2257 = vmatpush1.bf16.msra.mxu0 %v2236
  %2258 = vmatprep.subr.bf16.mxu0 0
  %2259 = vmatpush1.bf16.msra.mxu0 %v2237
  %2260 = vmatprep.subr.bf16.mxu0 0
  %2261 = vmatpush1.bf16.msra.mxu0 %v2238
  %2262 = vmatprep.subr.bf16.mxu0 0
  %2263 = vmatpush1.bf16.msra.mxu0 %v2239
  %2264 = vmatprep.subr.bf16.mxu0 0
  %2265 = vmatpush1.bf16.msra.mxu0 0
  %2266 = vmatprep.subr.bf16.mxu0 0
  %2267 = vmatpush1.bf16.msra.mxu0 0
  %2268 = vmatprep.subr.bf16.mxu0 0
  %2269 = vmatpush1.bf16.msra.mxu0 0
  %2270 = vmatprep.subr.bf16.mxu0 0
  %2271 = vmatpush1.bf16.msra.mxu0 0
  %2272 = vmatprep.subr.bf16.mxu0 0
  %2273 = vmatpush1.bf16.msra.mxu0 0
  %2274 = vmatprep.subr.bf16.mxu0 0
  %2275 = vmatpush1.bf16.msra.mxu0 0
  %2276 = vmatprep.subr.bf16.mxu0 0
  %2277 = vmatpush1.bf16.msra.mxu0 0
  %2278 = vmatprep.subr.bf16.mxu0 0
  %2279 = vmatpush1.bf16.msra.mxu0 0
  %2280 = vmatprep.mubr.bf16.mxu0 0
  %2281 = vmatmul.mubr.bf16.gmra.mrb[0].mxu0 %v2180
  %v2282 = vpop.f32.mrb[0].mxu0
  %v2283 = vadd.f32 0.0, %v2282
  %v2284 = vpop.f32.mrb[0].mxu0
  %v2285 = vpop.f32.mrb[0].mxu0
  %v2286 = vadd.f32 0.0, %v2285
  %v2287 = vpop.f32.mrb[0].mxu0
  %2288 = vdwg.mxu0
  %v2289 = vadd.f32 %v2182, %v2283
  %v2290 = vadd.f32 %v2183, %v2286
  %v2291 = vtanh.pop %v2289
  %v2292 = vtanh.pop %v2290
  %v2293 = vmul.f32 %v2291, 0.5
  %v2294 = vmul.f32 %v2292, 0.5
  %v2295 = vadd.f32 %v2293, 0.5
  %v2296 = vadd.f32 %v2294, 0.5
  %v2297 = vsel %vm32, %v2291, %v2295
  %v2298 = vsel %vm32, %v2292, %v2296
  %2299 = vrot.lane.b32.xlu0 %v2297, 64
  %v2300 = vpop.permute.xlu0 %2299
  %2301 = vrot.lane.b32.xlu0 %v2298, 64
  %v2302 = vpop.permute.xlu0 %2301
  %2303 = vrot.lane.b32.xlu0 %v2297, 32
  %v2304 = vpop.permute.xlu0 %2303
  %2305 = vrot.lane.b32.xlu0 %v2298, 32
  %v2306 = vpop.permute.xlu0 %2305
  %2307 = vrot.lane.b32.xlu0 %v2297, 96
  %v2308 = vpop.permute.xlu0 %2307
  %2309 = vrot.lane.b32.xlu0 %v2298, 96
  %v2310 = vpop.permute.xlu0 %2309
  %v2311 = vmul.f32 %v2300, %v2174
  %v2312 = vmul.f32 %v2302, %v2175
  %v2313 = vmul.f32 %v2304, %v2308
  %v2314 = vmul.f32 %v2306, %v2310
  %v2315 = vadd.f32 %v2311, %v2313
  %v2316 = vadd.f32 %v2312, %v2314
  %v2317 = vtanh.pop %v2315
  %v2318 = vtanh.pop %v2316
  %v2319 = vmul.f32 %v2297, %v2317
  %v2320 = vmul.f32 %v2298, %v2318
  %v2321 = vpack.c.bf16 %v2320, %v2319
  %2322 = vst [vmem:[%s992] sm:$0xff] %v2321
  %v2323 = vld [vmem:[%s994] sm:$0xff]
  %v2324 = vld [vmem:[%s994 + $0x8] sm:$0xff]
  %v2325 = vld [vmem:[%s1619] sm:$0xf]
  %v2326 = vld [vmem:[%s1619 + $0x4] sm:$0xf]
  %v2327 = vld [vmem:[%s1619 + $0x8] sm:$0xf]
  %v2328 = vld [vmem:[%s1619 + $0xc] sm:$0xf]
  %v2329 = vld [vmem:[%s1619 + $0x10] sm:$0xf]
  %v2330 = vld [vmem:[%s1619 + $0x14] sm:$0xf]
  %v2331 = vld [vmem:[%s1619 + $0x18] sm:$0xf]
  %v2332 = vld [vmem:[%s1619 + $0x1c] sm:$0xf]
  %v2333 = vld [vmem:[%s1619 + $0x20] sm:$0xf]
  %v2334 = vld [vmem:[%s1619 + $0x24] sm:$0xf]
  %v2335 = vld [vmem:[%s1619 + $0x28] sm:$0xf]
  %v2336 = vld [vmem:[%s1619 + $0x2c] sm:$0xf]
  %v2337 = vld [vmem:[%s1619 + $0x30] sm:$0xf]
  %v2338 = vld [vmem:[%s1619 + $0x34] sm:$0xf]
  %v2339 = vld [vmem:[%s1619 + $0x38] sm:$0xf]
  %v2340 = vld [vmem:[%s1619 + $0x3c] sm:$0xf]
  %v2357 = vunpack.c.l.b16 %v2325
  %v2358 = vunpack.c.l.b16 %v2326
  %v2359 = vunpack.c.l.b16 %v2327
  %v2360 = vunpack.c.l.b16 %v2328
  %v2361 = vunpack.c.l.b16 %v2329
  %v2362 = vunpack.c.l.b16 %v2330
  %v2363 = vunpack.c.l.b16 %v2331
  %v2364 = vunpack.c.l.b16 %v2332
  %v2365 = vunpack.c.l.b16 %v2333
  %v2366 = vunpack.c.l.b16 %v2334
  %v2367 = vunpack.c.l.b16 %v2335
  %v2368 = vunpack.c.l.b16 %v2336
  %v2369 = vunpack.c.l.b16 %v2337
  %v2370 = vunpack.c.l.b16 %v2338
  %v2371 = vunpack.c.l.b16 %v2339
  %v2372 = vunpack.c.l.b16 %v2340
  %v2373 = vpack.c.b16 %v2358, %v2357
  %v2374 = vpack.c.b16 %v2360, %v2359
  %v2375 = vpack.c.b16 %v2362, %v2361
  %v2376 = vpack.c.b16 %v2364, %v2363
  %v2377 = vpack.c.b16 %v2366, %v2365
  %v2378 = vpack.c.b16 %v2368, %v2367
  %v2379 = vpack.c.b16 %v2370, %v2369
  %v2380 = vpack.c.b16 %v2372, %v2371
  %2389 = vmatprep.subr.bf16.mxu0 0
  %2390 = vmatpush1.bf16.msra.mxu0 %v2373
  %2391 = vmatprep.subr.bf16.mxu0 0
  %2392 = vmatpush1.bf16.msra.mxu0 %v2374
  %2393 = vmatprep.subr.bf16.mxu0 0
  %2394 = vmatpush1.bf16.msra.mxu0 %v2375
  %2395 = vmatprep.subr.bf16.mxu0 0
  %2396 = vmatpush1.bf16.msra.mxu0 %v2376
  %2397 = vmatprep.subr.bf16.mxu0 0
  %2398 = vmatpush1.bf16.msra.mxu0 %v2377
  %2399 = vmatprep.subr.bf16.mxu0 0
  %2400 = vmatpush1.bf16.msra.mxu0 %v2378
  %2401 = vmatprep.subr.bf16.mxu0 0
  %2402 = vmatpush1.bf16.msra.mxu0 %v2379
  %2403 = vmatprep.subr.bf16.mxu0 0
  %2404 = vmatpush1.bf16.msra.mxu0 %v2380
  %2405 = vmatprep.subr.bf16.mxu0 0
  %2406 = vmatpush1.bf16.msra.mxu0 0
  %2407 = vmatprep.subr.bf16.mxu0 0
  %2408 = vmatpush1.bf16.msra.mxu0 0
  %2409 = vmatprep.subr.bf16.mxu0 0
  %2410 = vmatpush1.bf16.msra.mxu0 0
  %2411 = vmatprep.subr.bf16.mxu0 0
  %2412 = vmatpush1.bf16.msra.mxu0 0
  %2413 = vmatprep.subr.bf16.mxu0 0
  %2414 = vmatpush1.bf16.msra.mxu0 0
  %2415 = vmatprep.subr.bf16.mxu0 0
  %2416 = vmatpush1.bf16.msra.mxu0 0
  %2417 = vmatprep.subr.bf16.mxu0 0
  %2418 = vmatpush1.bf16.msra.mxu0 0
  %2419 = vmatprep.subr.bf16.mxu0 0
  %2420 = vmatpush1.bf16.msra.mxu0 0
  %2421 = vmatprep.mubr.bf16.mxu0 0
  %2422 = vmatmul.mubr.bf16.gmra.mrb[0].mxu0 %v2321
  %v2423 = vpop.f32.mrb[0].mxu0
  %v2424 = vadd.f32 0.0, %v2423
  %v2425 = vpop.f32.mrb[0].mxu0
  %v2426 = vpop.f32.mrb[0].mxu0
  %v2427 = vadd.f32 0.0, %v2426
  %v2428 = vpop.f32.mrb[0].mxu0
  %2429 = vdwg.mxu0
  %v2430 = vadd.f32 %v2323, %v2424
  %v2431 = vadd.f32 %v2324, %v2427
  %v2432 = vtanh.pop %v2430
  %v2433 = vtanh.pop %v2431
  %v2434 = vmul.f32 %v2432, 0.5
  %v2435 = vmul.f32 %v2433, 0.5
  %v2436 = vadd.f32 %v2434, 0.5
  %v2437 = vadd.f32 %v2435, 0.5
  %v2438 = vsel %vm32, %v2432, %v2436
  %v2439 = vsel %vm32, %v2433, %v2437
  %2440 = vrot.lane.b32.xlu0 %v2438, 64
  %v2441 = vpop.permute.xlu0 %2440
  %2442 = vrot.lane.b32.xlu0 %v2439, 64
  %v2443 = vpop.permute.xlu0 %2442
  %2444 = vrot.lane.b32.xlu0 %v2438, 32
  %v2445 = vpop.permute.xlu0 %2444
  %2446 = vrot.lane.b32.xlu0 %v2439, 32
  %v2447 = vpop.permute.xlu0 %2446
  %2448 = vrot.lane.b32.xlu0 %v2438, 96
  %v2449 = vpop.permute.xlu0 %2448
  %2450 = vrot.lane.b32.xlu0 %v2439, 96
  %v2451 = vpop.permute.xlu0 %2450
  %v2452 = vmul.f32 %v2441, %v2315
  %v2453 = vmul.f32 %v2443, %v2316
  %v2454 = vmul.f32 %v2445, %v2449
  %v2455 = vmul.f32 %v2447, %v2451
  %v2456 = vadd.f32 %v2452, %v2454
  %v2457 = vadd.f32 %v2453, %v2455
  %v2458 = vtanh.pop %v2456
  %v2459 = vtanh.pop %v2457
  %v2460 = vmul.f32 %v2438, %v2458
  %v2461 = vmul.f32 %v2439, %v2459
  %v2462 = vpack.c.bf16 %v2461, %v2460
  %2463 = vst [vmem:[%s1135] sm:$0xff] %v2462
  %v2464 = vld [vmem:[%s1137] sm:$0xff]
  %v2465 = vld [vmem:[%s1137 + $0x8] sm:$0xff]
  %v2466 = vld [vmem:[%s1619] sm:$0xf]
  %v2467 = vld [vmem:[%s1619 + $0x4] sm:$0xf]
  %v2468 = vld [vmem:[%s1619 + $0x8] sm:$0xf]
  %v2469 = vld [vmem:[%s1619 + $0xc] sm:$0xf]
  %v2470 = vld [vmem:[%s1619 + $0x10] sm:$0xf]
  %v2471 = vld [vmem:[%s1619 + $0x14] sm:$0xf]
  %v2472 = vld [vmem:[%s1619 + $0x18] sm:$0xf]
  %v2473 = vld [vmem:[%s1619 + $0x1c] sm:$0xf]
  %v2474 = vld [vmem:[%s1619 + $0x20] sm:$0xf]
  %v2475 = vld [vmem:[%s1619 + $0x24] sm:$0xf]
  %v2476 = vld [vmem:[%s1619 + $0x28] sm:$0xf]
  %v2477 = vld [vmem:[%s1619 + $0x2c] sm:$0xf]
  %v2478 = vld [vmem:[%s1619 + $0x30] sm:$0xf]
  %v2479 = vld [vmem:[%s1619 + $0x34] sm:$0xf]
  %v2480 = vld [vmem:[%s1619 + $0x38] sm:$0xf]
  %v2481 = vld [vmem:[%s1619 + $0x3c] sm:$0xf]
  %v2498 = vunpack.c.l.b16 %v2466
  %v2499 = vunpack.c.l.b16 %v2467
  %v2500 = vunpack.c.l.b16 %v2468
  %v2501 = vunpack.c.l.b16 %v2469
  %v2502 = vunpack.c.l.b16 %v2470
  %v2503 = vunpack.c.l.b16 %v2471
  %v2504 = vunpack.c.l.b16 %v2472
  %v2505 = vunpack.c.l.b16 %v2473
  %v2506 = vunpack.c.l.b16 %v2474
  %v2507 = vunpack.c.l.b16 %v2475
  %v2508 = vunpack.c.l.b16 %v2476
  %v2509 = vunpack.c.l.b16 %v2477
  %v2510 = vunpack.c.l.b16 %v2478
  %v2511 = vunpack.c.l.b16 %v2479
  %v2512 = vunpack.c.l.b16 %v2480
  %v2513 = vunpack.c.l.b16 %v2481
  %v2514 = vpack.c.b16 %v2499, %v2498
  %v2515 = vpack.c.b16 %v2501, %v2500
  %v2516 = vpack.c.b16 %v2503, %v2502
  %v2517 = vpack.c.b16 %v2505, %v2504
  %v2518 = vpack.c.b16 %v2507, %v2506
  %v2519 = vpack.c.b16 %v2509, %v2508
  %v2520 = vpack.c.b16 %v2511, %v2510
  %v2521 = vpack.c.b16 %v2513, %v2512
  %2530 = vmatprep.subr.bf16.mxu0 0
  %2531 = vmatpush1.bf16.msra.mxu0 %v2514
  %2532 = vmatprep.subr.bf16.mxu0 0
  %2533 = vmatpush1.bf16.msra.mxu0 %v2515
  %2534 = vmatprep.subr.bf16.mxu0 0
  %2535 = vmatpush1.bf16.msra.mxu0 %v2516
  %2536 = vmatprep.subr.bf16.mxu0 0
  %2537 = vmatpush1.bf16.msra.mxu0 %v2517
  %2538 = vmatprep.subr.bf16.mxu0 0
  %2539 = vmatpush1.bf16.msra.mxu0 %v2518
  %2540 = vmatprep.subr.bf16.mxu0 0
  %2541 = vmatpush1.bf16.msra.mxu0 %v2519
  %2542 = vmatprep.subr.bf16.mxu0 0
  %2543 = vmatpush1.bf16.msra.mxu0 %v2520
  %2544 = vmatprep.subr.bf16.mxu0 0
  %2545 = vmatpush1.bf16.msra.mxu0 %v2521
  %2546 = vmatprep.subr.bf16.mxu0 0
  %2547 = vmatpush1.bf16.msra.mxu0 0
  %2548 = vmatprep.subr.bf16.mxu0 0
  %2549 = vmatpush1.bf16.msra.mxu0 0
  %2550 = vmatprep.subr.bf16.mxu0 0
  %2551 = vmatpush1.bf16.msra.mxu0 0
  %2552 = vmatprep.subr.bf16.mxu0 0
  %2553 = vmatpush1.bf16.msra.mxu0 0
  %2554 = vmatprep.subr.bf16.mxu0 0
  %2555 = vmatpush1.bf16.msra.mxu0 0
  %2556 = vmatprep.subr.bf16.mxu0 0
  %2557 = vmatpush1.bf16.msra.mxu0 0
  %2558 = vmatprep.subr.bf16.mxu0 0
  %2559 = vmatpush1.bf16.msra.mxu0 0
  %2560 = vmatprep.subr.bf16.mxu0 0
  %2561 = vmatpush1.bf16.msra.mxu0 0
  %2562 = vmatprep.mubr.bf16.mxu0 0
  %2563 = vmatmul.mubr.bf16.gmra.mrb[0].mxu0 %v2462
  %v2564 = vpop.f32.mrb[0].mxu0
  %v2565 = vadd.f32 0.0, %v2564
  %v2566 = vpop.f32.mrb[0].mxu0
  %v2567 = vpop.f32.mrb[0].mxu0
  %v2568 = vadd.f32 0.0, %v2567
  %v2569 = vpop.f32.mrb[0].mxu0
  %2570 = vdwg.mxu0
  %v2571 = vadd.f32 %v2464, %v2565
  %v2572 = vadd.f32 %v2465, %v2568
  %v2573 = vtanh.pop %v2571
  %v2574 = vtanh.pop %v2572
  %v2575 = vmul.f32 %v2573, 0.5
  %v2576 = vmul.f32 %v2574, 0.5
  %v2577 = vadd.f32 %v2575, 0.5
  %v2578 = vadd.f32 %v2576, 0.5
  %v2579 = vsel %vm32, %v2573, %v2577
  %v2580 = vsel %vm32, %v2574, %v2578
  %2581 = vrot.lane.b32.xlu0 %v2579, 64
  %v2582 = vpop.permute.xlu0 %2581
  %2583 = vrot.lane.b32.xlu0 %v2580, 64
  %v2584 = vpop.permute.xlu0 %2583
  %2585 = vrot.lane.b32.xlu0 %v2579, 32
  %v2586 = vpop.permute.xlu0 %2585
  %2587 = vrot.lane.b32.xlu0 %v2580, 32
  %v2588 = vpop.permute.xlu0 %2587
  %2589 = vrot.lane.b32.xlu0 %v2579, 96
  %v2590 = vpop.permute.xlu0 %2589
  %2591 = vrot.lane.b32.xlu0 %v2580, 96
  %v2592 = vpop.permute.xlu0 %2591
  %v2593 = vmul.f32 %v2582, %v2456
  %v2594 = vmul.f32 %v2584, %v2457
  %v2595 = vmul.f32 %v2586, %v2590
  %v2596 = vmul.f32 %v2588, %v2592
  %v2597 = vadd.f32 %v2593, %v2595
  %v2598 = vadd.f32 %v2594, %v2596
  %v2599 = vtanh.pop %v2597
  %v2600 = vtanh.pop %v2598
  %v2601 = vmul.f32 %v2579, %v2599
  %v2602 = vmul.f32 %v2580, %v2600
  %v2603 = vpack.c.bf16 %v2602, %v2601
  %2604 = vst [vmem:[%s1278] sm:$0xff] %v2603
  %v2605 = vld [vmem:[%s1280] sm:$0xff]
  %v2606 = vld [vmem:[%s1280 + $0x8] sm:$0xff]
  %v2607 = vld [vmem:[%s1619] sm:$0xf]
  %v2608 = vld [vmem:[%s1619 + $0x4] sm:$0xf]
  %v2609 = vld [vmem:[%s1619 + $0x8] sm:$0xf]
  %v2610 = vld [vmem:[%s1619 + $0xc] sm:$0xf]
  %v2611 = vld [vmem:[%s1619 + $0x10] sm:$0xf]
  %v2612 = vld [vmem:[%s1619 + $0x14] sm:$0xf]
  %v2613 = vld [vmem:[%s1619 + $0x18] sm:$0xf]
  %v2614 = vld [vmem:[%s1619 + $0x1c] sm:$0xf]
  %v2615 = vld [vmem:[%s1619 + $0x20] sm:$0xf]
  %v2616 = vld [vmem:[%s1619 + $0x24] sm:$0xf]
  %v2617 = vld [vmem:[%s1619 + $0x28] sm:$0xf]
  %v2618 = vld [vmem:[%s1619 + $0x2c] sm:$0xf]
  %v2619 = vld [vmem:[%s1619 + $0x30] sm:$0xf]
  %v2620 = vld [vmem:[%s1619 + $0x34] sm:$0xf]
  %v2621 = vld [vmem:[%s1619 + $0x38] sm:$0xf]
  %v2622 = vld [vmem:[%s1619 + $0x3c] sm:$0xf]
  %v2639 = vunpack.c.l.b16 %v2607
  %v2640 = vunpack.c.l.b16 %v2608
  %v2641 = vunpack.c.l.b16 %v2609
  %v2642 = vunpack.c.l.b16 %v2610
  %v2643 = vunpack.c.l.b16 %v2611
  %v2644 = vunpack.c.l.b16 %v2612
  %v2645 = vunpack.c.l.b16 %v2613
  %v2646 = vunpack.c.l.b16 %v2614
  %v2647 = vunpack.c.l.b16 %v2615
  %v2648 = vunpack.c.l.b16 %v2616
  %v2649 = vunpack.c.l.b16 %v2617
  %v2650 = vunpack.c.l.b16 %v2618
  %v2651 = vunpack.c.l.b16 %v2619
  %v2652 = vunpack.c.l.b16 %v2620
  %v2653 = vunpack.c.l.b16 %v2621
  %v2654 = vunpack.c.l.b16 %v2622
  %v2655 = vpack.c.b16 %v2640, %v2639
  %v2656 = vpack.c.b16 %v2642, %v2641
  %v2657 = vpack.c.b16 %v2644, %v2643
  %v2658 = vpack.c.b16 %v2646, %v2645
  %v2659 = vpack.c.b16 %v2648, %v2647
  %v2660 = vpack.c.b16 %v2650, %v2649
  %v2661 = vpack.c.b16 %v2652, %v2651
  %v2662 = vpack.c.b16 %v2654, %v2653
  %2671 = vmatprep.subr.bf16.mxu0 0
  %2672 = vmatpush1.bf16.msra.mxu0 %v2655
  %2673 = vmatprep.subr.bf16.mxu0 0
  %2674 = vmatpush1.bf16.msra.mxu0 %v2656
  %2675 = vmatprep.subr.bf16.mxu0 0
  %2676 = vmatpush1.bf16.msra.mxu0 %v2657
  %2677 = vmatprep.subr.bf16.mxu0 0
  %2678 = vmatpush1.bf16.msra.mxu0 %v2658
  %2679 = vmatprep.subr.bf16.mxu0 0
  %2680 = vmatpush1.bf16.msra.mxu0 %v2659
  %2681 = vmatprep.subr.bf16.mxu0 0
  %2682 = vmatpush1.bf16.msra.mxu0 %v2660
  %2683 = vmatprep.subr.bf16.mxu0 0
  %2684 = vmatpush1.bf16.msra.mxu0 %v2661
  %2685 = vmatprep.subr.bf16.mxu0 0
  %2686 = vmatpush1.bf16.msra.mxu0 %v2662
  %2687 = vmatprep.subr.bf16.mxu0 0
  %2688 = vmatpush1.bf16.msra.mxu0 0
  %2689 = vmatprep.subr.bf16.mxu0 0
  %2690 = vmatpush1.bf16.msra.mxu0 0
  %2691 = vmatprep.subr.bf16.mxu0 0
  %2692 = vmatpush1.bf16.msra.mxu0 0
  %2693 = vmatprep.subr.bf16.mxu0 0
  %2694 = vmatpush1.bf16.msra.mxu0 0
  %2695 = vmatprep.subr.bf16.mxu0 0
  %2696 = vmatpush1.bf16.msra.mxu0 0
  %2697 = vmatprep.subr.bf16.mxu0 0
  %2698 = vmatpush1.bf16.msra.mxu0 0
  %2699 = vmatprep.subr.bf16.mxu0 0
  %2700 = vmatpush1.bf16.msra.mxu0 0
  %2701 = vmatprep.subr.bf16.mxu0 0
  %2702 = vmatpush1.bf16.msra.mxu0 0
  %2703 = vmatprep.mubr.bf16.mxu0 0
  %2704 = vmatmul.mubr.bf16.gmra.mrb[0].mxu0 %v2603
  %v2705 = vpop.f32.mrb[0].mxu0
  %v2706 = vadd.f32 0.0, %v2705
  %v2707 = vpop.f32.mrb[0].mxu0
  %v2708 = vpop.f32.mrb[0].mxu0
  %v2709 = vadd.f32 0.0, %v2708
  %v2710 = vpop.f32.mrb[0].mxu0
  %2711 = vdwg.mxu0
  %v2712 = vadd.f32 %v2605, %v2706
  %v2713 = vadd.f32 %v2606, %v2709
  %v2714 = vtanh.pop %v2712
  %v2715 = vtanh.pop %v2713
  %v2716 = vmul.f32 %v2714, 0.5
  %v2717 = vmul.f32 %v2715, 0.5
  %v2718 = vadd.f32 %v2716, 0.5
  %v2719 = vadd.f32 %v2717, 0.5
  %v2720 = vsel %vm32, %v2714, %v2718
  %v2721 = vsel %vm32, %v2715, %v2719
  %2722 = vrot.lane.b32.xlu0 %v2720, 64
  %v2723 = vpop.permute.xlu0 %2722
  %2724 = vrot.lane.b32.xlu0 %v2721, 64
  %v2725 = vpop.permute.xlu0 %2724
  %2726 = vrot.lane.b32.xlu0 %v2720, 32
  %v2727 = vpop.permute.xlu0 %2726
  %2728 = vrot.lane.b32.xlu0 %v2721, 32
  %v2729 = vpop.permute.xlu0 %2728
  %2730 = vrot.lane.b32.xlu0 %v2720, 96
  %v2731 = vpop.permute.xlu0 %2730
  %2732 = vrot.lane.b32.xlu0 %v2721, 96
  %v2733 = vpop.permute.xlu0 %2732
  %v2734 = vmul.f32 %v2723, %v2597
  %v2735 = vmul.f32 %v2725, %v2598
  %v2736 = vmul.f32 %v2727, %v2731
  %v2737 = vmul.f32 %v2729, %v2733
  %v2738 = vadd.f32 %v2734, %v2736
  %v2739 = vadd.f32 %v2735, %v2737
  %v2740 = vtanh.pop %v2738
  %v2741 = vtanh.pop %v2739
  %v2742 = vmul.f32 %v2720, %v2740
  %v2743 = vmul.f32 %v2721, %v2741
  %v2744 = vpack.c.bf16 %v2743, %v2742
  %2745 = vst [vmem:[%s1421] sm:$0xff] %v2744
  %v2746 = vld [vmem:[#allocation2] sm:$0xff]
  %v2747 = vld [vmem:[#allocation2 + $0x8] sm:$0xff]
  %v2748 = vld [vmem:[#allocation2 + $0x10] sm:$0xff]
  %v2749 = vld [vmem:[#allocation2 + $0x18] sm:$0xff]
  %v2750 = vld [vmem:[#allocation2 + $0x20] sm:$0xff]
  %v2751 = vld [vmem:[#allocation2 + $0x28] sm:$0xff]
  %v2752 = vld [vmem:[#allocation2 + $0x30] sm:$0xff]
  %v2753 = vld [vmem:[#allocation2 + $0x38] sm:$0xff]
  %v2754 = vld [vmem:[%s4] sm:$0xf]
  %v2755 = vld [vmem:[%s4 + $0x4] sm:$0xf]
  %v2756 = vld [vmem:[%s4 + $0x8] sm:$0xf]
  %v2757 = vld [vmem:[%s4 + $0xc] sm:$0xf]
  %v2758 = vld [vmem:[%s4 + $0x10] sm:$0xf]
  %v2759 = vld [vmem:[%s4 + $0x14] sm:$0xf]
  %v2760 = vld [vmem:[%s4 + $0x18] sm:$0xf]
  %v2761 = vld [vmem:[%s4 + $0x1c] sm:$0xf]
  %v2762 = vld [vmem:[%s4 + $0x20] sm:$0xf]
  %v2763 = vld [vmem:[%s4 + $0x24] sm:$0xf]
  %v2764 = vld [vmem:[%s4 + $0x28] sm:$0xf]
  %v2765 = vld [vmem:[%s4 + $0x2c] sm:$0xf]
  %v2766 = vld [vmem:[%s4 + $0x30] sm:$0xf]
  %v2767 = vld [vmem:[%s4 + $0x34] sm:$0xf]
  %v2768 = vld [vmem:[%s4 + $0x38] sm:$0xf]
  %v2769 = vld [vmem:[%s4 + $0x3c] sm:$0xf]
  %v2770 = vld [vmem:[%s5] sm:$0xff]
  %v2771 = vld [vmem:[%s5 + $0x8] sm:$0xff]
  %v2772 = vld [vmem:[%s5 + $0x10] sm:$0xff]
  %v2773 = vld [vmem:[%s5 + $0x18] sm:$0xff]
  %v2774 = vld [vmem:[%s5 + $0x20] sm:$0xff]
  %v2775 = vld [vmem:[%s5 + $0x28] sm:$0xff]
  %v2776 = vld [vmem:[%s5 + $0x30] sm:$0xff]
  %v2777 = vld [vmem:[%s5 + $0x38] sm:$0xff]
  %v2778 = vld [vmem:[%s5 + $0x40] sm:$0xff]
  %v2779 = vld [vmem:[%s5 + $0x48] sm:$0xff]
  %v2780 = vld [vmem:[%s5 + $0x50] sm:$0xff]
  %v2781 = vld [vmem:[%s5 + $0x58] sm:$0xff]
  %v2782 = vld [vmem:[%s5 + $0x60] sm:$0xff]
  %v2783 = vld [vmem:[%s5 + $0x68] sm:$0xff]
  %v2784 = vld [vmem:[%s5 + $0x70] sm:$0xff]
  %v2785 = vld [vmem:[%s5 + $0x78] sm:$0xff]
  %2787 = vset.pattern.permute.xlu0 0
  %2788 = vperm.xlu0 %2787, %v2770
  %v2789 = vpop.permute.xlu0 %2788
  %2792 = vset.pattern.permute.xlu0 0
  %2793 = vperm.xlu0 %2792, %v2771
  %v2794 = vpop.permute.xlu0 %2793
  %2797 = vset.pattern.permute.xlu0 0
  %2798 = vperm.xlu0 %2797, %v2772
  %v2799 = vpop.permute.xlu0 %2798
  %2802 = vset.pattern.permute.xlu0 0
  %2803 = vperm.xlu0 %2802, %v2773
  %v2804 = vpop.permute.xlu0 %2803
  %2807 = vset.pattern.permute.xlu0 0
  %2808 = vperm.xlu0 %2807, %v2774
  %v2809 = vpop.permute.xlu0 %2808
  %2812 = vset.pattern.permute.xlu0 0
  %2813 = vperm.xlu0 %2812, %v2775
  %v2814 = vpop.permute.xlu0 %2813
  %2817 = vset.pattern.permute.xlu0 0
  %2818 = vperm.xlu0 %2817, %v2776
  %v2819 = vpop.permute.xlu0 %2818
  %2822 = vset.pattern.permute.xlu0 0
  %2823 = vperm.xlu0 %2822, %v2777
  %v2824 = vpop.permute.xlu0 %2823
  %2827 = vset.pattern.permute.xlu0 0
  %2828 = vperm.xlu0 %2827, %v2778
  %v2829 = vpop.permute.xlu0 %2828
  %2832 = vset.pattern.permute.xlu0 0
  %2833 = vperm.xlu0 %2832, %v2779
  %v2834 = vpop.permute.xlu0 %2833
  %2837 = vset.pattern.permute.xlu0 0
  %2838 = vperm.xlu0 %2837, %v2780
  %v2839 = vpop.permute.xlu0 %2838
  %2842 = vset.pattern.permute.xlu0 0
  %2843 = vperm.xlu0 %2842, %v2781
  %v2844 = vpop.permute.xlu0 %2843
  %2847 = vset.pattern.permute.xlu0 0
  %2848 = vperm.xlu0 %2847, %v2782
  %v2849 = vpop.permute.xlu0 %2848
  %2852 = vset.pattern.permute.xlu0 0
  %2853 = vperm.xlu0 %2852, %v2783
  %v2854 = vpop.permute.xlu0 %2853
  %2857 = vset.pattern.permute.xlu0 0
  %2858 = vperm.xlu0 %2857, %v2784
  %v2859 = vpop.permute.xlu0 %2858
  %2862 = vset.pattern.permute.xlu0 0
  %2863 = vperm.xlu0 %2862, %v2785
  %v2864 = vpop.permute.xlu0 %2863
  %v2882 = vunpack.c.l.b16 %v2754
  %v2883 = vunpack.c.l.b16 %v2755
  %v2884 = vunpack.c.l.b16 %v2756
  %v2885 = vunpack.c.l.b16 %v2757
  %v2886 = vunpack.c.l.b16 %v2758
  %v2887 = vunpack.c.l.b16 %v2759
  %v2888 = vunpack.c.l.b16 %v2760
  %v2889 = vunpack.c.l.b16 %v2761
  %v2890 = vunpack.c.l.b16 %v2762
  %v2891 = vunpack.c.l.b16 %v2763
  %v2892 = vunpack.c.l.b16 %v2764
  %v2893 = vunpack.c.l.b16 %v2765
  %v2894 = vunpack.c.l.b16 %v2766
  %v2895 = vunpack.c.l.b16 %v2767
  %v2896 = vunpack.c.l.b16 %v2768
  %v2897 = vunpack.c.l.b16 %v2769
  %v2898 = vpack.c.b16 %v2883, %v2882
  %v2899 = vpack.c.b16 %v2885, %v2884
  %v2900 = vpack.c.b16 %v2887, %v2886
  %v2901 = vpack.c.b16 %v2889, %v2888
  %v2902 = vpack.c.b16 %v2891, %v2890
  %v2903 = vpack.c.b16 %v2893, %v2892
  %v2904 = vpack.c.b16 %v2895, %v2894
  %v2905 = vpack.c.b16 %v2897, %v2896
  %2914 = vmatprep.subr.bf16.mxu0 0
  %2915 = vmatpush1.bf16.xpose.msra.mxu0 %v2746
  %2916 = vmatprep.subr.bf16.mxu0 0
  %2917 = vmatpush1.bf16.xpose.msra.mxu0 %v2747
  %2918 = vmatprep.subr.bf16.mxu0 0
  %2919 = vmatpush1.bf16.xpose.msra.mxu0 %v2748
  %2920 = vmatprep.subr.bf16.mxu0 0
  %2921 = vmatpush1.bf16.xpose.msra.mxu0 %v2749
  %2922 = vmatprep.subr.bf16.mxu0 0
  %2923 = vmatpush1.bf16.xpose.msra.mxu0 %v2750
  %2924 = vmatprep.subr.bf16.mxu0 0
  %2925 = vmatpush1.bf16.xpose.msra.mxu0 %v2751
  %2926 = vmatprep.subr.bf16.mxu0 0
  %2927 = vmatpush1.bf16.xpose.msra.mxu0 %v2752
  %2928 = vmatprep.subr.bf16.mxu0 0
  %2929 = vmatpush1.bf16.xpose.msra.mxu0 %v2753
  %2930 = vmatprep.subr.bf16.mxu0 0
  %2931 = vmatpush1.bf16.xpose.msra.mxu0 0
  %2932 = vmatprep.subr.bf16.mxu0 0
  %2933 = vmatpush1.bf16.xpose.msra.mxu0 0
  %2934 = vmatprep.subr.bf16.mxu0 0
  %2935 = vmatpush1.bf16.xpose.msra.mxu0 0
  %2936 = vmatprep.subr.bf16.mxu0 0
  %2937 = vmatpush1.bf16.xpose.msra.mxu0 0
  %2938 = vmatprep.subr.bf16.mxu0 0
  %2939 = vmatpush1.bf16.xpose.msra.mxu0 0
  %2940 = vmatprep.subr.bf16.mxu0 0
  %2941 = vmatpush1.bf16.xpose.msra.mxu0 0
  %2942 = vmatprep.subr.bf16.mxu0 0
  %2943 = vmatpush1.bf16.xpose.msra.mxu0 0
  %2944 = vmatprep.subr.bf16.mxu0 0
  %2945 = vmatpush1.bf16.xpose.msra.mxu0 0
  %2946 = vmatprep.mubr.bf16.mxu0 0
  %2947 = vmatmul.mubr.bf16.gmra.mrb[0].mxu0 %v2898
  %v2948 = vpop.f32.mrb[0].mxu0
  %v2949 = vadd.f32 %v2789, %v2948
  %v2950 = vpop.f32.mrb[0].mxu0
  %v2951 = vpop.f32.mrb[0].mxu0
  %v2952 = vadd.f32 %v2794, %v2951
  %v2953 = vpop.f32.mrb[0].mxu0
  %2954 = vmatprep.mubr.bf16.mxu0 0
  %2955 = vmatmul.mubr.bf16.gmra.mrb[0].mxu0 %v2899
  %v2956 = vpop.f32.mrb[0].mxu0
  %v2957 = vadd.f32 %v2799, %v2956
  %v2958 = vpop.f32.mrb[0].mxu0
  %v2959 = vpop.f32.mrb[0].mxu0
  %v2960 = vadd.f32 %v2804, %v2959
  %v2961 = vpop.f32.mrb[0].mxu0
  %2962 = vmatprep.mubr.bf16.mxu0 0
  %2963 = vmatmul.mubr.bf16.gmra.mrb[0].mxu0 %v2900
  %v2964 = vpop.f32.mrb[0].mxu0
  %v2965 = vadd.f32 %v2809, %v2964
  %v2966 = vpop.f32.mrb[0].mxu0
  %v2967 = vpop.f32.mrb[0].mxu0
  %v2968 = vadd.f32 %v2814, %v2967
  %v2969 = vpop.f32.mrb[0].mxu0
  %2970 = vmatprep.mubr.bf16.mxu0 0
  %2971 = vmatmul.mubr.bf16.gmra.mrb[0].mxu0 %v2901
  %v2972 = vpop.f32.mrb[0].mxu0
  %v2973 = vadd.f32 %v2819, %v2972
  %v2974 = vpop.f32.mrb[0].mxu0
  %v2975 = vpop.f32.mrb[0].mxu0
  %v2976 = vadd.f32 %v2824, %v2975
  %v2977 = vpop.f32.mrb[0].mxu0
  %2978 = vmatprep.mubr.bf16.mxu0 0
  %2979 = vmatmul.mubr.bf16.gmra.mrb[0].mxu0 %v2902
  %v2980 = vpop.f32.mrb[0].mxu0
  %v2981 = vadd.f32 %v2829, %v2980
  %v2982 = vpop.f32.mrb[0].mxu0
  %v2983 = vpop.f32.mrb[0].mxu0
  %v2984 = vadd.f32 %v2834, %v2983
  %v2985 = vpop.f32.mrb[0].mxu0
  %2986 = vmatprep.mubr.bf16.mxu0 0
  %2987 = vmatmul.mubr.bf16.gmra.mrb[0].mxu0 %v2903
  %v2988 = vpop.f32.mrb[0].mxu0
  %v2989 = vadd.f32 %v2839, %v2988
  %v2990 = vpop.f32.mrb[0].mxu0
  %v2991 = vpop.f32.mrb[0].mxu0
  %v2992 = vadd.f32 %v2844, %v2991
  %v2993 = vpop.f32.mrb[0].mxu0
  %2994 = vmatprep.mubr.bf16.mxu0 0
  %2995 = vmatmul.mubr.bf16.gmra.mrb[0].mxu0 %v2904
  %v2996 = vpop.f32.mrb[0].mxu0
  %v2997 = vadd.f32 %v2849, %v2996
  %v2998 = vpop.f32.mrb[0].mxu0
  %v2999 = vpop.f32.mrb[0].mxu0
  %v3000 = vadd.f32 %v2854, %v2999
  %v3001 = vpop.f32.mrb[0].mxu0
  %3002 = vmatprep.mubr.bf16.mxu0 0
  %3003 = vmatmul.mubr.bf16.gmra.mrb[0].mxu0 %v2905
  %v3004 = vpop.f32.mrb[0].mxu0
  %v3005 = vadd.f32 %v2859, %v3004
  %v3006 = vpop.f32.mrb[0].mxu0
  %v3007 = vpop.f32.mrb[0].mxu0
  %v3008 = vadd.f32 %v2864, %v3007
  %v3009 = vpop.f32.mrb[0].mxu0
  %3010 = vdwg.mxu0
  %v3011 = vmax.f32 %v2949, %v2965
  %v3012 = vmax.f32 %v2952, %v2968
  %v3013 = vmax.f32 %v2957, %v2973
  %v3014 = vmax.f32 %v2960, %v2976
  %v3015 = vmax.f32 %v3011, %v2981
  %v3016 = vmax.f32 %v3012, %v2984
  %v3017 = vmax.f32 %v3013, %v2989
  %v3018 = vmax.f32 %v3014, %v2992
  %v3019 = vmax.f32 %v3015, %v2997
  %v3020 = vmax.f32 %v3016, %v3000
  %v3021 = vmax.f32 %v3017, %v3005
  %v3022 = vmax.f32 %v3018, %v3008
  %v3023 = vmax.f32 %v3019, %v3020
  %v3024 = vmax.f32 %v3021, %v3022
  %v3025 = vmax.f32 %v3023, %v3024
  %v3026 = vrot.slane %v3025, 4
  %v3027 = vmax.f32 %v3025, %v3026
  %v3028 = vrot.slane %v3027, 2
  %v3029 = vmax.f32 %v3027, %v3028
  %v3030 = vrot.slane %v3029, 1
  %v3031 = vmax.f32 %v3029, %v3030
  %v3032 = vsub.f32 %v2949, %v3031
  %v3033 = vsub.f32 %v2952, %v3031
  %v3034 = vsub.f32 %v2957, %v3031
  %v3035 = vsub.f32 %v2960, %v3031
  %v3036 = vsub.f32 %v2965, %v3031
  %v3037 = vsub.f32 %v2968, %v3031
  %v3038 = vsub.f32 %v2973, %v3031
  %v3039 = vsub.f32 %v2976, %v3031
  %v3040 = vsub.f32 %v2981, %v3031
  %v3041 = vsub.f32 %v2984, %v3031
  %v3042 = vsub.f32 %v2989, %v3031
  %v3043 = vsub.f32 %v2992, %v3031
  %v3044 = vsub.f32 %v2997, %v3031
  %v3045 = vsub.f32 %v3000, %v3031
  %v3046 = vsub.f32 %v3005, %v3031
  %v3047 = vsub.f32 %v3008, %v3031
  %v3048 = vmul.f32 %v3032, 1.442695
  %v3049 = vpow.pop %v3048
  %v3050 = vmul.f32 %v3033, 1.442695
  %v3051 = vpow.pop %v3050
  %v3052 = vmul.f32 %v3034, 1.442695
  %v3053 = vpow.pop %v3052
  %v3054 = vmul.f32 %v3035, 1.442695
  %v3055 = vpow.pop %v3054
  %v3056 = vmul.f32 %v3036, 1.442695
  %v3057 = vpow.pop %v3056
  %v3058 = vmul.f32 %v3037, 1.442695
  %v3059 = vpow.pop %v3058
  %v3060 = vmul.f32 %v3038, 1.442695
  %v3061 = vpow.pop %v3060
  %v3062 = vmul.f32 %v3039, 1.442695
  %v3063 = vpow.pop %v3062
  %v3064 = vmul.f32 %v3040, 1.442695
  %v3065 = vpow.pop %v3064
  %v3066 = vmul.f32 %v3041, 1.442695
  %v3067 = vpow.pop %v3066
  %v3068 = vmul.f32 %v3042, 1.442695
  %v3069 = vpow.pop %v3068
  %v3070 = vmul.f32 %v3043, 1.442695
  %v3071 = vpow.pop %v3070
  %v3072 = vmul.f32 %v3044, 1.442695
  %v3073 = vpow.pop %v3072
  %v3074 = vmul.f32 %v3045, 1.442695
  %v3075 = vpow.pop %v3074
  %v3076 = vmul.f32 %v3046, 1.442695
  %v3077 = vpow.pop %v3076
  %v3078 = vmul.f32 %v3047, 1.442695
  %v3079 = vpow.pop %v3078
  %v3080 = vadd.f32 %v3049, %v3051
  %v3081 = vadd.f32 %v3080, %v3053
  %v3082 = vadd.f32 %v3081, %v3055
  %v3083 = vadd.f32 %v3082, %v3057
  %v3084 = vadd.f32 %v3083, %v3059
  %v3085 = vadd.f32 %v3084, %v3061
  %v3086 = vadd.f32 %v3085, %v3063
  %v3087 = vadd.f32 %v3086, %v3065
  %v3088 = vadd.f32 %v3087, %v3067
  %v3089 = vadd.f32 %v3088, %v3069
  %v3090 = vadd.f32 %v3089, %v3071
  %v3091 = vadd.f32 %v3090, %v3073
  %v3092 = vadd.f32 %v3091, %v3075
  %v3093 = vadd.f32 %v3092, %v3077
  %v3094 = vadd.f32 %v3093, %v3079
  %v3095 = vrot.slane %v3094, 4
  %v3096 = vadd.f32 %v3094, %v3095
  %v3097 = vrot.slane %v3096, 2
  %v3098 = vadd.f32 %v3096, %v3097
  %v3099 = vrot.slane %v3098, 1
  %v3100 = vadd.f32 %v3098, %v3099
  %v3101 = vlog2.pop %v3100
  %v3102 = vmul.f32 %v3101, 0.6931472
  %v3103 = vadd.f32 %v3031, %v3102
  %v3104 = vlaneseq
  %v3105 = vshrl.u32 %v3104, 7
  %v3106 = vadd.s32 %v3105, 8
  %v3107 = vadd.s32 %v3105, 16
  %v3108 = vadd.s32 %v3105, 24
  %v3109 = vadd.s32 %v3105, 32
  %v3110 = vadd.s32 %v3105, 40
  %v3111 = vadd.s32 %v3105, 48
  %v3112 = vadd.s32 %v3105, 56
  %v3113 = vadd.s32 %v3105, 64
  %v3114 = vadd.s32 %v3105, 72
  %v3115 = vadd.s32 %v3105, 80
  %v3116 = vadd.s32 %v3105, 88
  %v3117 = vadd.s32 %v3105, 96
  %v3118 = vadd.s32 %v3105, 104
  %v3119 = vadd.s32 %v3105, 112
  %v3120 = vadd.s32 %v3105, 120
  %v3121 = vld [vmem:[%s6] sm:$0x1]
  %v3122 = vlaneseq
  %v3123 = vshrl.u32 %v3122, 7
  %v3124 = vsub.s32 0, %v3123
  %v3125 = vrot.slane %v3121, %v3124
  %vm3126 = vcmp.eq.s32.totalorder %v3105, %v3125
  %vm3127 = vcmp.eq.s32.totalorder %v3106, %v3125
  %vm3128 = vcmp.eq.s32.totalorder %v3107, %v3125
  %vm3129 = vcmp.eq.s32.totalorder %v3108, %v3125
  %vm3130 = vcmp.eq.s32.totalorder %v3109, %v3125
  %vm3131 = vcmp.eq.s32.totalorder %v3110, %v3125
  %vm3132 = vcmp.eq.s32.totalorder %v3111, %v3125
  %vm3133 = vcmp.eq.s32.totalorder %v3112, %v3125
  %vm3134 = vcmp.eq.s32.totalorder %v3113, %v3125
  %vm3135 = vcmp.eq.s32.totalorder %v3114, %v3125
  %vm3136 = vcmp.eq.s32.totalorder %v3115, %v3125
  %vm3137 = vcmp.eq.s32.totalorder %v3116, %v3125
  %vm3138 = vcmp.eq.s32.totalorder %v3117, %v3125
  %vm3139 = vcmp.eq.s32.totalorder %v3118, %v3125
  %vm3140 = vcmp.eq.s32.totalorder %v3119, %v3125
  %vm3141 = vcmp.eq.s32.totalorder %v3120, %v3125
  %v3142 = vsel %vm3126, %v2949, 0.0
  %v3143 = vsel %vm3127, %v2952, 0.0
  %v3144 = vsel %vm3128, %v2957, 0.0
  %v3145 = vsel %vm3129, %v2960, 0.0
  %v3146 = vsel %vm3130, %v2965, 0.0
  %v3147 = vsel %vm3131, %v2968, 0.0
  %v3148 = vsel %vm3132, %v2973, 0.0
  %v3149 = vsel %vm3133, %v2976, 0.0
  %v3150 = vsel %vm3134, %v2981, 0.0
  %v3151 = vsel %vm3135, %v2984, 0.0
  %v3152 = vsel %vm3136, %v2989, 0.0
  %v3153 = vsel %vm3137, %v2992, 0.0
  %v3154 = vsel %vm3138, %v2997, 0.0
  %v3155 = vsel %vm3139, %v3000, 0.0
  %v3156 = vsel %vm3140, %v3005, 0.0
  %v3157 = vsel %vm3141, %v3008, 0.0
  %v3158 = vadd.f32 %v3142, %v3143
  %v3159 = vadd.f32 %v3158, %v3144
  %v3160 = vadd.f32 %v3159, %v3145
  %v3161 = vadd.f32 %v3160, %v3146
  %v3162 = vadd.f32 %v3161, %v3147
  %v3163 = vadd.f32 %v3162, %v3148
  %v3164 = vadd.f32 %v3163, %v3149
  %v3165 = vadd.f32 %v3164, %v3150
  %v3166 = vadd.f32 %v3165, %v3151
  %v3167 = vadd.f32 %v3166, %v3152
  %v3168 = vadd.f32 %v3167, %v3153
  %v3169 = vadd.f32 %v3168, %v3154
  %v3170 = vadd.f32 %v3169, %v3155
  %v3171 = vadd.f32 %v3170, %v3156
  %v3172 = vadd.f32 %v3171, %v3157
  %v3173 = vrot.slane %v3172, 4
  %v3174 = vadd.f32 %v3172, %v3173
  %v3175 = vrot.slane %v3174, 2
  %v3176 = vadd.f32 %v3174, %v3175
  %v3177 = vrot.slane %v3176, 1
  %v3178 = vadd.f32 %v3176, %v3177
  %v3179 = vsub.f32 %v3103, %v3178
  %v3180 = vld [vmem:[%s7] sm:$0x1]
  %v3181 = vmul.f32 %v3179, %v3180
  %3182 = vst [vmem:[%s8] sm:$0x1] %v3181
  // Predicated region
  $region34: #{rnn_lm_forward.1} parent=0 // pred_check
    _
  $region35: #{rnn_lm_forward.1} parent=0 // pred_check_branch
    %3184 = sbr.rel (0) target = $region37
  $region36: #{rnn_lm_forward.1} parent=0 // pred_region
    _
  $region37: #{rnn_lm_forward.1} parent=0 // pred_fallthru
    _
  // Predicated region
  $region38: #{rnn_lm_forward.1} parent=0 // pred_check
    _
  $region39: #{rnn_lm_forward.1} parent=0 // pred_check_branch
    %3186 = sbr.rel (0) target = $region41
  $region40: #{rnn_lm_forward.1} parent=0 // pred_region
    _
  $region41: #{rnn_lm_forward.1} parent=0 // pred_fallthru
    _

</llo_original>
